<compile_context>
chip_gen: v6e
topology: v6e:2x2x1
jax: 0.10.0
libtpu: 0.0.40
codegen_flags: <defaults>
</compile_context>

<pallas_src>
import functools
import math

import jax
import jax.numpy as jnp
from jax.experimental import pallas as pl
from jax.experimental.pallas import tpu as pltpu


# ----------------------------------------------------------------------------
# Fused kernel: entire PlainLSTM forward in one invocation (no grid).
#
# Packed weight layout (built in pack_params):
#   wih{l} : (D_in, 8H)  columns = [fwd gates i,f,g,o (4H) | bwd gates i,f,g,o (4H)]
#   whh{l} : (2H, 8H)    block-diagonal: rows[:H] -> fwd cols[:4H],
#                                        rows[H:] -> bwd cols[4H:]
#   b{l}   : (1, 8H)     combined b_ih + b_hh, [fwd | bwd]
#   fc_w   : (2H, C),  fc_b : (1, C)
# ----------------------------------------------------------------------------
def _plain_lstm_kernel(x_ref, wih0_ref, whh0_ref, b0_ref,
                       wih1_ref, whh1_ref, b1_ref,
                       wfc_ref, bfc_ref,
                       out_ref, xp_ref, seq_ref, *, T, B, H):
    H2 = 2 * H
    H4 = 4 * H

    def lstm_step(s, whh_ref, h_pk, c_f, c_b):
        """One packed fwd+bwd step: fwd consumes time s, bwd consumes time T-1-s."""
        tt = T - 1 - s
        rec = jnp.dot(h_pk.astype(jnp.bfloat16), whh_ref[...],
                      preferred_element_type=jnp.float32)            # (B, 8H)
        g_f = rec[:, :H4] + xp_ref[s * B:(s + 1) * B, :H4]           # (B, 4H)
        g_b = rec[:, H4:] + xp_ref[tt * B:(tt + 1) * B, H4:]         # (B, 4H)

        def gate_math(g, c):
            i = jax.nn.sigmoid(g[:, 0:H])
            f = jax.nn.sigmoid(g[:, H:2 * H])
            cin = jnp.tanh(g[:, 2 * H:3 * H])
            o = jax.nn.sigmoid(g[:, 3 * H:4 * H])
            c_new = f * c + i * cin
            return o * jnp.tanh(c_new), c_new

        h_f, c_f = gate_math(g_f, c_f)
        h_b, c_b = gate_math(g_b, c_b)
        return h_f, h_b, c_f, c_b

    # ---------------- layer 0 ----------------
    # Hoisted input projection for all timesteps and both directions.
    x_bf = x_ref[...].astype(jnp.bfloat16)                           # (T*B, D)
    xp_ref[...] = (jnp.dot(x_bf, wih0_ref[...],
                           preferred_element_type=jnp.float32) + b0_ref[...])

    h_pk = jnp.zeros((B, H2), jnp.float32)
    c_f = jnp.zeros((B, H), jnp.float32)
    c_b = jnp.zeros((B, H), jnp.float32)
    for s in range(T):                                               # unrolled (T static)
        h_f, h_b, c_f, c_b = lstm_step(s, whh0_ref, h_pk, c_f, c_b)
        h_pk = jnp.concatenate([h_f, h_b], axis=1)
        tt = T - 1 - s
        seq_ref[s * B:(s + 1) * B, 0:H] = h_f                        # fwd output, time s
        seq_ref[tt * B:(tt + 1) * B, H:H2] = h_b                     # bwd output, time T-1-s

    # ---------------- layer 1 ----------------
    xp_ref[...] = (jnp.dot(seq_ref[...].astype(jnp.bfloat16), wih1_ref[...],
                           preferred_element_type=jnp.float32) + b1_ref[...])

    h_pk = jnp.zeros((B, H2), jnp.float32)
    c_f = jnp.zeros((B, H), jnp.float32)
    c_b = jnp.zeros((B, H), jnp.float32)
    for s in range(T):
        h_f, h_b, c_f, c_b = lstm_step(s, whh1_ref, h_pk, c_f, c_b)
        h_pk = jnp.concatenate([h_f, h_b], axis=1)

    # h_pk[:, :H] = fwd hidden at t=T-1 (== out[:, -1, :H])
    # h_pk[:, H:] = bwd hidden at t=0   (== out[:,  0, H:])
    logits = (jnp.dot(h_pk, wfc_ref[...], preferred_element_type=jnp.float32)
              + bfc_ref[...])
    out_ref[...] = logits.astype(out_ref.dtype)


def plain_lstm_forward(x_btd, packed, *, hidden_dim):
    """x_btd: (B, T, 128) batch-first, like the PyTorch module."""
    B, T, D = x_btd.shape
    H = hidden_dim
    C = packed["fc_w"].shape[1]
    # time-major, flattened to (T*B, D) so the per-layer input projection is one matmul
    x2d = jnp.transpose(x_btd, (1, 0, 2)).reshape(T * B, D).astype(jnp.float32)

    kernel = functools.partial(_plain_lstm_kernel, T=T, B=B, H=H)
    return pl.pallas_call(
        kernel,
        out_shape=jax.ShapeDtypeStruct((B, C), jnp.float32),
        scratch_shapes=[
            pltpu.VMEM((T * B, 8 * H), jnp.float32),   # projected gate inputs (reused per layer)
            pltpu.VMEM((T * B, 2 * H), jnp.float32),   # layer-0 output sequence [fwd|bwd]
        ],
    )(x2d,
      packed["wih0"], packed["whh0"], packed["b0"],
      packed["wih1"], packed["whh1"], packed["b1"],
      packed["fc_w"], packed["fc_b"])


# ----------------------------------------------------------------------------
# Parameters: raw PyTorch-layout weights + packed/transposed kernel weights
# ----------------------------------------------------------------------------
def init_params(key, input_dim, hidden_dim, num_classes):
    """PyTorch-style uniform(-1/sqrt(H), 1/sqrt(H)) init, PyTorch weight layout."""
    H = hidden_dim
    bound = 1.0 / math.sqrt(H)
    raw = {"lstm": []}
    for layer in range(2):
        d_in = input_dim if layer == 0 else 2 * H
        lp = {}
        for direction in ("fwd", "bwd"):
            key, k1, k2, k3, k4 = jax.random.split(key, 5)
            lp[direction] = {
                "w_ih": jax.random.uniform(k1, (4 * H, d_in), jnp.float32, -bound, bound),
                "w_hh": jax.random.uniform(k2, (4 * H, H), jnp.float32, -bound, bound),
                "b_ih": jax.random.uniform(k3, (4 * H,), jnp.float32, -bound, bound),
                "b_hh": jax.random.uniform(k4, (4 * H,), jnp.float32, -bound, bound),
            }
        raw["lstm"].append(lp)
    key, kw, kb = jax.random.split(key, 3)
    fcb = 1.0 / math.sqrt(2 * H)
    raw["fc"] = {
        "w": jax.random.uniform(kw, (num_classes, 2 * H), jnp.float32, -fcb, fcb),
        "b": jax.random.uniform(kb, (num_classes,), jnp.float32, -fcb, fcb),
    }
    return raw


def pack_params(raw, hidden_dim):
    """Pack PyTorch-layout weights into the fused-kernel layout (bf16 matmul operands)."""
    H = hidden_dim
    packed = {}
    for layer in range(2):
        f, b = raw["lstm"][layer]["fwd"], raw["lstm"][layer]["bwd"]
        wih = jnp.concatenate([f["w_ih"].T, b["w_ih"].T], axis=1)           # (D_in, 8H)
        whh = jnp.zeros((2 * H, 8 * H), jnp.float32)                        # block-diagonal
        whh = whh.at[:H, :4 * H].set(f["w_hh"].T)
        whh = whh.at[H:, 4 * H:].set(b["w_hh"].T)
        bias = jnp.concatenate([f["b_ih"] + f["b_hh"], b["b_ih"] + b["b_hh"]])[None, :]
        packed[f"wih{layer}"] = wih.astype(jnp.bfloat16)
        packed[f"whh{layer}"] = whh.astype(jnp.bfloat16)
        packed[f"b{layer}"] = bias.astype(jnp.float32)
    packed["fc_w"] = raw["fc"]["w"].T.astype(jnp.float32)                    # (2H, C)
    packed["fc_b"] = raw["fc"]["b"][None, :].astype(jnp.float32)             # (1, C)
    return packed


# ----------------------------------------------------------------------------
# Pure-JAX f32 reference (PyTorch semantics) for a correctness check
# ----------------------------------------------------------------------------
def reference_forward(x_btd, raw, hidden_dim):
    H = hidden_dim

    def run_dir(x_tbd, p):
        Tn, Bn, _ = x_tbd.shape
        h = jnp.zeros((Bn, H), jnp.float32)
        c = jnp.zeros((Bn, H), jnp.float32)
        outs = []
        for t in range(Tn):
            g = x_tbd[t] @ p["w_ih"].T + h @ p["w_hh"].T + p["b_ih"] + p["b_hh"]
            i = jax.nn.sigmoid(g[:, :H])
            f = jax.nn.sigmoid(g[:, H:2 * H])
            gg = jnp.tanh(g[:, 2 * H:3 * H])
            o = jax.nn.sigmoid(g[:, 3 * H:])
            c = f * c + i * gg
            h = o * jnp.tanh(c)
            outs.append(h)
        return jnp.stack(outs, axis=0)

    inp = jnp.transpose(x_btd, (1, 0, 2))
    for layer in range(2):
        lp = raw["lstm"][layer]
        of = run_dir(inp, lp["fwd"])
        ob = run_dir(inp[::-1], lp["bwd"])[::-1]
        inp = jnp.concatenate([of, ob], axis=-1)
    feat = jnp.concatenate([inp[-1, :, :H], inp[0, :, H:]], axis=1)
    return feat @ raw["fc"]["w"].T + raw["fc"]["b"]


if __name__ == "__main__":
    BATCH = 2
    SEQ = 8
    INPUT_DIM = 128      # fixed by the module
    HIDDEN = 32
    NUM_CLASSES = 5

    key = jax.random.PRNGKey(0)
    key, kx = jax.random.split(key)
    x = jax.random.normal(kx, (BATCH, SEQ, INPUT_DIM), jnp.float32)

    raw = init_params(key, INPUT_DIM, HIDDEN, NUM_CLASSES)
    packed = pack_params(raw, HIDDEN)

    fwd = jax.jit(functools.partial(plain_lstm_forward, hidden_dim=HIDDEN))
    out = jax.block_until_ready(fwd(x, packed))
    assert out.shape == (BATCH, NUM_CLASSES)

    ref = jax.block_until_ready(reference_forward(x, raw, HIDDEN))
    max_err = float(jnp.max(jnp.abs(out - ref)))
    assert max_err < 5e-2, f"max abs error vs reference: {max_err}"

    print("KERNEL_OK")
</pallas_src>

<mosaic_0001>
module attributes {stable_mosaic.version = 11 : i64} {
  func.func @_plain_lstm_kernel(%arg0: memref<16x128xf32, #tpu.memory_space<vmem>>, %arg1: memref<128x256xbf16, #tpu.memory_space<vmem>>, %arg2: memref<64x256xbf16, #tpu.memory_space<vmem>>, %arg3: memref<1x256xf32, #tpu.memory_space<vmem>>, %arg4: memref<64x256xbf16, #tpu.memory_space<vmem>>, %arg5: memref<64x256xbf16, #tpu.memory_space<vmem>>, %arg6: memref<1x256xf32, #tpu.memory_space<vmem>>, %arg7: memref<64x5xf32, #tpu.memory_space<vmem>>, %arg8: memref<1x5xf32, #tpu.memory_space<vmem>>, %arg9: memref<2x5xf32, #tpu.memory_space<vmem>>, %arg10: memref<16x256xf32, #tpu.memory_space<vmem>>, %arg11: memref<16x64xf32, #tpu.memory_space<vmem>>) attributes {dimension_semantics = [], scalar_prefetch = 0 : i64, scratch_operands = 2 : i64, tpu.core_type = #tpu.core_type<tc>} {
    %c0 = arith.constant 0 : index
    %c0_0 = arith.constant 0 : index
    %0 = vector.load %arg0[%c0, %c0_0] : memref<16x128xf32, #tpu.memory_space<vmem>>, vector<16x128xf32>
    %1 = arith.truncf %0 : vector<16x128xf32> to vector<16x128xbf16>
    %c0_1 = arith.constant 0 : index
    %c0_2 = arith.constant 0 : index
    %2 = vector.load %arg1[%c0_1, %c0_2] : memref<128x256xbf16, #tpu.memory_space<vmem>>, vector<128x256xbf16>
    %cst = arith.constant dense<0.000000e+00> : vector<16x256xf32>
    %3 = tpu.matmul %1, %2, %cst {dimension_numbers = #tpu.dot_dimension_numbers<[1], [0], [0], [1], [0, 0, 1, 1], [], []>} : vector<16x128xbf16>, vector<128x256xbf16>, vector<16x256xf32> -> vector<16x256xf32>
    %c0_3 = arith.constant 0 : index
    %c0_4 = arith.constant 0 : index
    %4 = vector.load %arg3[%c0_3, %c0_4] : memref<1x256xf32, #tpu.memory_space<vmem>>, vector<1x256xf32>
    %5 = vector.broadcast %4 : vector<1x256xf32> to vector<16x256xf32>
    %6 = arith.addf %3, %5 : vector<16x256xf32>
    %c0_5 = arith.constant 0 : index
    %c0_6 = arith.constant 0 : index
    %7 = vector.load %arg10[%c0_5, %c0_6] : memref<16x256xf32, #tpu.memory_space<vmem>>, vector<16x256xf32>
    tpu.vector_store %arg10[%c0_5, %c0_6], %6 {strides = array<i32>} : memref<16x256xf32, #tpu.memory_space<vmem>>, vector<16x256xf32>,
    %cst_7 = arith.constant 0.000000e+00 : f32
    %8 = vector.broadcast %cst_7 : f32 to vector<2x64xf32>
    %cst_8 = arith.constant 0.000000e+00 : f32
    %9 = vector.broadcast %cst_8 : f32 to vector<2x32xf32>
    %cst_9 = arith.constant 0.000000e+00 : f32
    %10 = vector.broadcast %cst_9 : f32 to vector<2x32xf32>
    %11 = arith.truncf %8 : vector<2x64xf32> to vector<2x64xbf16>
    %c0_10 = arith.constant 0 : index
    %c0_11 = arith.constant 0 : index
    %12 = vector.load %arg2[%c0_10, %c0_11] : memref<64x256xbf16, #tpu.memory_space<vmem>>, vector<64x256xbf16>
    %cst_12 = arith.constant dense<0.000000e+00> : vector<2x256xf32>
    %13 = tpu.matmul %11, %12, %cst_12 {dimension_numbers = #tpu.dot_dimension_numbers<[1], [0], [0], [1], [0, 0, 1, 1], [], []>} : vector<2x64xbf16>, vector<64x256xbf16>, vector<2x256xf32> -> vector<2x256xf32>
    %14 = vector.extract_strided_slice %13 {offsets = [0, 0], sizes = [2, 128], strides = [1, 1]} : vector<2x256xf32> to vector<2x128xf32>
    %c0_13 = arith.constant 0 : index
    %c0_14 = arith.constant 0 : index
    %15 = vector.load %arg10[%c0_13, %c0_14] : memref<16x256xf32, #tpu.memory_space<vmem>>, vector<2x128xf32>
    %16 = arith.addf %14, %15 : vector<2x128xf32>
    %17 = vector.extract_strided_slice %13 {offsets = [0, 128], sizes = [2, 128], strides = [1, 1]} : vector<2x256xf32> to vector<2x128xf32>
    %c14 = arith.constant 14 : index
    %c128 = arith.constant 128 : index
    %18 = vector.load %arg10[%c14, %c128] : memref<16x256xf32, #tpu.memory_space<vmem>>, vector<2x128xf32>
    %19 = arith.addf %17, %18 : vector<2x128xf32>
    %20 = vector.extract_strided_slice %16 {offsets = [0, 0], sizes = [2, 32], strides = [1, 1]} : vector<2x128xf32> to vector<2x32xf32>
    %21 = arith.negf %20 : vector<2x32xf32>
    %22 = math.exp %21 : vector<2x32xf32>
    %cst_15 = arith.constant 1.000000e+00 : f32
    %23 = vector.broadcast %cst_15 : f32 to vector<2x32xf32>
    %24 = arith.addf %23, %22 : vector<2x32xf32>
    %25 = arith.divf %23, %24 : vector<2x32xf32>
    %26 = vector.extract_strided_slice %16 {offsets = [0, 32], sizes = [2, 32], strides = [1, 1]} : vector<2x128xf32> to vector<2x32xf32>
    %27 = arith.negf %26 : vector<2x32xf32>
    %28 = math.exp %27 : vector<2x32xf32>
    %cst_16 = arith.constant 1.000000e+00 : f32
    %29 = vector.broadcast %cst_16 : f32 to vector<2x32xf32>
    %30 = arith.addf %29, %28 : vector<2x32xf32>
    %31 = arith.divf %29, %30 : vector<2x32xf32>
    %32 = vector.extract_strided_slice %16 {offsets = [0, 64], sizes = [2, 32], strides = [1, 1]} : vector<2x128xf32> to vector<2x32xf32>
    %33 = math.tanh %32 : vector<2x32xf32>
    %34 = vector.extract_strided_slice %16 {offsets = [0, 96], sizes = [2, 32], strides = [1, 1]} : vector<2x128xf32> to vector<2x32xf32>
    %35 = arith.negf %34 : vector<2x32xf32>
    %36 = math.exp %35 : vector<2x32xf32>
    %cst_17 = arith.constant 1.000000e+00 : f32
    %37 = vector.broadcast %cst_17 : f32 to vector<2x32xf32>
    %38 = arith.addf %37, %36 : vector<2x32xf32>
    %39 = arith.divf %37, %38 : vector<2x32xf32>
    %40 = arith.mulf %31, %9 : vector<2x32xf32>
    %41 = arith.mulf %25, %33 : vector<2x32xf32>
    %42 = arith.addf %40, %41 : vector<2x32xf32>
    %43 = math.tanh %42 : vector<2x32xf32>
    %44 = arith.mulf %39, %43 : vector<2x32xf32>
    %45 = vector.extract_strided_slice %19 {offsets = [0, 0], sizes = [2, 32], strides = [1, 1]} : vector<2x128xf32> to vector<2x32xf32>
    %46 = arith.negf %45 : vector<2x32xf32>
    %47 = math.exp %46 : vector<2x32xf32>
    %cst_18 = arith.constant 1.000000e+00 : f32
    %48 = vector.broadcast %cst_18 : f32 to vector<2x32xf32>
    %49 = arith.addf %48, %47 : vector<2x32xf32>
    %50 = arith.divf %48, %49 : vector<2x32xf32>
    %51 = vector.extract_strided_slice %19 {offsets = [0, 32], sizes = [2, 32], strides = [1, 1]} : vector<2x128xf32> to vector<2x32xf32>
    %52 = arith.negf %51 : vector<2x32xf32>
    %53 = math.exp %52 : vector<2x32xf32>
    %cst_19 = arith.constant 1.000000e+00 : f32
    %54 = vector.broadcast %cst_19 : f32 to vector<2x32xf32>
    %55 = arith.addf %54, %53 : vector<2x32xf32>
    %56 = arith.divf %54, %55 : vector<2x32xf32>
    %57 = vector.extract_strided_slice %19 {offsets = [0, 64], sizes = [2, 32], strides = [1, 1]} : vector<2x128xf32> to vector<2x32xf32>
    %58 = math.tanh %57 : vector<2x32xf32>
    %59 = vector.extract_strided_slice %19 {offsets = [0, 96], sizes = [2, 32], strides = [1, 1]} : vector<2x128xf32> to vector<2x32xf32>
    %60 = arith.negf %59 : vector<2x32xf32>
    %61 = math.exp %60 : vector<2x32xf32>
    %cst_20 = arith.constant 1.000000e+00 : f32
    %62 = vector.broadcast %cst_20 : f32 to vector<2x32xf32>
    %63 = arith.addf %62, %61 : vector<2x32xf32>
    %64 = arith.divf %62, %63 : vector<2x32xf32>
    %65 = arith.mulf %56, %10 : vector<2x32xf32>
    %66 = arith.mulf %50, %58 : vector<2x32xf32>
    %67 = arith.addf %65, %66 : vector<2x32xf32>
    %68 = math.tanh %67 : vector<2x32xf32>
    %69 = arith.mulf %64, %68 : vector<2x32xf32>
    %70 = tpu.concatenate %44, %69 in 1 : vector<2x32xf32>, vector<2x32xf32> -> vector<2x64xf32>
    %c0_21 = arith.constant 0 : index
    %c0_22 = arith.constant 0 : index
    %71 = vector.load %arg11[%c0_21, %c0_22] : memref<16x64xf32, #tpu.memory_space<vmem>>, vector<2x32xf32>
    tpu.vector_store %arg11[%c0_21, %c0_22], %44 {strides = array<i32>} : memref<16x64xf32, #tpu.memory_space<vmem>>, vector<2x32xf32>,
    %c14_23 = arith.constant 14 : index
    %c32 = arith.constant 32 : index
    %72 = vector.load %arg11[%c14_23, %c32] : memref<16x64xf32, #tpu.memory_space<vmem>>, vector<2x32xf32>
    tpu.vector_store %arg11[%c14_23, %c32], %69 {strides = array<i32>} : memref<16x64xf32, #tpu.memory_space<vmem>>, vector<2x32xf32>,
    %73 = arith.truncf %70 : vector<2x64xf32> to vector<2x64xbf16>
    %c0_24 = arith.constant 0 : index
    %c0_25 = arith.constant 0 : index
    %74 = vector.load %arg2[%c0_24, %c0_25] : memref<64x256xbf16, #tpu.memory_space<vmem>>, vector<64x256xbf16>
    %cst_26 = arith.constant dense<0.000000e+00> : vector<2x256xf32>
    %75 = tpu.matmul %73, %74, %cst_26 {dimension_numbers = #tpu.dot_dimension_numbers<[1], [0], [0], [1], [0, 0, 1, 1], [], []>} : vector<2x64xbf16>, vector<64x256xbf16>, vector<2x256xf32> -> vector<2x256xf32>
    %76 = vector.extract_strided_slice %75 {offsets = [0, 0], sizes = [2, 128], strides = [1, 1]} : vector<2x256xf32> to vector<2x128xf32>
    %c2 = arith.constant 2 : index
    %c0_27 = arith.constant 0 : index
    %77 = vector.load %arg10[%c2, %c0_27] : memref<16x256xf32, #tpu.memory_space<vmem>>, vector<2x128xf32>
    %78 = arith.addf %76, %77 : vector<2x128xf32>
    %79 = vector.extract_strided_slice %75 {offsets = [0, 128], sizes = [2, 128], strides = [1, 1]} : vector<2x256xf32> to vector<2x128xf32>
    %c12 = arith.constant 12 : index
    %c128_28 = arith.constant 128 : index
    %80 = vector.load %arg10[%c12, %c128_28] : memref<16x256xf32, #tpu.memory_space<vmem>>, vector<2x128xf32>
    %81 = arith.addf %79, %80 : vector<2x128xf32>
    %82 = vector.extract_strided_slice %78 {offsets = [0, 0], sizes = [2, 32], strides = [1, 1]} : vector<2x128xf32> to vector<2x32xf32>
    %83 = arith.negf %82 : vector<2x32xf32>
    %84 = math.exp %83 : vector<2x32xf32>
    %cst_29 = arith.constant 1.000000e+00 : f32
    %85 = vector.broadcast %cst_29 : f32 to vector<2x32xf32>
    %86 = arith.addf %85, %84 : vector<2x32xf32>
    %87 = arith.divf %85, %86 : vector<2x32xf32>
    %88 = vector.extract_strided_slice %78 {offsets = [0, 32], sizes = [2, 32], strides = [1, 1]} : vector<2x128xf32> to vector<2x32xf32>
    %89 = arith.negf %88 : vector<2x32xf32>
    %90 = math.exp %89 : vector<2x32xf32>
    %cst_30 = arith.constant 1.000000e+00 : f32
    %91 = vector.broadcast %cst_30 : f32 to vector<2x32xf32>
    %92 = arith.addf %91, %90 : vector<2x32xf32>
    %93 = arith.divf %91, %92 : vector<2x32xf32>
    %94 = vector.extract_strided_slice %78 {offsets = [0, 64], sizes = [2, 32], strides = [1, 1]} : vector<2x128xf32> to vector<2x32xf32>
    %95 = math.tanh %94 : vector<2x32xf32>
    %96 = vector.extract_strided_slice %78 {offsets = [0, 96], sizes = [2, 32], strides = [1, 1]} : vector<2x128xf32> to vector<2x32xf32>
    %97 = arith.negf %96 : vector<2x32xf32>
    %98 = math.exp %97 : vector<2x32xf32>
    %cst_31 = arith.constant 1.000000e+00 : f32
    %99 = vector.broadcast %cst_31 : f32 to vector<2x32xf32>
    %100 = arith.addf %99, %98 : vector<2x32xf32>
    %101 = arith.divf %99, %100 : vector<2x32xf32>
    %102 = arith.mulf %93, %42 : vector<2x32xf32>
    %103 = arith.mulf %87, %95 : vector<2x32xf32>
    %104 = arith.addf %102, %103 : vector<2x32xf32>
    %105 = math.tanh %104 : vector<2x32xf32>
    %106 = arith.mulf %101, %105 : vector<2x32xf32>
    %107 = vector.extract_strided_slice %81 {offsets = [0, 0], sizes = [2, 32], strides = [1, 1]} : vector<2x128xf32> to vector<2x32xf32>
    %108 = arith.negf %107 : vector<2x32xf32>
    %109 = math.exp %108 : vector<2x32xf32>
    %cst_32 = arith.constant 1.000000e+00 : f32
    %110 = vector.broadcast %cst_32 : f32 to vector<2x32xf32>
    %111 = arith.addf %110, %109 : vector<2x32xf32>
    %112 = arith.divf %110, %111 : vector<2x32xf32>
    %113 = vector.extract_strided_slice %81 {offsets = [0, 32], sizes = [2, 32], strides = [1, 1]} : vector<2x128xf32> to vector<2x32xf32>
    %114 = arith.negf %113 : vector<2x32xf32>
    %115 = math.exp %114 : vector<2x32xf32>
    %cst_33 = arith.constant 1.000000e+00 : f32
    %116 = vector.broadcast %cst_33 : f32 to vector<2x32xf32>
    %117 = arith.addf %116, %115 : vector<2x32xf32>
    %118 = arith.divf %116, %117 : vector<2x32xf32>
    %119 = vector.extract_strided_slice %81 {offsets = [0, 64], sizes = [2, 32], strides = [1, 1]} : vector<2x128xf32> to vector<2x32xf32>
    %120 = math.tanh %119 : vector<2x32xf32>
    %121 = vector.extract_strided_slice %81 {offsets = [0, 96], sizes = [2, 32], strides = [1, 1]} : vector<2x128xf32> to vector<2x32xf32>
    %122 = arith.negf %121 : vector<2x32xf32>
    %123 = math.exp %122 : vector<2x32xf32>
    %cst_34 = arith.constant 1.000000e+00 : f32
    %124 = vector.broadcast %cst_34 : f32 to vector<2x32xf32>
    %125 = arith.addf %124, %123 : vector<2x32xf32>
    %126 = arith.divf %124, %125 : vector<2x32xf32>
    %127 = arith.mulf %118, %67 : vector<2x32xf32>
    %128 = arith.mulf %112, %120 : vector<2x32xf32>
    %129 = arith.addf %127, %128 : vector<2x32xf32>
    %130 = math.tanh %129 : vector<2x32xf32>
    %131 = arith.mulf %126, %130 : vector<2x32xf32>
    %132 = tpu.concatenate %106, %131 in 1 : vector<2x32xf32>, vector<2x32xf32> -> vector<2x64xf32>
    %c2_35 = arith.constant 2 : index
    %c0_36 = arith.constant 0 : index
    %133 = vector.load %arg11[%c2_35, %c0_36] : memref<16x64xf32, #tpu.memory_space<vmem>>, vector<2x32xf32>
    tpu.vector_store %arg11[%c2_35, %c0_36], %106 {strides = array<i32>} : memref<16x64xf32, #tpu.memory_space<vmem>>, vector<2x32xf32>,
    %c12_37 = arith.constant 12 : index
    %c32_38 = arith.constant 32 : index
    %134 = vector.load %arg11[%c12_37, %c32_38] : memref<16x64xf32, #tpu.memory_space<vmem>>, vector<2x32xf32>
    tpu.vector_store %arg11[%c12_37, %c32_38], %131 {strides = array<i32>} : memref<16x64xf32, #tpu.memory_space<vmem>>, vector<2x32xf32>,
    %135 = arith.truncf %132 : vector<2x64xf32> to vector<2x64xbf16>
    %c0_39 = arith.constant 0 : index
    %c0_40 = arith.constant 0 : index
    %136 = vector.load %arg2[%c0_39, %c0_40] : memref<64x256xbf16, #tpu.memory_space<vmem>>, vector<64x256xbf16>
    %cst_41 = arith.constant dense<0.000000e+00> : vector<2x256xf32>
    %137 = tpu.matmul %135, %136, %cst_41 {dimension_numbers = #tpu.dot_dimension_numbers<[1], [0], [0], [1], [0, 0, 1, 1], [], []>} : vector<2x64xbf16>, vector<64x256xbf16>, vector<2x256xf32> -> vector<2x256xf32>
    %138 = vector.extract_strided_slice %137 {offsets = [0, 0], sizes = [2, 128], strides = [1, 1]} : vector<2x256xf32> to vector<2x128xf32>
    %c4 = arith.constant 4 : index
    %c0_42 = arith.constant 0 : index
    %139 = vector.load %arg10[%c4, %c0_42] : memref<16x256xf32, #tpu.memory_space<vmem>>, vector<2x128xf32>
    %140 = arith.addf %138, %139 : vector<2x128xf32>
    %141 = vector.extract_strided_slice %137 {offsets = [0, 128], sizes = [2, 128], strides = [1, 1]} : vector<2x256xf32> to vector<2x128xf32>
    %c10 = arith.constant 10 : index
    %c128_43 = arith.constant 128 : index
    %142 = vector.load %arg10[%c10, %c128_43] : memref<16x256xf32, #tpu.memory_space<vmem>>, vector<2x128xf32>
    %143 = arith.addf %141, %142 : vector<2x128xf32>
    %144 = vector.extract_strided_slice %140 {offsets = [0, 0], sizes = [2, 32], strides = [1, 1]} : vector<2x128xf32> to vector<2x32xf32>
    %145 = arith.negf %144 : vector<2x32xf32>
    %146 = math.exp %145 : vector<2x32xf32>
    %cst_44 = arith.constant 1.000000e+00 : f32
    %147 = vector.broadcast %cst_44 : f32 to vector<2x32xf32>
    %148 = arith.addf %147, %146 : vector<2x32xf32>
    %149 = arith.divf %147, %148 : vector<2x32xf32>
    %150 = vector.extract_strided_slice %140 {offsets = [0, 32], sizes = [2, 32], strides = [1, 1]} : vector<2x128xf32> to vector<2x32xf32>
    %151 = arith.negf %150 : vector<2x32xf32>
    %152 = math.exp %151 : vector<2x32xf32>
    %cst_45 = arith.constant 1.000000e+00 : f32
    %153 = vector.broadcast %cst_45 : f32 to vector<2x32xf32>
    %154 = arith.addf %153, %152 : vector<2x32xf32>
    %155 = arith.divf %153, %154 : vector<2x32xf32>
    %156 = vector.extract_strided_slice %140 {offsets = [0, 64], sizes = [2, 32], strides = [1, 1]} : vector<2x128xf32> to vector<2x32xf32>
    %157 = math.tanh %156 : vector<2x32xf32>
    %158 = vector.extract_strided_slice %140 {offsets = [0, 96], sizes = [2, 32], strides = [1, 1]} : vector<2x128xf32> to vector<2x32xf32>
    %159 = arith.negf %158 : vector<2x32xf32>
    %160 = math.exp %159 : vector<2x32xf32>
    %cst_46 = arith.constant 1.000000e+00 : f32
    %161 = vector.broadcast %cst_46 : f32 to vector<2x32xf32>
    %162 = arith.addf %161, %160 : vector<2x32xf32>
    %163 = arith.divf %161, %162 : vector<2x32xf32>
    %164 = arith.mulf %155, %104 : vector<2x32xf32>
    %165 = arith.mulf %149, %157 : vector<2x32xf32>
    %166 = arith.addf %164, %165 : vector<2x32xf32>
    %167 = math.tanh %166 : vector<2x32xf32>
    %168 = arith.mulf %163, %167 : vector<2x32xf32>
    %169 = vector.extract_strided_slice %143 {offsets = [0, 0], sizes = [2, 32], strides = [1, 1]} : vector<2x128xf32> to vector<2x32xf32>
    %170 = arith.negf %169 : vector<2x32xf32>
    %171 = math.exp %170 : vector<2x32xf32>
    %cst_47 = arith.constant 1.000000e+00 : f32
    %172 = vector.broadcast %cst_47 : f32 to vector<2x32xf32>
    %173 = arith.addf %172, %171 : vector<2x32xf32>
    %174 = arith.divf %172, %173 : vector<2x32xf32>
    %175 = vector.extract_strided_slice %143 {offsets = [0, 32], sizes = [2, 32], strides = [1, 1]} : vector<2x128xf32> to vector<2x32xf32>
    %176 = arith.negf %175 : vector<2x32xf32>
    %177 = math.exp %176 : vector<2x32xf32>
    %cst_48 = arith.constant 1.000000e+00 : f32
    %178 = vector.broadcast %cst_48 : f32 to vector<2x32xf32>
    %179 = arith.addf %178, %177 : vector<2x32xf32>
    %180 = arith.divf %178, %179 : vector<2x32xf32>
    %181 = vector.extract_strided_slice %143 {offsets = [0, 64], sizes = [2, 32], strides = [1, 1]} : vector<2x128xf32> to vector<2x32xf32>
    %182 = math.tanh %181 : vector<2x32xf32>
    %183 = vector.extract_strided_slice %143 {offsets = [0, 96], sizes = [2, 32], strides = [1, 1]} : vector<2x128xf32> to vector<2x32xf32>
    %184 = arith.negf %183 : vector<2x32xf32>
    %185 = math.exp %184 : vector<2x32xf32>
    %cst_49 = arith.constant 1.000000e+00 : f32
    %186 = vector.broadcast %cst_49 : f32 to vector<2x32xf32>
    %187 = arith.addf %186, %185 : vector<2x32xf32>
    %188 = arith.divf %186, %187 : vector<2x32xf32>
    %189 = arith.mulf %180, %129 : vector<2x32xf32>
    %190 = arith.mulf %174, %182 : vector<2x32xf32>
    %191 = arith.addf %189, %190 : vector<2x32xf32>
    %192 = math.tanh %191 : vector<2x32xf32>
    %193 = arith.mulf %188, %192 : vector<2x32xf32>
    %194 = tpu.concatenate %168, %193 in 1 : vector<2x32xf32>, vector<2x32xf32> -> vector<2x64xf32>
    %c4_50 = arith.constant 4 : index
    %c0_51 = arith.constant 0 : index
    %195 = vector.load %arg11[%c4_50, %c0_51] : memref<16x64xf32, #tpu.memory_space<vmem>>, vector<2x32xf32>
    tpu.vector_store %arg11[%c4_50, %c0_51], %168 {strides = array<i32>} : memref<16x64xf32, #tpu.memory_space<vmem>>, vector<2x32xf32>,
    %c10_52 = arith.constant 10 : index
    %c32_53 = arith.constant 32 : index
    %196 = vector.load %arg11[%c10_52, %c32_53] : memref<16x64xf32, #tpu.memory_space<vmem>>, vector<2x32xf32>
    tpu.vector_store %arg11[%c10_52, %c32_53], %193 {strides = array<i32>} : memref<16x64xf32, #tpu.memory_space<vmem>>, vector<2x32xf32>,
    %197 = arith.truncf %194 : vector<2x64xf32> to vector<2x64xbf16>
    %c0_54 = arith.constant 0 : index
    %c0_55 = arith.constant 0 : index
    %198 = vector.load %arg2[%c0_54, %c0_55] : memref<64x256xbf16, #tpu.memory_space<vmem>>, vector<64x256xbf16>
    %cst_56 = arith.constant dense<0.000000e+00> : vector<2x256xf32>
    %199 = tpu.matmul %197, %198, %cst_56 {dimension_numbers = #tpu.dot_dimension_numbers<[1], [0], [0], [1], [0, 0, 1, 1], [], []>} : vector<2x64xbf16>, vector<64x256xbf16>, vector<2x256xf32> -> vector<2x256xf32>
    %200 = vector.extract_strided_slice %199 {offsets = [0, 0], sizes = [2, 128], strides = [1, 1]} : vector<2x256xf32> to vector<2x128xf32>
    %c6 = arith.constant 6 : index
    %c0_57 = arith.constant 0 : index
    %201 = vector.load %arg10[%c6, %c0_57] : memref<16x256xf32, #tpu.memory_space<vmem>>, vector<2x128xf32>
    %202 = arith.addf %200, %201 : vector<2x128xf32>
    %203 = vector.extract_strided_slice %199 {offsets = [0, 128], sizes = [2, 128], strides = [1, 1]} : vector<2x256xf32> to vector<2x128xf32>
    %c8 = arith.constant 8 : index
    %c128_58 = arith.constant 128 : index
    %204 = vector.load %arg10[%c8, %c128_58] : memref<16x256xf32, #tpu.memory_space<vmem>>, vector<2x128xf32>
    %205 = arith.addf %203, %204 : vector<2x128xf32>
    %206 = vector.extract_strided_slice %202 {offsets = [0, 0], sizes = [2, 32], strides = [1, 1]} : vector<2x128xf32> to vector<2x32xf32>
    %207 = arith.negf %206 : vector<2x32xf32>
    %208 = math.exp %207 : vector<2x32xf32>
    %cst_59 = arith.constant 1.000000e+00 : f32
    %209 = vector.broadcast %cst_59 : f32 to vector<2x32xf32>
    %210 = arith.addf %209, %208 : vector<2x32xf32>
    %211 = arith.divf %209, %210 : vector<2x32xf32>
    %212 = vector.extract_strided_slice %202 {offsets = [0, 32], sizes = [2, 32], strides = [1, 1]} : vector<2x128xf32> to vector<2x32xf32>
    %213 = arith.negf %212 : vector<2x32xf32>
    %214 = math.exp %213 : vector<2x32xf32>
    %cst_60 = arith.constant 1.000000e+00 : f32
    %215 = vector.broadcast %cst_60 : f32 to vector<2x32xf32>
    %216 = arith.addf %215, %214 : vector<2x32xf32>
    %217 = arith.divf %215, %216 : vector<2x32xf32>
    %218 = vector.extract_strided_slice %202 {offsets = [0, 64], sizes = [2, 32], strides = [1, 1]} : vector<2x128xf32> to vector<2x32xf32>
    %219 = math.tanh %218 : vector<2x32xf32>
    %220 = vector.extract_strided_slice %202 {offsets = [0, 96], sizes = [2, 32], strides = [1, 1]} : vector<2x128xf32> to vector<2x32xf32>
    %221 = arith.negf %220 : vector<2x32xf32>
    %222 = math.exp %221 : vector<2x32xf32>
    %cst_61 = arith.constant 1.000000e+00 : f32
    %223 = vector.broadcast %cst_61 : f32 to vector<2x32xf32>
    %224 = arith.addf %223, %222 : vector<2x32xf32>
    %225 = arith.divf %223, %224 : vector<2x32xf32>
    %226 = arith.mulf %217, %166 : vector<2x32xf32>
    %227 = arith.mulf %211, %219 : vector<2x32xf32>
    %228 = arith.addf %226, %227 : vector<2x32xf32>
    %229 = math.tanh %228 : vector<2x32xf32>
    %230 = arith.mulf %225, %229 : vector<2x32xf32>
    %231 = vector.extract_strided_slice %205 {offsets = [0, 0], sizes = [2, 32], strides = [1, 1]} : vector<2x128xf32> to vector<2x32xf32>
    %232 = arith.negf %231 : vector<2x32xf32>
    %233 = math.exp %232 : vector<2x32xf32>
    %cst_62 = arith.constant 1.000000e+00 : f32
    %234 = vector.broadcast %cst_62 : f32 to vector<2x32xf32>
    %235 = arith.addf %234, %233 : vector<2x32xf32>
    %236 = arith.divf %234, %235 : vector<2x32xf32>
    %237 = vector.extract_strided_slice %205 {offsets = [0, 32], sizes = [2, 32], strides = [1, 1]} : vector<2x128xf32> to vector<2x32xf32>
    %238 = arith.negf %237 : vector<2x32xf32>
    %239 = math.exp %238 : vector<2x32xf32>
    %cst_63 = arith.constant 1.000000e+00 : f32
    %240 = vector.broadcast %cst_63 : f32 to vector<2x32xf32>
    %241 = arith.addf %240, %239 : vector<2x32xf32>
    %242 = arith.divf %240, %241 : vector<2x32xf32>
    %243 = vector.extract_strided_slice %205 {offsets = [0, 64], sizes = [2, 32], strides = [1, 1]} : vector<2x128xf32> to vector<2x32xf32>
    %244 = math.tanh %243 : vector<2x32xf32>
    %245 = vector.extract_strided_slice %205 {offsets = [0, 96], sizes = [2, 32], strides = [1, 1]} : vector<2x128xf32> to vector<2x32xf32>
    %246 = arith.negf %245 : vector<2x32xf32>
    %247 = math.exp %246 : vector<2x32xf32>
    %cst_64 = arith.constant 1.000000e+00 : f32
    %248 = vector.broadcast %cst_64 : f32 to vector<2x32xf32>
    %249 = arith.addf %248, %247 : vector<2x32xf32>
    %250 = arith.divf %248, %249 : vector<2x32xf32>
    %251 = arith.mulf %242, %191 : vector<2x32xf32>
    %252 = arith.mulf %236, %244 : vector<2x32xf32>
    %253 = arith.addf %251, %252 : vector<2x32xf32>
    %254 = math.tanh %253 : vector<2x32xf32>
    %255 = arith.mulf %250, %254 : vector<2x32xf32>
    %256 = tpu.concatenate %230, %255 in 1 : vector<2x32xf32>, vector<2x32xf32> -> vector<2x64xf32>
    %c6_65 = arith.constant 6 : index
    %c0_66 = arith.constant 0 : index
    %257 = vector.load %arg11[%c6_65, %c0_66] : memref<16x64xf32, #tpu.memory_space<vmem>>, vector<2x32xf32>
    tpu.vector_store %arg11[%c6_65, %c0_66], %230 {strides = array<i32>} : memref<16x64xf32, #tpu.memory_space<vmem>>, vector<2x32xf32>,
    %c8_67 = arith.constant 8 : index
    %c32_68 = arith.constant 32 : index
    %258 = vector.load %arg11[%c8_67, %c32_68] : memref<16x64xf32, #tpu.memory_space<vmem>>, vector<2x32xf32>
    tpu.vector_store %arg11[%c8_67, %c32_68], %255 {strides = array<i32>} : memref<16x64xf32, #tpu.memory_space<vmem>>, vector<2x32xf32>,
    %259 = arith.truncf %256 : vector<2x64xf32> to vector<2x64xbf16>
    %c0_69 = arith.constant 0 : index
    %c0_70 = arith.constant 0 : index
    %260 = vector.load %arg2[%c0_69, %c0_70] : memref<64x256xbf16, #tpu.memory_space<vmem>>, vector<64x256xbf16>
    %cst_71 = arith.constant dense<0.000000e+00> : vector<2x256xf32>
    %261 = tpu.matmul %259, %260, %cst_71 {dimension_numbers = #tpu.dot_dimension_numbers<[1], [0], [0], [1], [0, 0, 1, 1], [], []>} : vector<2x64xbf16>, vector<64x256xbf16>, vector<2x256xf32> -> vector<2x256xf32>
    %262 = vector.extract_strided_slice %261 {offsets = [0, 0], sizes = [2, 128], strides = [1, 1]} : vector<2x256xf32> to vector<2x128xf32>
    %c8_72 = arith.constant 8 : index
    %c0_73 = arith.constant 0 : index
    %263 = vector.load %arg10[%c8_72, %c0_73] : memref<16x256xf32, #tpu.memory_space<vmem>>, vector<2x128xf32>
    %264 = arith.addf %262, %263 : vector<2x128xf32>
    %265 = vector.extract_strided_slice %261 {offsets = [0, 128], sizes = [2, 128], strides = [1, 1]} : vector<2x256xf32> to vector<2x128xf32>
    %c6_74 = arith.constant 6 : index
    %c128_75 = arith.constant 128 : index
    %266 = vector.load %arg10[%c6_74, %c128_75] : memref<16x256xf32, #tpu.memory_space<vmem>>, vector<2x128xf32>
    %267 = arith.addf %265, %266 : vector<2x128xf32>
    %268 = vector.extract_strided_slice %264 {offsets = [0, 0], sizes = [2, 32], strides = [1, 1]} : vector<2x128xf32> to vector<2x32xf32>
    %269 = arith.negf %268 : vector<2x32xf32>
    %270 = math.exp %269 : vector<2x32xf32>
    %cst_76 = arith.constant 1.000000e+00 : f32
    %271 = vector.broadcast %cst_76 : f32 to vector<2x32xf32>
    %272 = arith.addf %271, %270 : vector<2x32xf32>
    %273 = arith.divf %271, %272 : vector<2x32xf32>
    %274 = vector.extract_strided_slice %264 {offsets = [0, 32], sizes = [2, 32], strides = [1, 1]} : vector<2x128xf32> to vector<2x32xf32>
    %275 = arith.negf %274 : vector<2x32xf32>
    %276 = math.exp %275 : vector<2x32xf32>
    %cst_77 = arith.constant 1.000000e+00 : f32
    %277 = vector.broadcast %cst_77 : f32 to vector<2x32xf32>
    %278 = arith.addf %277, %276 : vector<2x32xf32>
    %279 = arith.divf %277, %278 : vector<2x32xf32>
    %280 = vector.extract_strided_slice %264 {offsets = [0, 64], sizes = [2, 32], strides = [1, 1]} : vector<2x128xf32> to vector<2x32xf32>
    %281 = math.tanh %280 : vector<2x32xf32>
    %282 = vector.extract_strided_slice %264 {offsets = [0, 96], sizes = [2, 32], strides = [1, 1]} : vector<2x128xf32> to vector<2x32xf32>
    %283 = arith.negf %282 : vector<2x32xf32>
    %284 = math.exp %283 : vector<2x32xf32>
    %cst_78 = arith.constant 1.000000e+00 : f32
    %285 = vector.broadcast %cst_78 : f32 to vector<2x32xf32>
    %286 = arith.addf %285, %284 : vector<2x32xf32>
    %287 = arith.divf %285, %286 : vector<2x32xf32>
    %288 = arith.mulf %279, %228 : vector<2x32xf32>
    %289 = arith.mulf %273, %281 : vector<2x32xf32>
    %290 = arith.addf %288, %289 : vector<2x32xf32>
    %291 = math.tanh %290 : vector<2x32xf32>
    %292 = arith.mulf %287, %291 : vector<2x32xf32>
    %293 = vector.extract_strided_slice %267 {offsets = [0, 0], sizes = [2, 32], strides = [1, 1]} : vector<2x128xf32> to vector<2x32xf32>
    %294 = arith.negf %293 : vector<2x32xf32>
    %295 = math.exp %294 : vector<2x32xf32>
    %cst_79 = arith.constant 1.000000e+00 : f32
    %296 = vector.broadcast %cst_79 : f32 to vector<2x32xf32>
    %297 = arith.addf %296, %295 : vector<2x32xf32>
    %298 = arith.divf %296, %297 : vector<2x32xf32>
    %299 = vector.extract_strided_slice %267 {offsets = [0, 32], sizes = [2, 32], strides = [1, 1]} : vector<2x128xf32> to vector<2x32xf32>
    %300 = arith.negf %299 : vector<2x32xf32>
    %301 = math.exp %300 : vector<2x32xf32>
    %cst_80 = arith.constant 1.000000e+00 : f32
    %302 = vector.broadcast %cst_80 : f32 to vector<2x32xf32>
    %303 = arith.addf %302, %301 : vector<2x32xf32>
    %304 = arith.divf %302, %303 : vector<2x32xf32>
    %305 = vector.extract_strided_slice %267 {offsets = [0, 64], sizes = [2, 32], strides = [1, 1]} : vector<2x128xf32> to vector<2x32xf32>
    %306 = math.tanh %305 : vector<2x32xf32>
    %307 = vector.extract_strided_slice %267 {offsets = [0, 96], sizes = [2, 32], strides = [1, 1]} : vector<2x128xf32> to vector<2x32xf32>
    %308 = arith.negf %307 : vector<2x32xf32>
    %309 = math.exp %308 : vector<2x32xf32>
    %cst_81 = arith.constant 1.000000e+00 : f32
    %310 = vector.broadcast %cst_81 : f32 to vector<2x32xf32>
    %311 = arith.addf %310, %309 : vector<2x32xf32>
    %312 = arith.divf %310, %311 : vector<2x32xf32>
    %313 = arith.mulf %304, %253 : vector<2x32xf32>
    %314 = arith.mulf %298, %306 : vector<2x32xf32>
    %315 = arith.addf %313, %314 : vector<2x32xf32>
    %316 = math.tanh %315 : vector<2x32xf32>
    %317 = arith.mulf %312, %316 : vector<2x32xf32>
    %318 = tpu.concatenate %292, %317 in 1 : vector<2x32xf32>, vector<2x32xf32> -> vector<2x64xf32>
    %c8_82 = arith.constant 8 : index
    %c0_83 = arith.constant 0 : index
    %319 = vector.load %arg11[%c8_82, %c0_83] : memref<16x64xf32, #tpu.memory_space<vmem>>, vector<2x32xf32>
    tpu.vector_store %arg11[%c8_82, %c0_83], %292 {strides = array<i32>} : memref<16x64xf32, #tpu.memory_space<vmem>>, vector<2x32xf32>,
    %c6_84 = arith.constant 6 : index
    %c32_85 = arith.constant 32 : index
    %320 = vector.load %arg11[%c6_84, %c32_85] : memref<16x64xf32, #tpu.memory_space<vmem>>, vector<2x32xf32>
    tpu.vector_store %arg11[%c6_84, %c32_85], %317 {strides = array<i32>} : memref<16x64xf32, #tpu.memory_space<vmem>>, vector<2x32xf32>,
    %321 = arith.truncf %318 : vector<2x64xf32> to vector<2x64xbf16>
    %c0_86 = arith.constant 0 : index
    %c0_87 = arith.constant 0 : index
    %322 = vector.load %arg2[%c0_86, %c0_87] : memref<64x256xbf16, #tpu.memory_space<vmem>>, vector<64x256xbf16>
    %cst_88 = arith.constant dense<0.000000e+00> : vector<2x256xf32>
    %323 = tpu.matmul %321, %322, %cst_88 {dimension_numbers = #tpu.dot_dimension_numbers<[1], [0], [0], [1], [0, 0, 1, 1], [], []>} : vector<2x64xbf16>, vector<64x256xbf16>, vector<2x256xf32> -> vector<2x256xf32>
    %324 = vector.extract_strided_slice %323 {offsets = [0, 0], sizes = [2, 128], strides = [1, 1]} : vector<2x256xf32> to vector<2x128xf32>
    %c10_89 = arith.constant 10 : index
    %c0_90 = arith.constant 0 : index
    %325 = vector.load %arg10[%c10_89, %c0_90] : memref<16x256xf32, #tpu.memory_space<vmem>>, vector<2x128xf32>
    %326 = arith.addf %324, %325 : vector<2x128xf32>
    %327 = vector.extract_strided_slice %323 {offsets = [0, 128], sizes = [2, 128], strides = [1, 1]} : vector<2x256xf32> to vector<2x128xf32>
    %c4_91 = arith.constant 4 : index
    %c128_92 = arith.constant 128 : index
    %328 = vector.load %arg10[%c4_91, %c128_92] : memref<16x256xf32, #tpu.memory_space<vmem>>, vector<2x128xf32>
    %329 = arith.addf %327, %328 : vector<2x128xf32>
    %330 = vector.extract_strided_slice %326 {offsets = [0, 0], sizes = [2, 32], strides = [1, 1]} : vector<2x128xf32> to vector<2x32xf32>
    %331 = arith.negf %330 : vector<2x32xf32>
    %332 = math.exp %331 : vector<2x32xf32>
    %cst_93 = arith.constant 1.000000e+00 : f32
    %333 = vector.broadcast %cst_93 : f32 to vector<2x32xf32>
    %334 = arith.addf %333, %332 : vector<2x32xf32>
    %335 = arith.divf %333, %334 : vector<2x32xf32>
    %336 = vector.extract_strided_slice %326 {offsets = [0, 32], sizes = [2, 32], strides = [1, 1]} : vector<2x128xf32> to vector<2x32xf32>
    %337 = arith.negf %336 : vector<2x32xf32>
    %338 = math.exp %337 : vector<2x32xf32>
    %cst_94 = arith.constant 1.000000e+00 : f32
    %339 = vector.broadcast %cst_94 : f32 to vector<2x32xf32>
    %340 = arith.addf %339, %338 : vector<2x32xf32>
    %341 = arith.divf %339, %340 : vector<2x32xf32>
    %342 = vector.extract_strided_slice %326 {offsets = [0, 64], sizes = [2, 32], strides = [1, 1]} : vector<2x128xf32> to vector<2x32xf32>
    %343 = math.tanh %342 : vector<2x32xf32>
    %344 = vector.extract_strided_slice %326 {offsets = [0, 96], sizes = [2, 32], strides = [1, 1]} : vector<2x128xf32> to vector<2x32xf32>
    %345 = arith.negf %344 : vector<2x32xf32>
    %346 = math.exp %345 : vector<2x32xf32>
    %cst_95 = arith.constant 1.000000e+00 : f32
    %347 = vector.broadcast %cst_95 : f32 to vector<2x32xf32>
    %348 = arith.addf %347, %346 : vector<2x32xf32>
    %349 = arith.divf %347, %348 : vector<2x32xf32>
    %350 = arith.mulf %341, %290 : vector<2x32xf32>
    %351 = arith.mulf %335, %343 : vector<2x32xf32>
    %352 = arith.addf %350, %351 : vector<2x32xf32>
    %353 = math.tanh %352 : vector<2x32xf32>
    %354 = arith.mulf %349, %353 : vector<2x32xf32>
    %355 = vector.extract_strided_slice %329 {offsets = [0, 0], sizes = [2, 32], strides = [1, 1]} : vector<2x128xf32> to vector<2x32xf32>
    %356 = arith.negf %355 : vector<2x32xf32>
    %357 = math.exp %356 : vector<2x32xf32>
    %cst_96 = arith.constant 1.000000e+00 : f32
    %358 = vector.broadcast %cst_96 : f32 to vector<2x32xf32>
    %359 = arith.addf %358, %357 : vector<2x32xf32>
    %360 = arith.divf %358, %359 : vector<2x32xf32>
    %361 = vector.extract_strided_slice %329 {offsets = [0, 32], sizes = [2, 32], strides = [1, 1]} : vector<2x128xf32> to vector<2x32xf32>
    %362 = arith.negf %361 : vector<2x32xf32>
    %363 = math.exp %362 : vector<2x32xf32>
    %cst_97 = arith.constant 1.000000e+00 : f32
    %364 = vector.broadcast %cst_97 : f32 to vector<2x32xf32>
    %365 = arith.addf %364, %363 : vector<2x32xf32>
    %366 = arith.divf %364, %365 : vector<2x32xf32>
    %367 = vector.extract_strided_slice %329 {offsets = [0, 64], sizes = [2, 32], strides = [1, 1]} : vector<2x128xf32> to vector<2x32xf32>
    %368 = math.tanh %367 : vector<2x32xf32>
    %369 = vector.extract_strided_slice %329 {offsets = [0, 96], sizes = [2, 32], strides = [1, 1]} : vector<2x128xf32> to vector<2x32xf32>
    %370 = arith.negf %369 : vector<2x32xf32>
    %371 = math.exp %370 : vector<2x32xf32>
    %cst_98 = arith.constant 1.000000e+00 : f32
    %372 = vector.broadcast %cst_98 : f32 to vector<2x32xf32>
    %373 = arith.addf %372, %371 : vector<2x32xf32>
    %374 = arith.divf %372, %373 : vector<2x32xf32>
    %375 = arith.mulf %366, %315 : vector<2x32xf32>
    %376 = arith.mulf %360, %368 : vector<2x32xf32>
    %377 = arith.addf %375, %376 : vector<2x32xf32>
    %378 = math.tanh %377 : vector<2x32xf32>
    %379 = arith.mulf %374, %378 : vector<2x32xf32>
    %380 = tpu.concatenate %354, %379 in 1 : vector<2x32xf32>, vector<2x32xf32> -> vector<2x64xf32>
    %c10_99 = arith.constant 10 : index
    %c0_100 = arith.constant 0 : index
    %381 = vector.load %arg11[%c10_99, %c0_100] : memref<16x64xf32, #tpu.memory_space<vmem>>, vector<2x32xf32>
    tpu.vector_store %arg11[%c10_99, %c0_100], %354 {strides = array<i32>} : memref<16x64xf32, #tpu.memory_space<vmem>>, vector<2x32xf32>,
    %c4_101 = arith.constant 4 : index
    %c32_102 = arith.constant 32 : index
    %382 = vector.load %arg11[%c4_101, %c32_102] : memref<16x64xf32, #tpu.memory_space<vmem>>, vector<2x32xf32>
    tpu.vector_store %arg11[%c4_101, %c32_102], %379 {strides = array<i32>} : memref<16x64xf32, #tpu.memory_space<vmem>>, vector<2x32xf32>,
    %383 = arith.truncf %380 : vector<2x64xf32> to vector<2x64xbf16>
    %c0_103 = arith.constant 0 : index
    %c0_104 = arith.constant 0 : index
    %384 = vector.load %arg2[%c0_103, %c0_104] : memref<64x256xbf16, #tpu.memory_space<vmem>>, vector<64x256xbf16>
    %cst_105 = arith.constant dense<0.000000e+00> : vector<2x256xf32>
    %385 = tpu.matmul %383, %384, %cst_105 {dimension_numbers = #tpu.dot_dimension_numbers<[1], [0], [0], [1], [0, 0, 1, 1], [], []>} : vector<2x64xbf16>, vector<64x256xbf16>, vector<2x256xf32> -> vector<2x256xf32>
    %386 = vector.extract_strided_slice %385 {offsets = [0, 0], sizes = [2, 128], strides = [1, 1]} : vector<2x256xf32> to vector<2x128xf32>
    %c12_106 = arith.constant 12 : index
    %c0_107 = arith.constant 0 : index
    %387 = vector.load %arg10[%c12_106, %c0_107] : memref<16x256xf32, #tpu.memory_space<vmem>>, vector<2x128xf32>
    %388 = arith.addf %386, %387 : vector<2x128xf32>
    %389 = vector.extract_strided_slice %385 {offsets = [0, 128], sizes = [2, 128], strides = [1, 1]} : vector<2x256xf32> to vector<2x128xf32>
    %c2_108 = arith.constant 2 : index
    %c128_109 = arith.constant 128 : index
    %390 = vector.load %arg10[%c2_108, %c128_109] : memref<16x256xf32, #tpu.memory_space<vmem>>, vector<2x128xf32>
    %391 = arith.addf %389, %390 : vector<2x128xf32>
    %392 = vector.extract_strided_slice %388 {offsets = [0, 0], sizes = [2, 32], strides = [1, 1]} : vector<2x128xf32> to vector<2x32xf32>
    %393 = arith.negf %392 : vector<2x32xf32>
    %394 = math.exp %393 : vector<2x32xf32>
    %cst_110 = arith.constant 1.000000e+00 : f32
    %395 = vector.broadcast %cst_110 : f32 to vector<2x32xf32>
    %396 = arith.addf %395, %394 : vector<2x32xf32>
    %397 = arith.divf %395, %396 : vector<2x32xf32>
    %398 = vector.extract_strided_slice %388 {offsets = [0, 32], sizes = [2, 32], strides = [1, 1]} : vector<2x128xf32> to vector<2x32xf32>
    %399 = arith.negf %398 : vector<2x32xf32>
    %400 = math.exp %399 : vector<2x32xf32>
    %cst_111 = arith.constant 1.000000e+00 : f32
    %401 = vector.broadcast %cst_111 : f32 to vector<2x32xf32>
    %402 = arith.addf %401, %400 : vector<2x32xf32>
    %403 = arith.divf %401, %402 : vector<2x32xf32>
    %404 = vector.extract_strided_slice %388 {offsets = [0, 64], sizes = [2, 32], strides = [1, 1]} : vector<2x128xf32> to vector<2x32xf32>
    %405 = math.tanh %404 : vector<2x32xf32>
    %406 = vector.extract_strided_slice %388 {offsets = [0, 96], sizes = [2, 32], strides = [1, 1]} : vector<2x128xf32> to vector<2x32xf32>
    %407 = arith.negf %406 : vector<2x32xf32>
    %408 = math.exp %407 : vector<2x32xf32>
    %cst_112 = arith.constant 1.000000e+00 : f32
    %409 = vector.broadcast %cst_112 : f32 to vector<2x32xf32>
    %410 = arith.addf %409, %408 : vector<2x32xf32>
    %411 = arith.divf %409, %410 : vector<2x32xf32>
    %412 = arith.mulf %403, %352 : vector<2x32xf32>
    %413 = arith.mulf %397, %405 : vector<2x32xf32>
    %414 = arith.addf %412, %413 : vector<2x32xf32>
    %415 = math.tanh %414 : vector<2x32xf32>
    %416 = arith.mulf %411, %415 : vector<2x32xf32>
    %417 = vector.extract_strided_slice %391 {offsets = [0, 0], sizes = [2, 32], strides = [1, 1]} : vector<2x128xf32> to vector<2x32xf32>
    %418 = arith.negf %417 : vector<2x32xf32>
    %419 = math.exp %418 : vector<2x32xf32>
    %cst_113 = arith.constant 1.000000e+00 : f32
    %420 = vector.broadcast %cst_113 : f32 to vector<2x32xf32>
    %421 = arith.addf %420, %419 : vector<2x32xf32>
    %422 = arith.divf %420, %421 : vector<2x32xf32>
    %423 = vector.extract_strided_slice %391 {offsets = [0, 32], sizes = [2, 32], strides = [1, 1]} : vector<2x128xf32> to vector<2x32xf32>
    %424 = arith.negf %423 : vector<2x32xf32>
    %425 = math.exp %424 : vector<2x32xf32>
    %cst_114 = arith.constant 1.000000e+00 : f32
    %426 = vector.broadcast %cst_114 : f32 to vector<2x32xf32>
    %427 = arith.addf %426, %425 : vector<2x32xf32>
    %428 = arith.divf %426, %427 : vector<2x32xf32>
    %429 = vector.extract_strided_slice %391 {offsets = [0, 64], sizes = [2, 32], strides = [1, 1]} : vector<2x128xf32> to vector<2x32xf32>
    %430 = math.tanh %429 : vector<2x32xf32>
    %431 = vector.extract_strided_slice %391 {offsets = [0, 96], sizes = [2, 32], strides = [1, 1]} : vector<2x128xf32> to vector<2x32xf32>
    %432 = arith.negf %431 : vector<2x32xf32>
    %433 = math.exp %432 : vector<2x32xf32>
    %cst_115 = arith.constant 1.000000e+00 : f32
    %434 = vector.broadcast %cst_115 : f32 to vector<2x32xf32>
    %435 = arith.addf %434, %433 : vector<2x32xf32>
    %436 = arith.divf %434, %435 : vector<2x32xf32>
    %437 = arith.mulf %428, %377 : vector<2x32xf32>
    %438 = arith.mulf %422, %430 : vector<2x32xf32>
    %439 = arith.addf %437, %438 : vector<2x32xf32>
    %440 = math.tanh %439 : vector<2x32xf32>
    %441 = arith.mulf %436, %440 : vector<2x32xf32>
    %442 = tpu.concatenate %416, %441 in 1 : vector<2x32xf32>, vector<2x32xf32> -> vector<2x64xf32>
    %c12_116 = arith.constant 12 : index
    %c0_117 = arith.constant 0 : index
    %443 = vector.load %arg11[%c12_116, %c0_117] : memref<16x64xf32, #tpu.memory_space<vmem>>, vector<2x32xf32>
    tpu.vector_store %arg11[%c12_116, %c0_117], %416 {strides = array<i32>} : memref<16x64xf32, #tpu.memory_space<vmem>>, vector<2x32xf32>,
    %c2_118 = arith.constant 2 : index
    %c32_119 = arith.constant 32 : index
    %444 = vector.load %arg11[%c2_118, %c32_119] : memref<16x64xf32, #tpu.memory_space<vmem>>, vector<2x32xf32>
    tpu.vector_store %arg11[%c2_118, %c32_119], %441 {strides = array<i32>} : memref<16x64xf32, #tpu.memory_space<vmem>>, vector<2x32xf32>,
    %445 = arith.truncf %442 : vector<2x64xf32> to vector<2x64xbf16>
    %c0_120 = arith.constant 0 : index
    %c0_121 = arith.constant 0 : index
    %446 = vector.load %arg2[%c0_120, %c0_121] : memref<64x256xbf16, #tpu.memory_space<vmem>>, vector<64x256xbf16>
    %cst_122 = arith.constant dense<0.000000e+00> : vector<2x256xf32>
    %447 = tpu.matmul %445, %446, %cst_122 {dimension_numbers = #tpu.dot_dimension_numbers<[1], [0], [0], [1], [0, 0, 1, 1], [], []>} : vector<2x64xbf16>, vector<64x256xbf16>, vector<2x256xf32> -> vector<2x256xf32>
    %448 = vector.extract_strided_slice %447 {offsets = [0, 0], sizes = [2, 128], strides = [1, 1]} : vector<2x256xf32> to vector<2x128xf32>
    %c14_123 = arith.constant 14 : index
    %c0_124 = arith.constant 0 : index
    %449 = vector.load %arg10[%c14_123, %c0_124] : memref<16x256xf32, #tpu.memory_space<vmem>>, vector<2x128xf32>
    %450 = arith.addf %448, %449 : vector<2x128xf32>
    %451 = vector.extract_strided_slice %447 {offsets = [0, 128], sizes = [2, 128], strides = [1, 1]} : vector<2x256xf32> to vector<2x128xf32>
    %c0_125 = arith.constant 0 : index
    %c128_126 = arith.constant 128 : index
    %452 = vector.load %arg10[%c0_125, %c128_126] : memref<16x256xf32, #tpu.memory_space<vmem>>, vector<2x128xf32>
    %453 = arith.addf %451, %452 : vector<2x128xf32>
    %454 = vector.extract_strided_slice %450 {offsets = [0, 0], sizes = [2, 32], strides = [1, 1]} : vector<2x128xf32> to vector<2x32xf32>
    %455 = arith.negf %454 : vector<2x32xf32>
    %456 = math.exp %455 : vector<2x32xf32>
    %cst_127 = arith.constant 1.000000e+00 : f32
    %457 = vector.broadcast %cst_127 : f32 to vector<2x32xf32>
    %458 = arith.addf %457, %456 : vector<2x32xf32>
    %459 = arith.divf %457, %458 : vector<2x32xf32>
    %460 = vector.extract_strided_slice %450 {offsets = [0, 32], sizes = [2, 32], strides = [1, 1]} : vector<2x128xf32> to vector<2x32xf32>
    %461 = arith.negf %460 : vector<2x32xf32>
    %462 = math.exp %461 : vector<2x32xf32>
    %cst_128 = arith.constant 1.000000e+00 : f32
    %463 = vector.broadcast %cst_128 : f32 to vector<2x32xf32>
    %464 = arith.addf %463, %462 : vector<2x32xf32>
    %465 = arith.divf %463, %464 : vector<2x32xf32>
    %466 = vector.extract_strided_slice %450 {offsets = [0, 64], sizes = [2, 32], strides = [1, 1]} : vector<2x128xf32> to vector<2x32xf32>
    %467 = math.tanh %466 : vector<2x32xf32>
    %468 = vector.extract_strided_slice %450 {offsets = [0, 96], sizes = [2, 32], strides = [1, 1]} : vector<2x128xf32> to vector<2x32xf32>
    %469 = arith.negf %468 : vector<2x32xf32>
    %470 = math.exp %469 : vector<2x32xf32>
    %cst_129 = arith.constant 1.000000e+00 : f32
    %471 = vector.broadcast %cst_129 : f32 to vector<2x32xf32>
    %472 = arith.addf %471, %470 : vector<2x32xf32>
    %473 = arith.divf %471, %472 : vector<2x32xf32>
    %474 = arith.mulf %465, %414 : vector<2x32xf32>
    %475 = arith.mulf %459, %467 : vector<2x32xf32>
    %476 = arith.addf %474, %475 : vector<2x32xf32>
    %477 = math.tanh %476 : vector<2x32xf32>
    %478 = arith.mulf %473, %477 : vector<2x32xf32>
    %479 = vector.extract_strided_slice %453 {offsets = [0, 0], sizes = [2, 32], strides = [1, 1]} : vector<2x128xf32> to vector<2x32xf32>
    %480 = arith.negf %479 : vector<2x32xf32>
    %481 = math.exp %480 : vector<2x32xf32>
    %cst_130 = arith.constant 1.000000e+00 : f32
    %482 = vector.broadcast %cst_130 : f32 to vector<2x32xf32>
    %483 = arith.addf %482, %481 : vector<2x32xf32>
    %484 = arith.divf %482, %483 : vector<2x32xf32>
    %485 = vector.extract_strided_slice %453 {offsets = [0, 32], sizes = [2, 32], strides = [1, 1]} : vector<2x128xf32> to vector<2x32xf32>
    %486 = arith.negf %485 : vector<2x32xf32>
    %487 = math.exp %486 : vector<2x32xf32>
    %cst_131 = arith.constant 1.000000e+00 : f32
    %488 = vector.broadcast %cst_131 : f32 to vector<2x32xf32>
    %489 = arith.addf %488, %487 : vector<2x32xf32>
    %490 = arith.divf %488, %489 : vector<2x32xf32>
    %491 = vector.extract_strided_slice %453 {offsets = [0, 64], sizes = [2, 32], strides = [1, 1]} : vector<2x128xf32> to vector<2x32xf32>
    %492 = math.tanh %491 : vector<2x32xf32>
    %493 = vector.extract_strided_slice %453 {offsets = [0, 96], sizes = [2, 32], strides = [1, 1]} : vector<2x128xf32> to vector<2x32xf32>
    %494 = arith.negf %493 : vector<2x32xf32>
    %495 = math.exp %494 : vector<2x32xf32>
    %cst_132 = arith.constant 1.000000e+00 : f32
    %496 = vector.broadcast %cst_132 : f32 to vector<2x32xf32>
    %497 = arith.addf %496, %495 : vector<2x32xf32>
    %498 = arith.divf %496, %497 : vector<2x32xf32>
    %499 = arith.mulf %490, %439 : vector<2x32xf32>
    %500 = arith.mulf %484, %492 : vector<2x32xf32>
    %501 = arith.addf %499, %500 : vector<2x32xf32>
    %502 = math.tanh %501 : vector<2x32xf32>
    %503 = arith.mulf %498, %502 : vector<2x32xf32>
    %c14_133 = arith.constant 14 : index
    %c0_134 = arith.constant 0 : index
    %504 = vector.load %arg11[%c14_133, %c0_134] : memref<16x64xf32, #tpu.memory_space<vmem>>, vector<2x32xf32>
    tpu.vector_store %arg11[%c14_133, %c0_134], %478 {strides = array<i32>} : memref<16x64xf32, #tpu.memory_space<vmem>>, vector<2x32xf32>,
    %c0_135 = arith.constant 0 : index
    %c32_136 = arith.constant 32 : index
    %505 = vector.load %arg11[%c0_135, %c32_136] : memref<16x64xf32, #tpu.memory_space<vmem>>, vector<2x32xf32>
    tpu.vector_store %arg11[%c0_135, %c32_136], %503 {strides = array<i32>} : memref<16x64xf32, #tpu.memory_space<vmem>>, vector<2x32xf32>,
    %c0_137 = arith.constant 0 : index
    %c0_138 = arith.constant 0 : index
    %506 = vector.load %arg11[%c0_137, %c0_138] : memref<16x64xf32, #tpu.memory_space<vmem>>, vector<16x64xf32>
    %507 = arith.truncf %506 : vector<16x64xf32> to vector<16x64xbf16>
    %c0_139 = arith.constant 0 : index
    %c0_140 = arith.constant 0 : index
    %508 = vector.load %arg4[%c0_139, %c0_140] : memref<64x256xbf16, #tpu.memory_space<vmem>>, vector<64x256xbf16>
    %cst_141 = arith.constant dense<0.000000e+00> : vector<16x256xf32>
    %509 = tpu.matmul %507, %508, %cst_141 {dimension_numbers = #tpu.dot_dimension_numbers<[1], [0], [0], [1], [0, 0, 1, 1], [], []>} : vector<16x64xbf16>, vector<64x256xbf16>, vector<16x256xf32> -> vector<16x256xf32>
    %c0_142 = arith.constant 0 : index
    %c0_143 = arith.constant 0 : index
    %510 = vector.load %arg6[%c0_142, %c0_143] : memref<1x256xf32, #tpu.memory_space<vmem>>, vector<1x256xf32>
    %511 = vector.broadcast %510 : vector<1x256xf32> to vector<16x256xf32>
    %512 = arith.addf %509, %511 : vector<16x256xf32>
    %c0_144 = arith.constant 0 : index
    %c0_145 = arith.constant 0 : index
    %513 = vector.load %arg10[%c0_144, %c0_145] : memref<16x256xf32, #tpu.memory_space<vmem>>, vector<16x256xf32>
    tpu.vector_store %arg10[%c0_144, %c0_145], %512 {strides = array<i32>} : memref<16x256xf32, #tpu.memory_space<vmem>>, vector<16x256xf32>,
    %cst_146 = arith.constant 0.000000e+00 : f32
    %514 = vector.broadcast %cst_146 : f32 to vector<2x64xf32>
    %cst_147 = arith.constant 0.000000e+00 : f32
    %515 = vector.broadcast %cst_147 : f32 to vector<2x32xf32>
    %cst_148 = arith.constant 0.000000e+00 : f32
    %516 = vector.broadcast %cst_148 : f32 to vector<2x32xf32>
    %517 = arith.truncf %514 : vector<2x64xf32> to vector<2x64xbf16>
    %c0_149 = arith.constant 0 : index
    %c0_150 = arith.constant 0 : index
    %518 = vector.load %arg5[%c0_149, %c0_150] : memref<64x256xbf16, #tpu.memory_space<vmem>>, vector<64x256xbf16>
    %cst_151 = arith.constant dense<0.000000e+00> : vector<2x256xf32>
    %519 = tpu.matmul %517, %518, %cst_151 {dimension_numbers = #tpu.dot_dimension_numbers<[1], [0], [0], [1], [0, 0, 1, 1], [], []>} : vector<2x64xbf16>, vector<64x256xbf16>, vector<2x256xf32> -> vector<2x256xf32>
    %520 = vector.extract_strided_slice %519 {offsets = [0, 0], sizes = [2, 128], strides = [1, 1]} : vector<2x256xf32> to vector<2x128xf32>
    %c0_152 = arith.constant 0 : index
    %c0_153 = arith.constant 0 : index
    %521 = vector.load %arg10[%c0_152, %c0_153] : memref<16x256xf32, #tpu.memory_space<vmem>>, vector<2x128xf32>
    %522 = arith.addf %520, %521 : vector<2x128xf32>
    %523 = vector.extract_strided_slice %519 {offsets = [0, 128], sizes = [2, 128], strides = [1, 1]} : vector<2x256xf32> to vector<2x128xf32>
    %c14_154 = arith.constant 14 : index
    %c128_155 = arith.constant 128 : index
    %524 = vector.load %arg10[%c14_154, %c128_155] : memref<16x256xf32, #tpu.memory_space<vmem>>, vector<2x128xf32>
    %525 = arith.addf %523, %524 : vector<2x128xf32>
    %526 = vector.extract_strided_slice %522 {offsets = [0, 0], sizes = [2, 32], strides = [1, 1]} : vector<2x128xf32> to vector<2x32xf32>
    %527 = arith.negf %526 : vector<2x32xf32>
    %528 = math.exp %527 : vector<2x32xf32>
    %cst_156 = arith.constant 1.000000e+00 : f32
    %529 = vector.broadcast %cst_156 : f32 to vector<2x32xf32>
    %530 = arith.addf %529, %528 : vector<2x32xf32>
    %531 = arith.divf %529, %530 : vector<2x32xf32>
    %532 = vector.extract_strided_slice %522 {offsets = [0, 32], sizes = [2, 32], strides = [1, 1]} : vector<2x128xf32> to vector<2x32xf32>
    %533 = arith.negf %532 : vector<2x32xf32>
    %534 = math.exp %533 : vector<2x32xf32>
    %cst_157 = arith.constant 1.000000e+00 : f32
    %535 = vector.broadcast %cst_157 : f32 to vector<2x32xf32>
    %536 = arith.addf %535, %534 : vector<2x32xf32>
    %537 = arith.divf %535, %536 : vector<2x32xf32>
    %538 = vector.extract_strided_slice %522 {offsets = [0, 64], sizes = [2, 32], strides = [1, 1]} : vector<2x128xf32> to vector<2x32xf32>
    %539 = math.tanh %538 : vector<2x32xf32>
    %540 = vector.extract_strided_slice %522 {offsets = [0, 96], sizes = [2, 32], strides = [1, 1]} : vector<2x128xf32> to vector<2x32xf32>
    %541 = arith.negf %540 : vector<2x32xf32>
    %542 = math.exp %541 : vector<2x32xf32>
    %cst_158 = arith.constant 1.000000e+00 : f32
    %543 = vector.broadcast %cst_158 : f32 to vector<2x32xf32>
    %544 = arith.addf %543, %542 : vector<2x32xf32>
    %545 = arith.divf %543, %544 : vector<2x32xf32>
    %546 = arith.mulf %537, %515 : vector<2x32xf32>
    %547 = arith.mulf %531, %539 : vector<2x32xf32>
    %548 = arith.addf %546, %547 : vector<2x32xf32>
    %549 = math.tanh %548 : vector<2x32xf32>
    %550 = arith.mulf %545, %549 : vector<2x32xf32>
    %551 = vector.extract_strided_slice %525 {offsets = [0, 0], sizes = [2, 32], strides = [1, 1]} : vector<2x128xf32> to vector<2x32xf32>
    %552 = arith.negf %551 : vector<2x32xf32>
    %553 = math.exp %552 : vector<2x32xf32>
    %cst_159 = arith.constant 1.000000e+00 : f32
    %554 = vector.broadcast %cst_159 : f32 to vector<2x32xf32>
    %555 = arith.addf %554, %553 : vector<2x32xf32>
    %556 = arith.divf %554, %555 : vector<2x32xf32>
    %557 = vector.extract_strided_slice %525 {offsets = [0, 32], sizes = [2, 32], strides = [1, 1]} : vector<2x128xf32> to vector<2x32xf32>
    %558 = arith.negf %557 : vector<2x32xf32>
    %559 = math.exp %558 : vector<2x32xf32>
    %cst_160 = arith.constant 1.000000e+00 : f32
    %560 = vector.broadcast %cst_160 : f32 to vector<2x32xf32>
    %561 = arith.addf %560, %559 : vector<2x32xf32>
    %562 = arith.divf %560, %561 : vector<2x32xf32>
    %563 = vector.extract_strided_slice %525 {offsets = [0, 64], sizes = [2, 32], strides = [1, 1]} : vector<2x128xf32> to vector<2x32xf32>
    %564 = math.tanh %563 : vector<2x32xf32>
    %565 = vector.extract_strided_slice %525 {offsets = [0, 96], sizes = [2, 32], strides = [1, 1]} : vector<2x128xf32> to vector<2x32xf32>
    %566 = arith.negf %565 : vector<2x32xf32>
    %567 = math.exp %566 : vector<2x32xf32>
    %cst_161 = arith.constant 1.000000e+00 : f32
    %568 = vector.broadcast %cst_161 : f32 to vector<2x32xf32>
    %569 = arith.addf %568, %567 : vector<2x32xf32>
    %570 = arith.divf %568, %569 : vector<2x32xf32>
    %571 = arith.mulf %562, %516 : vector<2x32xf32>
    %572 = arith.mulf %556, %564 : vector<2x32xf32>
    %573 = arith.addf %571, %572 : vector<2x32xf32>
    %574 = math.tanh %573 : vector<2x32xf32>
    %575 = arith.mulf %570, %574 : vector<2x32xf32>
    %576 = tpu.concatenate %550, %575 in 1 : vector<2x32xf32>, vector<2x32xf32> -> vector<2x64xf32>
    %577 = arith.truncf %576 : vector<2x64xf32> to vector<2x64xbf16>
    %c0_162 = arith.constant 0 : index
    %c0_163 = arith.constant 0 : index
    %578 = vector.load %arg5[%c0_162, %c0_163] : memref<64x256xbf16, #tpu.memory_space<vmem>>, vector<64x256xbf16>
    %cst_164 = arith.constant dense<0.000000e+00> : vector<2x256xf32>
    %579 = tpu.matmul %577, %578, %cst_164 {dimension_numbers = #tpu.dot_dimension_numbers<[1], [0], [0], [1], [0, 0, 1, 1], [], []>} : vector<2x64xbf16>, vector<64x256xbf16>, vector<2x256xf32> -> vector<2x256xf32>
    %580 = vector.extract_strided_slice %579 {offsets = [0, 0], sizes = [2, 128], strides = [1, 1]} : vector<2x256xf32> to vector<2x128xf32>
    %c2_165 = arith.constant 2 : index
    %c0_166 = arith.constant 0 : index
    %581 = vector.load %arg10[%c2_165, %c0_166] : memref<16x256xf32, #tpu.memory_space<vmem>>, vector<2x128xf32>
    %582 = arith.addf %580, %581 : vector<2x128xf32>
    %583 = vector.extract_strided_slice %579 {offsets = [0, 128], sizes = [2, 128], strides = [1, 1]} : vector<2x256xf32> to vector<2x128xf32>
    %c12_167 = arith.constant 12 : index
    %c128_168 = arith.constant 128 : index
    %584 = vector.load %arg10[%c12_167, %c128_168] : memref<16x256xf32, #tpu.memory_space<vmem>>, vector<2x128xf32>
    %585 = arith.addf %583, %584 : vector<2x128xf32>
    %586 = vector.extract_strided_slice %582 {offsets = [0, 0], sizes = [2, 32], strides = [1, 1]} : vector<2x128xf32> to vector<2x32xf32>
    %587 = arith.negf %586 : vector<2x32xf32>
    %588 = math.exp %587 : vector<2x32xf32>
    %cst_169 = arith.constant 1.000000e+00 : f32
    %589 = vector.broadcast %cst_169 : f32 to vector<2x32xf32>
    %590 = arith.addf %589, %588 : vector<2x32xf32>
    %591 = arith.divf %589, %590 : vector<2x32xf32>
    %592 = vector.extract_strided_slice %582 {offsets = [0, 32], sizes = [2, 32], strides = [1, 1]} : vector<2x128xf32> to vector<2x32xf32>
    %593 = arith.negf %592 : vector<2x32xf32>
    %594 = math.exp %593 : vector<2x32xf32>
    %cst_170 = arith.constant 1.000000e+00 : f32
    %595 = vector.broadcast %cst_170 : f32 to vector<2x32xf32>
    %596 = arith.addf %595, %594 : vector<2x32xf32>
    %597 = arith.divf %595, %596 : vector<2x32xf32>
    %598 = vector.extract_strided_slice %582 {offsets = [0, 64], sizes = [2, 32], strides = [1, 1]} : vector<2x128xf32> to vector<2x32xf32>
    %599 = math.tanh %598 : vector<2x32xf32>
    %600 = vector.extract_strided_slice %582 {offsets = [0, 96], sizes = [2, 32], strides = [1, 1]} : vector<2x128xf32> to vector<2x32xf32>
    %601 = arith.negf %600 : vector<2x32xf32>
    %602 = math.exp %601 : vector<2x32xf32>
    %cst_171 = arith.constant 1.000000e+00 : f32
    %603 = vector.broadcast %cst_171 : f32 to vector<2x32xf32>
    %604 = arith.addf %603, %602 : vector<2x32xf32>
    %605 = arith.divf %603, %604 : vector<2x32xf32>
    %606 = arith.mulf %597, %548 : vector<2x32xf32>
    %607 = arith.mulf %591, %599 : vector<2x32xf32>
    %608 = arith.addf %606, %607 : vector<2x32xf32>
    %609 = math.tanh %608 : vector<2x32xf32>
    %610 = arith.mulf %605, %609 : vector<2x32xf32>
    %611 = vector.extract_strided_slice %585 {offsets = [0, 0], sizes = [2, 32], strides = [1, 1]} : vector<2x128xf32> to vector<2x32xf32>
    %612 = arith.negf %611 : vector<2x32xf32>
    %613 = math.exp %612 : vector<2x32xf32>
    %cst_172 = arith.constant 1.000000e+00 : f32
    %614 = vector.broadcast %cst_172 : f32 to vector<2x32xf32>
    %615 = arith.addf %614, %613 : vector<2x32xf32>
    %616 = arith.divf %614, %615 : vector<2x32xf32>
    %617 = vector.extract_strided_slice %585 {offsets = [0, 32], sizes = [2, 32], strides = [1, 1]} : vector<2x128xf32> to vector<2x32xf32>
    %618 = arith.negf %617 : vector<2x32xf32>
    %619 = math.exp %618 : vector<2x32xf32>
    %cst_173 = arith.constant 1.000000e+00 : f32
    %620 = vector.broadcast %cst_173 : f32 to vector<2x32xf32>
    %621 = arith.addf %620, %619 : vector<2x32xf32>
    %622 = arith.divf %620, %621 : vector<2x32xf32>
    %623 = vector.extract_strided_slice %585 {offsets = [0, 64], sizes = [2, 32], strides = [1, 1]} : vector<2x128xf32> to vector<2x32xf32>
    %624 = math.tanh %623 : vector<2x32xf32>
    %625 = vector.extract_strided_slice %585 {offsets = [0, 96], sizes = [2, 32], strides = [1, 1]} : vector<2x128xf32> to vector<2x32xf32>
    %626 = arith.negf %625 : vector<2x32xf32>
    %627 = math.exp %626 : vector<2x32xf32>
    %cst_174 = arith.constant 1.000000e+00 : f32
    %628 = vector.broadcast %cst_174 : f32 to vector<2x32xf32>
    %629 = arith.addf %628, %627 : vector<2x32xf32>
    %630 = arith.divf %628, %629 : vector<2x32xf32>
    %631 = arith.mulf %622, %573 : vector<2x32xf32>
    %632 = arith.mulf %616, %624 : vector<2x32xf32>
    %633 = arith.addf %631, %632 : vector<2x32xf32>
    %634 = math.tanh %633 : vector<2x32xf32>
    %635 = arith.mulf %630, %634 : vector<2x32xf32>
    %636 = tpu.concatenate %610, %635 in 1 : vector<2x32xf32>, vector<2x32xf32> -> vector<2x64xf32>
    %637 = arith.truncf %636 : vector<2x64xf32> to vector<2x64xbf16>
    %c0_175 = arith.constant 0 : index
    %c0_176 = arith.constant 0 : index
    %638 = vector.load %arg5[%c0_175, %c0_176] : memref<64x256xbf16, #tpu.memory_space<vmem>>, vector<64x256xbf16>
    %cst_177 = arith.constant dense<0.000000e+00> : vector<2x256xf32>
    %639 = tpu.matmul %637, %638, %cst_177 {dimension_numbers = #tpu.dot_dimension_numbers<[1], [0], [0], [1], [0, 0, 1, 1], [], []>} : vector<2x64xbf16>, vector<64x256xbf16>, vector<2x256xf32> -> vector<2x256xf32>
    %640 = vector.extract_strided_slice %639 {offsets = [0, 0], sizes = [2, 128], strides = [1, 1]} : vector<2x256xf32> to vector<2x128xf32>
    %c4_178 = arith.constant 4 : index
    %c0_179 = arith.constant 0 : index
    %641 = vector.load %arg10[%c4_178, %c0_179] : memref<16x256xf32, #tpu.memory_space<vmem>>, vector<2x128xf32>
    %642 = arith.addf %640, %641 : vector<2x128xf32>
    %643 = vector.extract_strided_slice %639 {offsets = [0, 128], sizes = [2, 128], strides = [1, 1]} : vector<2x256xf32> to vector<2x128xf32>
    %c10_180 = arith.constant 10 : index
    %c128_181 = arith.constant 128 : index
    %644 = vector.load %arg10[%c10_180, %c128_181] : memref<16x256xf32, #tpu.memory_space<vmem>>, vector<2x128xf32>
    %645 = arith.addf %643, %644 : vector<2x128xf32>
    %646 = vector.extract_strided_slice %642 {offsets = [0, 0], sizes = [2, 32], strides = [1, 1]} : vector<2x128xf32> to vector<2x32xf32>
    %647 = arith.negf %646 : vector<2x32xf32>
    %648 = math.exp %647 : vector<2x32xf32>
    %cst_182 = arith.constant 1.000000e+00 : f32
    %649 = vector.broadcast %cst_182 : f32 to vector<2x32xf32>
    %650 = arith.addf %649, %648 : vector<2x32xf32>
    %651 = arith.divf %649, %650 : vector<2x32xf32>
    %652 = vector.extract_strided_slice %642 {offsets = [0, 32], sizes = [2, 32], strides = [1, 1]} : vector<2x128xf32> to vector<2x32xf32>
    %653 = arith.negf %652 : vector<2x32xf32>
    %654 = math.exp %653 : vector<2x32xf32>
    %cst_183 = arith.constant 1.000000e+00 : f32
    %655 = vector.broadcast %cst_183 : f32 to vector<2x32xf32>
    %656 = arith.addf %655, %654 : vector<2x32xf32>
    %657 = arith.divf %655, %656 : vector<2x32xf32>
    %658 = vector.extract_strided_slice %642 {offsets = [0, 64], sizes = [2, 32], strides = [1, 1]} : vector<2x128xf32> to vector<2x32xf32>
    %659 = math.tanh %658 : vector<2x32xf32>
    %660 = vector.extract_strided_slice %642 {offsets = [0, 96], sizes = [2, 32], strides = [1, 1]} : vector<2x128xf32> to vector<2x32xf32>
    %661 = arith.negf %660 : vector<2x32xf32>
    %662 = math.exp %661 : vector<2x32xf32>
    %cst_184 = arith.constant 1.000000e+00 : f32
    %663 = vector.broadcast %cst_184 : f32 to vector<2x32xf32>
    %664 = arith.addf %663, %662 : vector<2x32xf32>
    %665 = arith.divf %663, %664 : vector<2x32xf32>
    %666 = arith.mulf %657, %608 : vector<2x32xf32>
    %667 = arith.mulf %651, %659 : vector<2x32xf32>
    %668 = arith.addf %666, %667 : vector<2x32xf32>
    %669 = math.tanh %668 : vector<2x32xf32>
    %670 = arith.mulf %665, %669 : vector<2x32xf32>
    %671 = vector.extract_strided_slice %645 {offsets = [0, 0], sizes = [2, 32], strides = [1, 1]} : vector<2x128xf32> to vector<2x32xf32>
    %672 = arith.negf %671 : vector<2x32xf32>
    %673 = math.exp %672 : vector<2x32xf32>
    %cst_185 = arith.constant 1.000000e+00 : f32
    %674 = vector.broadcast %cst_185 : f32 to vector<2x32xf32>
    %675 = arith.addf %674, %673 : vector<2x32xf32>
    %676 = arith.divf %674, %675 : vector<2x32xf32>
    %677 = vector.extract_strided_slice %645 {offsets = [0, 32], sizes = [2, 32], strides = [1, 1]} : vector<2x128xf32> to vector<2x32xf32>
    %678 = arith.negf %677 : vector<2x32xf32>
    %679 = math.exp %678 : vector<2x32xf32>
    %cst_186 = arith.constant 1.000000e+00 : f32
    %680 = vector.broadcast %cst_186 : f32 to vector<2x32xf32>
    %681 = arith.addf %680, %679 : vector<2x32xf32>
    %682 = arith.divf %680, %681 : vector<2x32xf32>
    %683 = vector.extract_strided_slice %645 {offsets = [0, 64], sizes = [2, 32], strides = [1, 1]} : vector<2x128xf32> to vector<2x32xf32>
    %684 = math.tanh %683 : vector<2x32xf32>
    %685 = vector.extract_strided_slice %645 {offsets = [0, 96], sizes = [2, 32], strides = [1, 1]} : vector<2x128xf32> to vector<2x32xf32>
    %686 = arith.negf %685 : vector<2x32xf32>
    %687 = math.exp %686 : vector<2x32xf32>
    %cst_187 = arith.constant 1.000000e+00 : f32
    %688 = vector.broadcast %cst_187 : f32 to vector<2x32xf32>
    %689 = arith.addf %688, %687 : vector<2x32xf32>
    %690 = arith.divf %688, %689 : vector<2x32xf32>
    %691 = arith.mulf %682, %633 : vector<2x32xf32>
    %692 = arith.mulf %676, %684 : vector<2x32xf32>
    %693 = arith.addf %691, %692 : vector<2x32xf32>
    %694 = math.tanh %693 : vector<2x32xf32>
    %695 = arith.mulf %690, %694 : vector<2x32xf32>
    %696 = tpu.concatenate %670, %695 in 1 : vector<2x32xf32>, vector<2x32xf32> -> vector<2x64xf32>
    %697 = arith.truncf %696 : vector<2x64xf32> to vector<2x64xbf16>
    %c0_188 = arith.constant 0 : index
    %c0_189 = arith.constant 0 : index
    %698 = vector.load %arg5[%c0_188, %c0_189] : memref<64x256xbf16, #tpu.memory_space<vmem>>, vector<64x256xbf16>
    %cst_190 = arith.constant dense<0.000000e+00> : vector<2x256xf32>
    %699 = tpu.matmul %697, %698, %cst_190 {dimension_numbers = #tpu.dot_dimension_numbers<[1], [0], [0], [1], [0, 0, 1, 1], [], []>} : vector<2x64xbf16>, vector<64x256xbf16>, vector<2x256xf32> -> vector<2x256xf32>
    %700 = vector.extract_strided_slice %699 {offsets = [0, 0], sizes = [2, 128], strides = [1, 1]} : vector<2x256xf32> to vector<2x128xf32>
    %c6_191 = arith.constant 6 : index
    %c0_192 = arith.constant 0 : index
    %701 = vector.load %arg10[%c6_191, %c0_192] : memref<16x256xf32, #tpu.memory_space<vmem>>, vector<2x128xf32>
    %702 = arith.addf %700, %701 : vector<2x128xf32>
    %703 = vector.extract_strided_slice %699 {offsets = [0, 128], sizes = [2, 128], strides = [1, 1]} : vector<2x256xf32> to vector<2x128xf32>
    %c8_193 = arith.constant 8 : index
    %c128_194 = arith.constant 128 : index
    %704 = vector.load %arg10[%c8_193, %c128_194] : memref<16x256xf32, #tpu.memory_space<vmem>>, vector<2x128xf32>
    %705 = arith.addf %703, %704 : vector<2x128xf32>
    %706 = vector.extract_strided_slice %702 {offsets = [0, 0], sizes = [2, 32], strides = [1, 1]} : vector<2x128xf32> to vector<2x32xf32>
    %707 = arith.negf %706 : vector<2x32xf32>
    %708 = math.exp %707 : vector<2x32xf32>
    %cst_195 = arith.constant 1.000000e+00 : f32
    %709 = vector.broadcast %cst_195 : f32 to vector<2x32xf32>
    %710 = arith.addf %709, %708 : vector<2x32xf32>
    %711 = arith.divf %709, %710 : vector<2x32xf32>
    %712 = vector.extract_strided_slice %702 {offsets = [0, 32], sizes = [2, 32], strides = [1, 1]} : vector<2x128xf32> to vector<2x32xf32>
    %713 = arith.negf %712 : vector<2x32xf32>
    %714 = math.exp %713 : vector<2x32xf32>
    %cst_196 = arith.constant 1.000000e+00 : f32
    %715 = vector.broadcast %cst_196 : f32 to vector<2x32xf32>
    %716 = arith.addf %715, %714 : vector<2x32xf32>
    %717 = arith.divf %715, %716 : vector<2x32xf32>
    %718 = vector.extract_strided_slice %702 {offsets = [0, 64], sizes = [2, 32], strides = [1, 1]} : vector<2x128xf32> to vector<2x32xf32>
    %719 = math.tanh %718 : vector<2x32xf32>
    %720 = vector.extract_strided_slice %702 {offsets = [0, 96], sizes = [2, 32], strides = [1, 1]} : vector<2x128xf32> to vector<2x32xf32>
    %721 = arith.negf %720 : vector<2x32xf32>
    %722 = math.exp %721 : vector<2x32xf32>
    %cst_197 = arith.constant 1.000000e+00 : f32
    %723 = vector.broadcast %cst_197 : f32 to vector<2x32xf32>
    %724 = arith.addf %723, %722 : vector<2x32xf32>
    %725 = arith.divf %723, %724 : vector<2x32xf32>
    %726 = arith.mulf %717, %668 : vector<2x32xf32>
    %727 = arith.mulf %711, %719 : vector<2x32xf32>
    %728 = arith.addf %726, %727 : vector<2x32xf32>
    %729 = math.tanh %728 : vector<2x32xf32>
    %730 = arith.mulf %725, %729 : vector<2x32xf32>
    %731 = vector.extract_strided_slice %705 {offsets = [0, 0], sizes = [2, 32], strides = [1, 1]} : vector<2x128xf32> to vector<2x32xf32>
    %732 = arith.negf %731 : vector<2x32xf32>
    %733 = math.exp %732 : vector<2x32xf32>
    %cst_198 = arith.constant 1.000000e+00 : f32
    %734 = vector.broadcast %cst_198 : f32 to vector<2x32xf32>
    %735 = arith.addf %734, %733 : vector<2x32xf32>
    %736 = arith.divf %734, %735 : vector<2x32xf32>
    %737 = vector.extract_strided_slice %705 {offsets = [0, 32], sizes = [2, 32], strides = [1, 1]} : vector<2x128xf32> to vector<2x32xf32>
    %738 = arith.negf %737 : vector<2x32xf32>
    %739 = math.exp %738 : vector<2x32xf32>
    %cst_199 = arith.constant 1.000000e+00 : f32
    %740 = vector.broadcast %cst_199 : f32 to vector<2x32xf32>
    %741 = arith.addf %740, %739 : vector<2x32xf32>
    %742 = arith.divf %740, %741 : vector<2x32xf32>
    %743 = vector.extract_strided_slice %705 {offsets = [0, 64], sizes = [2, 32], strides = [1, 1]} : vector<2x128xf32> to vector<2x32xf32>
    %744 = math.tanh %743 : vector<2x32xf32>
    %745 = vector.extract_strided_slice %705 {offsets = [0, 96], sizes = [2, 32], strides = [1, 1]} : vector<2x128xf32> to vector<2x32xf32>
    %746 = arith.negf %745 : vector<2x32xf32>
    %747 = math.exp %746 : vector<2x32xf32>
    %cst_200 = arith.constant 1.000000e+00 : f32
    %748 = vector.broadcast %cst_200 : f32 to vector<2x32xf32>
    %749 = arith.addf %748, %747 : vector<2x32xf32>
    %750 = arith.divf %748, %749 : vector<2x32xf32>
    %751 = arith.mulf %742, %693 : vector<2x32xf32>
    %752 = arith.mulf %736, %744 : vector<2x32xf32>
    %753 = arith.addf %751, %752 : vector<2x32xf32>
    %754 = math.tanh %753 : vector<2x32xf32>
    %755 = arith.mulf %750, %754 : vector<2x32xf32>
    %756 = tpu.concatenate %730, %755 in 1 : vector<2x32xf32>, vector<2x32xf32> -> vector<2x64xf32>
    %757 = arith.truncf %756 : vector<2x64xf32> to vector<2x64xbf16>
    %c0_201 = arith.constant 0 : index
    %c0_202 = arith.constant 0 : index
    %758 = vector.load %arg5[%c0_201, %c0_202] : memref<64x256xbf16, #tpu.memory_space<vmem>>, vector<64x256xbf16>
    %cst_203 = arith.constant dense<0.000000e+00> : vector<2x256xf32>
    %759 = tpu.matmul %757, %758, %cst_203 {dimension_numbers = #tpu.dot_dimension_numbers<[1], [0], [0], [1], [0, 0, 1, 1], [], []>} : vector<2x64xbf16>, vector<64x256xbf16>, vector<2x256xf32> -> vector<2x256xf32>
    %760 = vector.extract_strided_slice %759 {offsets = [0, 0], sizes = [2, 128], strides = [1, 1]} : vector<2x256xf32> to vector<2x128xf32>
    %c8_204 = arith.constant 8 : index
    %c0_205 = arith.constant 0 : index
    %761 = vector.load %arg10[%c8_204, %c0_205] : memref<16x256xf32, #tpu.memory_space<vmem>>, vector<2x128xf32>
    %762 = arith.addf %760, %761 : vector<2x128xf32>
    %763 = vector.extract_strided_slice %759 {offsets = [0, 128], sizes = [2, 128], strides = [1, 1]} : vector<2x256xf32> to vector<2x128xf32>
    %c6_206 = arith.constant 6 : index
    %c128_207 = arith.constant 128 : index
    %764 = vector.load %arg10[%c6_206, %c128_207] : memref<16x256xf32, #tpu.memory_space<vmem>>, vector<2x128xf32>
    %765 = arith.addf %763, %764 : vector<2x128xf32>
    %766 = vector.extract_strided_slice %762 {offsets = [0, 0], sizes = [2, 32], strides = [1, 1]} : vector<2x128xf32> to vector<2x32xf32>
    %767 = arith.negf %766 : vector<2x32xf32>
    %768 = math.exp %767 : vector<2x32xf32>
    %cst_208 = arith.constant 1.000000e+00 : f32
    %769 = vector.broadcast %cst_208 : f32 to vector<2x32xf32>
    %770 = arith.addf %769, %768 : vector<2x32xf32>
    %771 = arith.divf %769, %770 : vector<2x32xf32>
    %772 = vector.extract_strided_slice %762 {offsets = [0, 32], sizes = [2, 32], strides = [1, 1]} : vector<2x128xf32> to vector<2x32xf32>
    %773 = arith.negf %772 : vector<2x32xf32>
    %774 = math.exp %773 : vector<2x32xf32>
    %cst_209 = arith.constant 1.000000e+00 : f32
    %775 = vector.broadcast %cst_209 : f32 to vector<2x32xf32>
    %776 = arith.addf %775, %774 : vector<2x32xf32>
    %777 = arith.divf %775, %776 : vector<2x32xf32>
    %778 = vector.extract_strided_slice %762 {offsets = [0, 64], sizes = [2, 32], strides = [1, 1]} : vector<2x128xf32> to vector<2x32xf32>
    %779 = math.tanh %778 : vector<2x32xf32>
    %780 = vector.extract_strided_slice %762 {offsets = [0, 96], sizes = [2, 32], strides = [1, 1]} : vector<2x128xf32> to vector<2x32xf32>
    %781 = arith.negf %780 : vector<2x32xf32>
    %782 = math.exp %781 : vector<2x32xf32>
    %cst_210 = arith.constant 1.000000e+00 : f32
    %783 = vector.broadcast %cst_210 : f32 to vector<2x32xf32>
    %784 = arith.addf %783, %782 : vector<2x32xf32>
    %785 = arith.divf %783, %784 : vector<2x32xf32>
    %786 = arith.mulf %777, %728 : vector<2x32xf32>
    %787 = arith.mulf %771, %779 : vector<2x32xf32>
    %788 = arith.addf %786, %787 : vector<2x32xf32>
    %789 = math.tanh %788 : vector<2x32xf32>
    %790 = arith.mulf %785, %789 : vector<2x32xf32>
    %791 = vector.extract_strided_slice %765 {offsets = [0, 0], sizes = [2, 32], strides = [1, 1]} : vector<2x128xf32> to vector<2x32xf32>
    %792 = arith.negf %791 : vector<2x32xf32>
    %793 = math.exp %792 : vector<2x32xf32>
    %cst_211 = arith.constant 1.000000e+00 : f32
    %794 = vector.broadcast %cst_211 : f32 to vector<2x32xf32>
    %795 = arith.addf %794, %793 : vector<2x32xf32>
    %796 = arith.divf %794, %795 : vector<2x32xf32>
    %797 = vector.extract_strided_slice %765 {offsets = [0, 32], sizes = [2, 32], strides = [1, 1]} : vector<2x128xf32> to vector<2x32xf32>
    %798 = arith.negf %797 : vector<2x32xf32>
    %799 = math.exp %798 : vector<2x32xf32>
    %cst_212 = arith.constant 1.000000e+00 : f32
    %800 = vector.broadcast %cst_212 : f32 to vector<2x32xf32>
    %801 = arith.addf %800, %799 : vector<2x32xf32>
    %802 = arith.divf %800, %801 : vector<2x32xf32>
    %803 = vector.extract_strided_slice %765 {offsets = [0, 64], sizes = [2, 32], strides = [1, 1]} : vector<2x128xf32> to vector<2x32xf32>
    %804 = math.tanh %803 : vector<2x32xf32>
    %805 = vector.extract_strided_slice %765 {offsets = [0, 96], sizes = [2, 32], strides = [1, 1]} : vector<2x128xf32> to vector<2x32xf32>
    %806 = arith.negf %805 : vector<2x32xf32>
    %807 = math.exp %806 : vector<2x32xf32>
    %cst_213 = arith.constant 1.000000e+00 : f32
    %808 = vector.broadcast %cst_213 : f32 to vector<2x32xf32>
    %809 = arith.addf %808, %807 : vector<2x32xf32>
    %810 = arith.divf %808, %809 : vector<2x32xf32>
    %811 = arith.mulf %802, %753 : vector<2x32xf32>
    %812 = arith.mulf %796, %804 : vector<2x32xf32>
    %813 = arith.addf %811, %812 : vector<2x32xf32>
    %814 = math.tanh %813 : vector<2x32xf32>
    %815 = arith.mulf %810, %814 : vector<2x32xf32>
    %816 = tpu.concatenate %790, %815 in 1 : vector<2x32xf32>, vector<2x32xf32> -> vector<2x64xf32>
    %817 = arith.truncf %816 : vector<2x64xf32> to vector<2x64xbf16>
    %c0_214 = arith.constant 0 : index
    %c0_215 = arith.constant 0 : index
    %818 = vector.load %arg5[%c0_214, %c0_215] : memref<64x256xbf16, #tpu.memory_space<vmem>>, vector<64x256xbf16>
    %cst_216 = arith.constant dense<0.000000e+00> : vector<2x256xf32>
    %819 = tpu.matmul %817, %818, %cst_216 {dimension_numbers = #tpu.dot_dimension_numbers<[1], [0], [0], [1], [0, 0, 1, 1], [], []>} : vector<2x64xbf16>, vector<64x256xbf16>, vector<2x256xf32> -> vector<2x256xf32>
    %820 = vector.extract_strided_slice %819 {offsets = [0, 0], sizes = [2, 128], strides = [1, 1]} : vector<2x256xf32> to vector<2x128xf32>
    %c10_217 = arith.constant 10 : index
    %c0_218 = arith.constant 0 : index
    %821 = vector.load %arg10[%c10_217, %c0_218] : memref<16x256xf32, #tpu.memory_space<vmem>>, vector<2x128xf32>
    %822 = arith.addf %820, %821 : vector<2x128xf32>
    %823 = vector.extract_strided_slice %819 {offsets = [0, 128], sizes = [2, 128], strides = [1, 1]} : vector<2x256xf32> to vector<2x128xf32>
    %c4_219 = arith.constant 4 : index
    %c128_220 = arith.constant 128 : index
    %824 = vector.load %arg10[%c4_219, %c128_220] : memref<16x256xf32, #tpu.memory_space<vmem>>, vector<2x128xf32>
    %825 = arith.addf %823, %824 : vector<2x128xf32>
    %826 = vector.extract_strided_slice %822 {offsets = [0, 0], sizes = [2, 32], strides = [1, 1]} : vector<2x128xf32> to vector<2x32xf32>
    %827 = arith.negf %826 : vector<2x32xf32>
    %828 = math.exp %827 : vector<2x32xf32>
    %cst_221 = arith.constant 1.000000e+00 : f32
    %829 = vector.broadcast %cst_221 : f32 to vector<2x32xf32>
    %830 = arith.addf %829, %828 : vector<2x32xf32>
    %831 = arith.divf %829, %830 : vector<2x32xf32>
    %832 = vector.extract_strided_slice %822 {offsets = [0, 32], sizes = [2, 32], strides = [1, 1]} : vector<2x128xf32> to vector<2x32xf32>
    %833 = arith.negf %832 : vector<2x32xf32>
    %834 = math.exp %833 : vector<2x32xf32>
    %cst_222 = arith.constant 1.000000e+00 : f32
    %835 = vector.broadcast %cst_222 : f32 to vector<2x32xf32>
    %836 = arith.addf %835, %834 : vector<2x32xf32>
    %837 = arith.divf %835, %836 : vector<2x32xf32>
    %838 = vector.extract_strided_slice %822 {offsets = [0, 64], sizes = [2, 32], strides = [1, 1]} : vector<2x128xf32> to vector<2x32xf32>
    %839 = math.tanh %838 : vector<2x32xf32>
    %840 = vector.extract_strided_slice %822 {offsets = [0, 96], sizes = [2, 32], strides = [1, 1]} : vector<2x128xf32> to vector<2x32xf32>
    %841 = arith.negf %840 : vector<2x32xf32>
    %842 = math.exp %841 : vector<2x32xf32>
    %cst_223 = arith.constant 1.000000e+00 : f32
    %843 = vector.broadcast %cst_223 : f32 to vector<2x32xf32>
    %844 = arith.addf %843, %842 : vector<2x32xf32>
    %845 = arith.divf %843, %844 : vector<2x32xf32>
    %846 = arith.mulf %837, %788 : vector<2x32xf32>
    %847 = arith.mulf %831, %839 : vector<2x32xf32>
    %848 = arith.addf %846, %847 : vector<2x32xf32>
    %849 = math.tanh %848 : vector<2x32xf32>
    %850 = arith.mulf %845, %849 : vector<2x32xf32>
    %851 = vector.extract_strided_slice %825 {offsets = [0, 0], sizes = [2, 32], strides = [1, 1]} : vector<2x128xf32> to vector<2x32xf32>
    %852 = arith.negf %851 : vector<2x32xf32>
    %853 = math.exp %852 : vector<2x32xf32>
    %cst_224 = arith.constant 1.000000e+00 : f32
    %854 = vector.broadcast %cst_224 : f32 to vector<2x32xf32>
    %855 = arith.addf %854, %853 : vector<2x32xf32>
    %856 = arith.divf %854, %855 : vector<2x32xf32>
    %857 = vector.extract_strided_slice %825 {offsets = [0, 32], sizes = [2, 32], strides = [1, 1]} : vector<2x128xf32> to vector<2x32xf32>
    %858 = arith.negf %857 : vector<2x32xf32>
    %859 = math.exp %858 : vector<2x32xf32>
    %cst_225 = arith.constant 1.000000e+00 : f32
    %860 = vector.broadcast %cst_225 : f32 to vector<2x32xf32>
    %861 = arith.addf %860, %859 : vector<2x32xf32>
    %862 = arith.divf %860, %861 : vector<2x32xf32>
    %863 = vector.extract_strided_slice %825 {offsets = [0, 64], sizes = [2, 32], strides = [1, 1]} : vector<2x128xf32> to vector<2x32xf32>
    %864 = math.tanh %863 : vector<2x32xf32>
    %865 = vector.extract_strided_slice %825 {offsets = [0, 96], sizes = [2, 32], strides = [1, 1]} : vector<2x128xf32> to vector<2x32xf32>
    %866 = arith.negf %865 : vector<2x32xf32>
    %867 = math.exp %866 : vector<2x32xf32>
    %cst_226 = arith.constant 1.000000e+00 : f32
    %868 = vector.broadcast %cst_226 : f32 to vector<2x32xf32>
    %869 = arith.addf %868, %867 : vector<2x32xf32>
    %870 = arith.divf %868, %869 : vector<2x32xf32>
    %871 = arith.mulf %862, %813 : vector<2x32xf32>
    %872 = arith.mulf %856, %864 : vector<2x32xf32>
    %873 = arith.addf %871, %872 : vector<2x32xf32>
    %874 = math.tanh %873 : vector<2x32xf32>
    %875 = arith.mulf %870, %874 : vector<2x32xf32>
    %876 = tpu.concatenate %850, %875 in 1 : vector<2x32xf32>, vector<2x32xf32> -> vector<2x64xf32>
    %877 = arith.truncf %876 : vector<2x64xf32> to vector<2x64xbf16>
    %c0_227 = arith.constant 0 : index
    %c0_228 = arith.constant 0 : index
    %878 = vector.load %arg5[%c0_227, %c0_228] : memref<64x256xbf16, #tpu.memory_space<vmem>>, vector<64x256xbf16>
    %cst_229 = arith.constant dense<0.000000e+00> : vector<2x256xf32>
    %879 = tpu.matmul %877, %878, %cst_229 {dimension_numbers = #tpu.dot_dimension_numbers<[1], [0], [0], [1], [0, 0, 1, 1], [], []>} : vector<2x64xbf16>, vector<64x256xbf16>, vector<2x256xf32> -> vector<2x256xf32>
    %880 = vector.extract_strided_slice %879 {offsets = [0, 0], sizes = [2, 128], strides = [1, 1]} : vector<2x256xf32> to vector<2x128xf32>
    %c12_230 = arith.constant 12 : index
    %c0_231 = arith.constant 0 : index
    %881 = vector.load %arg10[%c12_230, %c0_231] : memref<16x256xf32, #tpu.memory_space<vmem>>, vector<2x128xf32>
    %882 = arith.addf %880, %881 : vector<2x128xf32>
    %883 = vector.extract_strided_slice %879 {offsets = [0, 128], sizes = [2, 128], strides = [1, 1]} : vector<2x256xf32> to vector<2x128xf32>
    %c2_232 = arith.constant 2 : index
    %c128_233 = arith.constant 128 : index
    %884 = vector.load %arg10[%c2_232, %c128_233] : memref<16x256xf32, #tpu.memory_space<vmem>>, vector<2x128xf32>
    %885 = arith.addf %883, %884 : vector<2x128xf32>
    %886 = vector.extract_strided_slice %882 {offsets = [0, 0], sizes = [2, 32], strides = [1, 1]} : vector<2x128xf32> to vector<2x32xf32>
    %887 = arith.negf %886 : vector<2x32xf32>
    %888 = math.exp %887 : vector<2x32xf32>
    %cst_234 = arith.constant 1.000000e+00 : f32
    %889 = vector.broadcast %cst_234 : f32 to vector<2x32xf32>
    %890 = arith.addf %889, %888 : vector<2x32xf32>
    %891 = arith.divf %889, %890 : vector<2x32xf32>
    %892 = vector.extract_strided_slice %882 {offsets = [0, 32], sizes = [2, 32], strides = [1, 1]} : vector<2x128xf32> to vector<2x32xf32>
    %893 = arith.negf %892 : vector<2x32xf32>
    %894 = math.exp %893 : vector<2x32xf32>
    %cst_235 = arith.constant 1.000000e+00 : f32
    %895 = vector.broadcast %cst_235 : f32 to vector<2x32xf32>
    %896 = arith.addf %895, %894 : vector<2x32xf32>
    %897 = arith.divf %895, %896 : vector<2x32xf32>
    %898 = vector.extract_strided_slice %882 {offsets = [0, 64], sizes = [2, 32], strides = [1, 1]} : vector<2x128xf32> to vector<2x32xf32>
    %899 = math.tanh %898 : vector<2x32xf32>
    %900 = vector.extract_strided_slice %882 {offsets = [0, 96], sizes = [2, 32], strides = [1, 1]} : vector<2x128xf32> to vector<2x32xf32>
    %901 = arith.negf %900 : vector<2x32xf32>
    %902 = math.exp %901 : vector<2x32xf32>
    %cst_236 = arith.constant 1.000000e+00 : f32
    %903 = vector.broadcast %cst_236 : f32 to vector<2x32xf32>
    %904 = arith.addf %903, %902 : vector<2x32xf32>
    %905 = arith.divf %903, %904 : vector<2x32xf32>
    %906 = arith.mulf %897, %848 : vector<2x32xf32>
    %907 = arith.mulf %891, %899 : vector<2x32xf32>
    %908 = arith.addf %906, %907 : vector<2x32xf32>
    %909 = math.tanh %908 : vector<2x32xf32>
    %910 = arith.mulf %905, %909 : vector<2x32xf32>
    %911 = vector.extract_strided_slice %885 {offsets = [0, 0], sizes = [2, 32], strides = [1, 1]} : vector<2x128xf32> to vector<2x32xf32>
    %912 = arith.negf %911 : vector<2x32xf32>
    %913 = math.exp %912 : vector<2x32xf32>
    %cst_237 = arith.constant 1.000000e+00 : f32
    %914 = vector.broadcast %cst_237 : f32 to vector<2x32xf32>
    %915 = arith.addf %914, %913 : vector<2x32xf32>
    %916 = arith.divf %914, %915 : vector<2x32xf32>
    %917 = vector.extract_strided_slice %885 {offsets = [0, 32], sizes = [2, 32], strides = [1, 1]} : vector<2x128xf32> to vector<2x32xf32>
    %918 = arith.negf %917 : vector<2x32xf32>
    %919 = math.exp %918 : vector<2x32xf32>
    %cst_238 = arith.constant 1.000000e+00 : f32
    %920 = vector.broadcast %cst_238 : f32 to vector<2x32xf32>
    %921 = arith.addf %920, %919 : vector<2x32xf32>
    %922 = arith.divf %920, %921 : vector<2x32xf32>
    %923 = vector.extract_strided_slice %885 {offsets = [0, 64], sizes = [2, 32], strides = [1, 1]} : vector<2x128xf32> to vector<2x32xf32>
    %924 = math.tanh %923 : vector<2x32xf32>
    %925 = vector.extract_strided_slice %885 {offsets = [0, 96], sizes = [2, 32], strides = [1, 1]} : vector<2x128xf32> to vector<2x32xf32>
    %926 = arith.negf %925 : vector<2x32xf32>
    %927 = math.exp %926 : vector<2x32xf32>
    %cst_239 = arith.constant 1.000000e+00 : f32
    %928 = vector.broadcast %cst_239 : f32 to vector<2x32xf32>
    %929 = arith.addf %928, %927 : vector<2x32xf32>
    %930 = arith.divf %928, %929 : vector<2x32xf32>
    %931 = arith.mulf %922, %873 : vector<2x32xf32>
    %932 = arith.mulf %916, %924 : vector<2x32xf32>
    %933 = arith.addf %931, %932 : vector<2x32xf32>
    %934 = math.tanh %933 : vector<2x32xf32>
    %935 = arith.mulf %930, %934 : vector<2x32xf32>
    %936 = tpu.concatenate %910, %935 in 1 : vector<2x32xf32>, vector<2x32xf32> -> vector<2x64xf32>
    %937 = arith.truncf %936 : vector<2x64xf32> to vector<2x64xbf16>
    %c0_240 = arith.constant 0 : index
    %c0_241 = arith.constant 0 : index
    %938 = vector.load %arg5[%c0_240, %c0_241] : memref<64x256xbf16, #tpu.memory_space<vmem>>, vector<64x256xbf16>
    %cst_242 = arith.constant dense<0.000000e+00> : vector<2x256xf32>
    %939 = tpu.matmul %937, %938, %cst_242 {dimension_numbers = #tpu.dot_dimension_numbers<[1], [0], [0], [1], [0, 0, 1, 1], [], []>} : vector<2x64xbf16>, vector<64x256xbf16>, vector<2x256xf32> -> vector<2x256xf32>
    %940 = vector.extract_strided_slice %939 {offsets = [0, 0], sizes = [2, 128], strides = [1, 1]} : vector<2x256xf32> to vector<2x128xf32>
    %c14_243 = arith.constant 14 : index
    %c0_244 = arith.constant 0 : index
    %941 = vector.load %arg10[%c14_243, %c0_244] : memref<16x256xf32, #tpu.memory_space<vmem>>, vector<2x128xf32>
    %942 = arith.addf %940, %941 : vector<2x128xf32>
    %943 = vector.extract_strided_slice %939 {offsets = [0, 128], sizes = [2, 128], strides = [1, 1]} : vector<2x256xf32> to vector<2x128xf32>
    %c0_245 = arith.constant 0 : index
    %c128_246 = arith.constant 128 : index
    %944 = vector.load %arg10[%c0_245, %c128_246] : memref<16x256xf32, #tpu.memory_space<vmem>>, vector<2x128xf32>
    %945 = arith.addf %943, %944 : vector<2x128xf32>
    %946 = vector.extract_strided_slice %942 {offsets = [0, 0], sizes = [2, 32], strides = [1, 1]} : vector<2x128xf32> to vector<2x32xf32>
    %947 = arith.negf %946 : vector<2x32xf32>
    %948 = math.exp %947 : vector<2x32xf32>
    %cst_247 = arith.constant 1.000000e+00 : f32
    %949 = vector.broadcast %cst_247 : f32 to vector<2x32xf32>
    %950 = arith.addf %949, %948 : vector<2x32xf32>
    %951 = arith.divf %949, %950 : vector<2x32xf32>
    %952 = vector.extract_strided_slice %942 {offsets = [0, 32], sizes = [2, 32], strides = [1, 1]} : vector<2x128xf32> to vector<2x32xf32>
    %953 = arith.negf %952 : vector<2x32xf32>
    %954 = math.exp %953 : vector<2x32xf32>
    %cst_248 = arith.constant 1.000000e+00 : f32
    %955 = vector.broadcast %cst_248 : f32 to vector<2x32xf32>
    %956 = arith.addf %955, %954 : vector<2x32xf32>
    %957 = arith.divf %955, %956 : vector<2x32xf32>
    %958 = vector.extract_strided_slice %942 {offsets = [0, 64], sizes = [2, 32], strides = [1, 1]} : vector<2x128xf32> to vector<2x32xf32>
    %959 = math.tanh %958 : vector<2x32xf32>
    %960 = vector.extract_strided_slice %942 {offsets = [0, 96], sizes = [2, 32], strides = [1, 1]} : vector<2x128xf32> to vector<2x32xf32>
    %961 = arith.negf %960 : vector<2x32xf32>
    %962 = math.exp %961 : vector<2x32xf32>
    %cst_249 = arith.constant 1.000000e+00 : f32
    %963 = vector.broadcast %cst_249 : f32 to vector<2x32xf32>
    %964 = arith.addf %963, %962 : vector<2x32xf32>
    %965 = arith.divf %963, %964 : vector<2x32xf32>
    %966 = arith.mulf %957, %908 : vector<2x32xf32>
    %967 = arith.mulf %951, %959 : vector<2x32xf32>
    %968 = arith.addf %966, %967 : vector<2x32xf32>
    %969 = math.tanh %968 : vector<2x32xf32>
    %970 = arith.mulf %965, %969 : vector<2x32xf32>
    %971 = vector.extract_strided_slice %945 {offsets = [0, 0], sizes = [2, 32], strides = [1, 1]} : vector<2x128xf32> to vector<2x32xf32>
    %972 = arith.negf %971 : vector<2x32xf32>
    %973 = math.exp %972 : vector<2x32xf32>
    %cst_250 = arith.constant 1.000000e+00 : f32
    %974 = vector.broadcast %cst_250 : f32 to vector<2x32xf32>
    %975 = arith.addf %974, %973 : vector<2x32xf32>
    %976 = arith.divf %974, %975 : vector<2x32xf32>
    %977 = vector.extract_strided_slice %945 {offsets = [0, 32], sizes = [2, 32], strides = [1, 1]} : vector<2x128xf32> to vector<2x32xf32>
    %978 = arith.negf %977 : vector<2x32xf32>
    %979 = math.exp %978 : vector<2x32xf32>
    %cst_251 = arith.constant 1.000000e+00 : f32
    %980 = vector.broadcast %cst_251 : f32 to vector<2x32xf32>
    %981 = arith.addf %980, %979 : vector<2x32xf32>
    %982 = arith.divf %980, %981 : vector<2x32xf32>
    %983 = vector.extract_strided_slice %945 {offsets = [0, 64], sizes = [2, 32], strides = [1, 1]} : vector<2x128xf32> to vector<2x32xf32>
    %984 = math.tanh %983 : vector<2x32xf32>
    %985 = vector.extract_strided_slice %945 {offsets = [0, 96], sizes = [2, 32], strides = [1, 1]} : vector<2x128xf32> to vector<2x32xf32>
    %986 = arith.negf %985 : vector<2x32xf32>
    %987 = math.exp %986 : vector<2x32xf32>
    %cst_252 = arith.constant 1.000000e+00 : f32
    %988 = vector.broadcast %cst_252 : f32 to vector<2x32xf32>
    %989 = arith.addf %988, %987 : vector<2x32xf32>
    %990 = arith.divf %988, %989 : vector<2x32xf32>
    %991 = arith.mulf %982, %933 : vector<2x32xf32>
    %992 = arith.mulf %976, %984 : vector<2x32xf32>
    %993 = arith.addf %991, %992 : vector<2x32xf32>
    %994 = math.tanh %993 : vector<2x32xf32>
    %995 = arith.mulf %990, %994 : vector<2x32xf32>
    %996 = tpu.concatenate %970, %995 in 1 : vector<2x32xf32>, vector<2x32xf32> -> vector<2x64xf32>
    %c0_253 = arith.constant 0 : index
    %c0_254 = arith.constant 0 : index
    %997 = vector.load %arg7[%c0_253, %c0_254] : memref<64x5xf32, #tpu.memory_space<vmem>>, vector<64x5xf32>
    %cst_255 = arith.constant dense<0.000000e+00> : vector<2x5xf32>
    %998 = tpu.matmul %996, %997, %cst_255 {dimension_numbers = #tpu.dot_dimension_numbers<[1], [0], [0], [1], [0, 0, 1, 1], [], []>} : vector<2x64xf32>, vector<64x5xf32>, vector<2x5xf32> -> vector<2x5xf32>
    %c0_256 = arith.constant 0 : index
    %c0_257 = arith.constant 0 : index
    %999 = vector.load %arg8[%c0_256, %c0_257] : memref<1x5xf32, #tpu.memory_space<vmem>>, vector<1x5xf32>
    %1000 = vector.broadcast %999 : vector<1x5xf32> to vector<2x5xf32>
    %1001 = arith.addf %998, %1000 : vector<2x5xf32>
    %c0_258 = arith.constant 0 : index
    %c0_259 = arith.constant 0 : index
    %1002 = vector.load %arg9[%c0_258, %c0_259] : memref<2x5xf32, #tpu.memory_space<vmem>>, vector<2x5xf32>
    tpu.vector_store %arg9[%c0_258, %c0_259], %1001 {strides = array<i32>} : memref<2x5xf32, #tpu.memory_space<vmem>>, vector<2x5xf32>,
    return
  }
}

</mosaic_0001>

<llo_original>
// kernel: plain_lstm_forward.1
$region0: #{plain_lstm_forward.1}
  #allocation0 [shape = 'u32[]', space=smem, size = 0x4, offset = 0x4, fixed_abs, tag = 'smem constant byte address 0x4 - core index']
  #allocation1 [shape = 'u32[144,128]{1,0:T(1,128)}', space=vmem, size = 0x12000, scoped, tag = 'internal scratch']
  #allocation2 [shape = 'f32[16,256]{1,0:T(8,128)}', space=vmem, size = 0x4000, scoped, tag = 'scratch operand']
  #allocation3 [shape = 'f32[16,64]{1,0:T(8,128)}', space=vmem, size = 0x2000, scoped, tag = 'scratch operand']
  %s0 = inlined_call_operand.vmem [shape: f32[16,128], index: 0, kind: input, shape index: {}]
  %s1 = inlined_call_operand.hbm [shape: bf16[128,256], index: 1, kind: input, shape index: {}]
  %s2 = inlined_call_operand.vmem [shape: bf16[64,256], index: 2, kind: input, shape index: {}]
  %s3 = inlined_call_operand.vmem [shape: f32[1,256], index: 3, kind: input, shape index: {}]
  %s4 = inlined_call_operand.hbm [shape: bf16[64,256], index: 4, kind: input, shape index: {}]
  %s5 = inlined_call_operand.hbm [shape: bf16[64,256], index: 5, kind: input, shape index: {}]
  %s6 = inlined_call_operand.vmem [shape: f32[1,256], index: 6, kind: input, shape index: {}]
  %s7 = inlined_call_operand.vmem [shape: f32[64,5], index: 7, kind: input, shape index: {}]
  %s8 = inlined_call_operand.vmem [shape: f32[1,5], index: 8, kind: input, shape index: {}]
  %s9 = inlined_call_operand.hbm [shape: f32[2,5], index: 9, kind: output, shape index: {}]
  %s10 = sld [smem:[#allocation0]]
  $region58: #{plain_lstm_forward.1} parent=0
    _
  %s12 = ssub.s32 1, %s10
  %s13 = scalar_select 0, %s12, %s10
  $region1: #{plain_lstm_forward.1} parent=0
    #allocation4 [shape = 'u8[65536]{0}', space=vmem, size = 0x10000, scoped, tag = 'input window, operand 1, single buffered']
    #allocation5 [shape = 's32[1]{0}', space=sflag, size = 0x4, scoped, tag = 'scoped memory for plain_lstm_forward.1']
    #allocation6 [shape = 's32[1]{0}', space=sflag, size = 0x4, scoped, tag = 'scoped memory for plain_lstm_forward.1']
    #allocation7 [shape = 'u8[32768]{0}', space=vmem, size = 0x8000, scoped, tag = 'input window, operand 4, single buffered']
    #allocation8 [shape = 's32[1]{0}', space=sflag, size = 0x4, scoped, tag = 'scoped memory for plain_lstm_forward.1']
    #allocation9 [shape = 'u8[32768]{0}', space=vmem, size = 0x8000, scoped, tag = 'input window, operand 5, single buffered']
    #allocation10 [shape = 'u8[1024]{0}', space=vmem, size = 0x400, scoped, tag = 'output window, operand 0, single buffered']
    %14 = vsyncpa [#allocation5], 0
    %15 = vsyncpa [#allocation8], 0
    %16 = vsyncpa [#allocation6], 0
    // Predicated region
    $region2: #{plain_lstm_forward.1} parent=1 // pred_check
      _
    $region3: #{plain_lstm_forward.1} parent=1 // pred_check_branch
      %18 = sbr.rel (0) target = $region5
    $region4: #{plain_lstm_forward.1} parent=1 // pred_region
      _
    $region5: #{plain_lstm_forward.1} parent=1 // pred_fallthru
      _
    // Predicated region
    $region6: #{plain_lstm_forward.1} parent=1 // pred_check
      _
    $region7: #{plain_lstm_forward.1} parent=1 // pred_check_branch
      %20 = sbr.rel (0) target = $region9
    $region8: #{plain_lstm_forward.1} parent=1 // pred_region
      %s22 = ssub.s32 2048, 2048
      %23 = vsyncadd [#allocation5], %s22
      %s24 = sshll.u32 [#allocation4], 4
      %s25 = int_to_ptr.vmem [resolvable:$true] %s24
      %30 = dma.hbm_to_vmem [thread:$0]  %s1, 2048, %s25, [#allocation5], 128, 128, 8
    $region9: #{plain_lstm_forward.1} parent=1 // pred_fallthru
      _
    // Predicated region
    $region10: #{plain_lstm_forward.1} parent=1 // pred_check
      _
    $region11: #{plain_lstm_forward.1} parent=1 // pred_check_branch
      %32 = sbr.rel (0) target = $region13
    $region12: #{plain_lstm_forward.1} parent=1 // pred_region
      _
    $region13: #{plain_lstm_forward.1} parent=1 // pred_fallthru
      _
    // Predicated region
    $region14: #{plain_lstm_forward.1} parent=1 // pred_check
      _
    $region15: #{plain_lstm_forward.1} parent=1 // pred_check_branch
      %34 = sbr.rel (0) target = $region17
    $region16: #{plain_lstm_forward.1} parent=1 // pred_region
      _
    $region17: #{plain_lstm_forward.1} parent=1 // pred_fallthru
      _
    // Predicated region
    $region18: #{plain_lstm_forward.1} parent=1 // pred_check
      _
    $region19: #{plain_lstm_forward.1} parent=1 // pred_check_branch
      %36 = sbr.rel (0) target = $region21
    $region20: #{plain_lstm_forward.1} parent=1 // pred_region
      %s38 = ssub.s32 1024, 1024
      %39 = vsyncadd [#allocation8], %s38
      %s40 = sshll.u32 [#allocation7], 4
      %s41 = int_to_ptr.vmem [resolvable:$true] %s40
      %46 = dma.hbm_to_vmem [thread:$0]  %s4, 1024, %s41, [#allocation8], 128, 128, 8
    $region21: #{plain_lstm_forward.1} parent=1 // pred_fallthru
      _
    // Predicated region
    $region22: #{plain_lstm_forward.1} parent=1 // pred_check
      _
    $region23: #{plain_lstm_forward.1} parent=1 // pred_check_branch
      %48 = sbr.rel (0) target = $region25
    $region24: #{plain_lstm_forward.1} parent=1 // pred_region
      %s50 = ssub.s32 1024, 1024
      %51 = vsyncadd [#allocation8], %s50
      %s52 = sshll.u32 [#allocation9], 4
      %s53 = int_to_ptr.vmem [resolvable:$true] %s52
      %58 = dma.hbm_to_vmem [thread:$0]  %s5, 1024, %s53, [#allocation8], 128, 128, 8
    $region25: #{plain_lstm_forward.1} parent=1 // pred_fallthru
      _
    // Predicated region
    $region26: #{plain_lstm_forward.1} parent=1 // pred_check
      _
    $region27: #{plain_lstm_forward.1} parent=1 // pred_check_branch
      %60 = sbr.rel (0) target = $region29
    $region28: #{plain_lstm_forward.1} parent=1 // pred_region
      _
    $region29: #{plain_lstm_forward.1} parent=1 // pred_fallthru
      _
    // Predicated region
    $region30: #{plain_lstm_forward.1} parent=1 // pred_check
      _
    $region31: #{plain_lstm_forward.1} parent=1 // pred_check_branch
      %62 = sbr.rel (0) target = $region33
    $region32: #{plain_lstm_forward.1} parent=1 // pred_region
      _
    $region33: #{plain_lstm_forward.1} parent=1 // pred_fallthru
      _
    // Predicated region
    $region34: #{plain_lstm_forward.1} parent=1 // pred_check
      _
    $region35: #{plain_lstm_forward.1} parent=1 // pred_check_branch
      %64 = sbr.rel (0) target = $region37
    $region36: #{plain_lstm_forward.1} parent=1 // pred_region
      _
    $region37: #{plain_lstm_forward.1} parent=1 // pred_fallthru
      _
    // Predicated region
    $region38: #{plain_lstm_forward.1} parent=1 // pred_check
      _
    $region39: #{plain_lstm_forward.1} parent=1 // pred_check_branch
      %66 = sbr.rel (0) target = $region41
    $region40: #{plain_lstm_forward.1} parent=1 // pred_region
      %67 = dma.done [#allocation5], 2048
    $region41: #{plain_lstm_forward.1} parent=1 // pred_fallthru
      _
    // Predicated region
    $region42: #{plain_lstm_forward.1} parent=1 // pred_check
      _
    $region43: #{plain_lstm_forward.1} parent=1 // pred_check_branch
      %69 = sbr.rel (0) target = $region45
    $region44: #{plain_lstm_forward.1} parent=1 // pred_region
      %70 = dma.done [#allocation8], 1024
    $region45: #{plain_lstm_forward.1} parent=1 // pred_fallthru
      _
    // Predicated region
    $region46: #{plain_lstm_forward.1} parent=1 // pred_check
      _
    $region47: #{plain_lstm_forward.1} parent=1 // pred_check_branch
      %72 = sbr.rel (0) target = $region49
    $region48: #{plain_lstm_forward.1} parent=1 // pred_region
      %73 = dma.done [#allocation8], 1024
    $region49: #{plain_lstm_forward.1} parent=1 // pred_fallthru
      _
    %v75 = vld [vmem:[%s0] sm:$0xff]
    %v76 = vld [vmem:[%s0 + $0x8] sm:$0xff]
    %v77 = vpack.c.bf16 %v76, %v75
    %v78 = vld [vmem:[#allocation4] sm:$0xff]
    %v79 = vld [vmem:[#allocation4 + $0x8] sm:$0xff]
    %v80 = vld [vmem:[#allocation4 + $0x10] sm:$0xff]
    %v81 = vld [vmem:[#allocation4 + $0x18] sm:$0xff]
    %v82 = vld [vmem:[#allocation4 + $0x20] sm:$0xff]
    %v83 = vld [vmem:[#allocation4 + $0x28] sm:$0xff]
    %v84 = vld [vmem:[#allocation4 + $0x30] sm:$0xff]
    %v85 = vld [vmem:[#allocation4 + $0x38] sm:$0xff]
    %v86 = vld [vmem:[#allocation4 + $0x40] sm:$0xff]
    %v87 = vld [vmem:[#allocation4 + $0x48] sm:$0xff]
    %v88 = vld [vmem:[#allocation4 + $0x50] sm:$0xff]
    %v89 = vld [vmem:[#allocation4 + $0x58] sm:$0xff]
    %v90 = vld [vmem:[#allocation4 + $0x60] sm:$0xff]
    %v91 = vld [vmem:[#allocation4 + $0x68] sm:$0xff]
    %v92 = vld [vmem:[#allocation4 + $0x70] sm:$0xff]
    %v93 = vld [vmem:[#allocation4 + $0x78] sm:$0xff]
    %v94 = vld [vmem:[%s3] sm:$0x3]
    %v96 = vlaneseq
    %v97 = vshrl.u32 %v96, 7
    %v98 = vsub.s32 0, %v97
    %v99 = vrot.slane %v94, %v98
    %v100 = vlaneseq
    %v101 = vshrl.u32 %v100, 7
    %v102 = vsub.s32 1, %v101
    %v103 = vrot.slane %v94, %v102
    %v122 = vunpack.c.l.b16 %v78
    %v123 = vunpack.c.h.b16 %v78
    %v124 = vunpack.c.l.b16 %v79
    %v125 = vunpack.c.h.b16 %v79
    %v126 = vunpack.c.l.b16 %v80
    %v127 = vunpack.c.h.b16 %v80
    %v128 = vunpack.c.l.b16 %v81
    %v129 = vunpack.c.h.b16 %v81
    %v130 = vunpack.c.l.b16 %v82
    %v131 = vunpack.c.h.b16 %v82
    %v132 = vunpack.c.l.b16 %v83
    %v133 = vunpack.c.h.b16 %v83
    %v134 = vunpack.c.l.b16 %v84
    %v135 = vunpack.c.h.b16 %v84
    %v136 = vunpack.c.l.b16 %v85
    %v137 = vunpack.c.h.b16 %v85
    %v138 = vunpack.c.l.b16 %v86
    %v139 = vunpack.c.h.b16 %v86
    %v140 = vunpack.c.l.b16 %v87
    %v141 = vunpack.c.h.b16 %v87
    %v142 = vunpack.c.l.b16 %v88
    %v143 = vunpack.c.h.b16 %v88
    %v144 = vunpack.c.l.b16 %v89
    %v145 = vunpack.c.h.b16 %v89
    %v146 = vunpack.c.l.b16 %v90
    %v147 = vunpack.c.h.b16 %v90
    %v148 = vunpack.c.l.b16 %v91
    %v149 = vunpack.c.h.b16 %v91
    %v150 = vunpack.c.l.b16 %v92
    %v151 = vunpack.c.h.b16 %v92
    %v152 = vunpack.c.l.b16 %v93
    %v153 = vunpack.c.h.b16 %v93
    %v154 = vpack.c.b16 %v124, %v122
    %v155 = vpack.c.b16 %v125, %v123
    %v156 = vpack.c.b16 %v128, %v126
    %v157 = vpack.c.b16 %v129, %v127
    %v158 = vpack.c.b16 %v132, %v130
    %v159 = vpack.c.b16 %v133, %v131
    %v160 = vpack.c.b16 %v136, %v134
    %v161 = vpack.c.b16 %v137, %v135
    %v162 = vpack.c.b16 %v140, %v138
    %v163 = vpack.c.b16 %v141, %v139
    %v164 = vpack.c.b16 %v144, %v142
    %v165 = vpack.c.b16 %v145, %v143
    %v166 = vpack.c.b16 %v148, %v146
    %v167 = vpack.c.b16 %v149, %v147
    %v168 = vpack.c.b16 %v152, %v150
    %v169 = vpack.c.b16 %v153, %v151
    %186 = vmatprep.subr.bf16.mxu0 %v169
    %187 = vmatpush1.bf16.msra.mxu0 %v168
    %188 = vmatprep.subr.bf16.mxu0 %v167
    %189 = vmatpush1.bf16.msra.mxu0 %v166
    %190 = vmatprep.subr.bf16.mxu0 %v165
    %191 = vmatpush1.bf16.msra.mxu0 %v164
    %192 = vmatprep.subr.bf16.mxu0 %v163
    %193 = vmatpush1.bf16.msra.mxu0 %v162
    %194 = vmatprep.subr.bf16.mxu0 %v161
    %195 = vmatpush1.bf16.msra.mxu0 %v160
    %196 = vmatprep.subr.bf16.mxu0 %v159
    %197 = vmatpush1.bf16.msra.mxu0 %v158
    %198 = vmatprep.subr.bf16.mxu0 %v157
    %199 = vmatpush1.bf16.msra.mxu0 %v156
    %200 = vmatprep.subr.bf16.mxu0 %v155
    %201 = vmatpush1.bf16.msra.mxu0 %v154
    %202 = vmatprep.subr.bf16.mxu0 0
    %203 = vmatpush2.bf16.msra.mxu0 0
    %204 = vmatprep.subr.bf16.mxu0 0
    %205 = vmatpush2.bf16.msra.mxu0 0
    %206 = vmatprep.subr.bf16.mxu0 0
    %207 = vmatpush2.bf16.msra.mxu0 0
    %208 = vmatprep.subr.bf16.mxu0 0
    %209 = vmatpush2.bf16.msra.mxu0 0
    %210 = vmatprep.subr.bf16.mxu0 0
    %211 = vmatpush2.bf16.msra.mxu0 0
    %212 = vmatprep.subr.bf16.mxu0 0
    %213 = vmatpush2.bf16.msra.mxu0 0
    %214 = vmatprep.subr.bf16.mxu0 0
    %215 = vmatpush2.bf16.msra.mxu0 0
    %216 = vmatprep.subr.bf16.mxu0 0
    %217 = vmatpush2.bf16.msra.mxu0 0
    %218 = vmatprep.mubr.bf16.mxu0 0
    %219 = vmatmul.mubr.bf16.gmra.mxu0 %v77
    %v220 = vpop.f32.mrf.mxu0
    %v221 = vadd.f32 %v99, %v220
    %v222 = vpop.f32.mrf.mxu0
    %v223 = vadd.f32 %v103, %v222
    %v224 = vpop.f32.mrf.mxu0
    %v225 = vadd.f32 %v99, %v224
    %v226 = vpop.f32.mrf.mxu0
    %v227 = vadd.f32 %v103, %v226
    %228 = vdwg.mxu0
    %229 = vst [vmem:[#allocation2] sm:$0xff] %v221
    %230 = vst [vmem:[#allocation2 + $0x8] sm:$0xff] %v223
    %231 = vst [vmem:[#allocation2 + $0x10] sm:$0xff] %v225
    %232 = vst [vmem:[#allocation2 + $0x18] sm:$0xff] %v227
    %v233 = vld [vmem:[%s2] sm:$0xff]
    %v234 = vld [vmem:[%s2 + $0x8] sm:$0xff]
    %v235 = vld [vmem:[%s2 + $0x10] sm:$0xff]
    %v236 = vld [vmem:[%s2 + $0x18] sm:$0xff]
    %v237 = vld [vmem:[%s2 + $0x20] sm:$0xff]
    %v238 = vld [vmem:[%s2 + $0x28] sm:$0xff]
    %v239 = vld [vmem:[%s2 + $0x30] sm:$0xff]
    %v240 = vld [vmem:[%s2 + $0x38] sm:$0xff]
    %v249 = vunpack.c.l.b16 %v233
    %v250 = vunpack.c.h.b16 %v233
    %v251 = vunpack.c.l.b16 %v234
    %v252 = vunpack.c.h.b16 %v234
    %v253 = vunpack.c.l.b16 %v235
    %v254 = vunpack.c.h.b16 %v235
    %v255 = vunpack.c.l.b16 %v236
    %v256 = vunpack.c.h.b16 %v236
    %v257 = vunpack.c.l.b16 %v237
    %v258 = vunpack.c.h.b16 %v237
    %v259 = vunpack.c.l.b16 %v238
    %v260 = vunpack.c.h.b16 %v238
    %v261 = vunpack.c.l.b16 %v239
    %v262 = vunpack.c.h.b16 %v239
    %v263 = vunpack.c.l.b16 %v240
    %v264 = vunpack.c.h.b16 %v240
    %v265 = vpack.c.b16 %v251, %v249
    %v266 = vpack.c.b16 %v252, %v250
    %v267 = vpack.c.b16 %v255, %v253
    %v268 = vpack.c.b16 %v256, %v254
    %v269 = vpack.c.b16 %v259, %v257
    %v270 = vpack.c.b16 %v260, %v258
    %v271 = vpack.c.b16 %v263, %v261
    %v272 = vpack.c.b16 %v264, %v262
    %vm281 = vcmask 523264
    %v283 = vsel %vm281, 0, 0
    %285 = vmatprep.subr.bf16.mxu0 0
    %286 = vmatpush1.bf16.msra.mxu0 0
    %287 = vmatprep.subr.bf16.mxu0 0
    %288 = vmatpush1.bf16.msra.mxu0 0
    %289 = vmatprep.subr.bf16.mxu0 0
    %290 = vmatpush1.bf16.msra.mxu0 0
    %291 = vmatprep.subr.bf16.mxu0 0
    %292 = vmatpush1.bf16.msra.mxu0 0
    %293 = vmatprep.subr.bf16.mxu0 %v272
    %294 = vmatpush1.bf16.msra.mxu0 %v271
    %295 = vmatprep.subr.bf16.mxu0 %v270
    %296 = vmatpush1.bf16.msra.mxu0 %v269
    %297 = vmatprep.subr.bf16.mxu0 %v268
    %298 = vmatpush1.bf16.msra.mxu0 %v267
    %299 = vmatprep.subr.bf16.mxu0 %v266
    %300 = vmatpush1.bf16.msra.mxu0 %v265
    %301 = vmatprep.subr.bf16.mxu0 0
    %302 = vmatpush2.bf16.msra.mxu0 0
    %303 = vmatprep.subr.bf16.mxu0 0
    %304 = vmatpush2.bf16.msra.mxu0 0
    %305 = vmatprep.subr.bf16.mxu0 0
    %306 = vmatpush2.bf16.msra.mxu0 0
    %307 = vmatprep.subr.bf16.mxu0 0
    %308 = vmatpush2.bf16.msra.mxu0 0
    %309 = vmatprep.subr.bf16.mxu0 0
    %310 = vmatpush2.bf16.msra.mxu0 0
    %311 = vmatprep.subr.bf16.mxu0 0
    %312 = vmatpush2.bf16.msra.mxu0 0
    %313 = vmatprep.subr.bf16.mxu0 0
    %314 = vmatpush2.bf16.msra.mxu0 0
    %315 = vmatprep.subr.bf16.mxu0 0
    %316 = vmatpush2.bf16.msra.mxu0 0
    %317 = vmatprep.mubr.bf16.mxu0 0
    %318 = vmatmul.mubr.bf16.gmra.mxu0 %v283
    %v319 = vpop.f32.mrf.mxu0
    %v320 = vadd.f32 0.0, %v319
    %v321 = vpop.f32.mrf.mxu0
    %v322 = vadd.f32 0.0, %v321
    %v323 = vpop.f32.mrf.mxu0
    %v324 = vpop.f32.mrf.mxu0
    %325 = vdwg.mxu0
    %v326 = vld [vmem:[#allocation2] sm:$0x3]
    %v327 = vadd.f32 %v320, %v326
    %v328 = vld [vmem:[#allocation2 + $0x18] sm:$0xc0]
    %v330 = vrot.slane %v328, 6
    %v332 = vadd.f32 %v322, %v330
    %v333 = vxor.u32 %v327, 2147483648
    %v334 = vmul.f32 %v333, 1.442695
    %v335 = vpow.pop %v334
    %v336 = vadd.f32 %v335, 1.0
    %v337 = vrcp.pop %v336
    %v338 = vmul.f32 1.0, %v337
    %v339 = vtanh.pop %v327
    %v340 = vmul.f32 %v338, 0.0
    %342 = vrot.lane.b32.xlu0 %v339, 64
    %v343 = vpop.permute.xlu0 %342
    %v345 = vmul.f32 %v338, %v343
    %347 = vrot.lane.b32.xlu0 %v345, 32
    %v348 = vpop.permute.xlu0 %347
    %v350 = vadd.f32 %v340, %v348
    %v351 = vtanh.pop %v350
    %353 = vrot.lane.b32.xlu0 %v351, 64
    %v354 = vpop.permute.xlu0 %353
    %v356 = vmul.f32 %v338, %v354
    %v357 = vxor.u32 %v332, 2147483648
    %v358 = vmul.f32 %v357, 1.442695
    %v359 = vpow.pop %v358
    %v360 = vadd.f32 %v359, 1.0
    %v361 = vrcp.pop %v360
    %v362 = vmul.f32 1.0, %v361
    %v363 = vtanh.pop %v332
    %v364 = vmul.f32 %v362, 0.0
    %366 = vrot.lane.b32.xlu0 %v363, 64
    %v367 = vpop.permute.xlu0 %366
    %v369 = vmul.f32 %v362, %v367
    %371 = vrot.lane.b32.xlu0 %v369, 32
    %v372 = vpop.permute.xlu0 %371
    %v374 = vadd.f32 %v364, %v372
    %v375 = vtanh.pop %v374
    %377 = vrot.lane.b32.xlu0 %v375, 64
    %v378 = vpop.permute.xlu0 %377
    %v380 = vmul.f32 %v362, %v378
    %382 = vrot.lane.b32.xlu0 %v356, 32
    %v383 = vpop.permute.xlu0 %382
    %386 = vrot.lane.b32.xlu0 %v380, 64
    %v387 = vpop.permute.xlu0 %386
    %vm389 = vcmask 261120
    %v390 = vsel %vm389, %v383, %v387
    %vm391 = vcmask 254976
    %392 = vst.msk [vmem:[#allocation3] sm:$0x3] %vm391, %v383
    %vm393 = vcmask 517376
    %394 = vst.msk [vmem:[#allocation3 + $0xe] sm:$0x3] %vm393, %v387
    %v395 = vpack.c.bf16 %v390, %v390
    %v396 = vld [vmem:[%s2] sm:$0xff]
    %v397 = vld [vmem:[%s2 + $0x8] sm:$0xff]
    %v398 = vld [vmem:[%s2 + $0x10] sm:$0xff]
    %v399 = vld [vmem:[%s2 + $0x18] sm:$0xff]
    %v400 = vld [vmem:[%s2 + $0x20] sm:$0xff]
    %v401 = vld [vmem:[%s2 + $0x28] sm:$0xff]
    %v402 = vld [vmem:[%s2 + $0x30] sm:$0xff]
    %v403 = vld [vmem:[%s2 + $0x38] sm:$0xff]
    %v412 = vunpack.c.l.b16 %v396
    %v413 = vunpack.c.h.b16 %v396
    %v414 = vunpack.c.l.b16 %v397
    %v415 = vunpack.c.h.b16 %v397
    %v416 = vunpack.c.l.b16 %v398
    %v417 = vunpack.c.h.b16 %v398
    %v418 = vunpack.c.l.b16 %v399
    %v419 = vunpack.c.h.b16 %v399
    %v420 = vunpack.c.l.b16 %v400
    %v421 = vunpack.c.h.b16 %v400
    %v422 = vunpack.c.l.b16 %v401
    %v423 = vunpack.c.h.b16 %v401
    %v424 = vunpack.c.l.b16 %v402
    %v425 = vunpack.c.h.b16 %v402
    %v426 = vunpack.c.l.b16 %v403
    %v427 = vunpack.c.h.b16 %v403
    %v428 = vpack.c.b16 %v414, %v412
    %v429 = vpack.c.b16 %v415, %v413
    %v430 = vpack.c.b16 %v418, %v416
    %v431 = vpack.c.b16 %v419, %v417
    %v432 = vpack.c.b16 %v422, %v420
    %v433 = vpack.c.b16 %v423, %v421
    %v434 = vpack.c.b16 %v426, %v424
    %v435 = vpack.c.b16 %v427, %v425
    %v445 = vsel %vm281, %v395, 0
    %447 = vmatprep.subr.bf16.mxu0 0
    %448 = vmatpush1.bf16.msra.mxu0 0
    %449 = vmatprep.subr.bf16.mxu0 0
    %450 = vmatpush1.bf16.msra.mxu0 0
    %451 = vmatprep.subr.bf16.mxu0 0
    %452 = vmatpush1.bf16.msra.mxu0 0
    %453 = vmatprep.subr.bf16.mxu0 0
    %454 = vmatpush1.bf16.msra.mxu0 0
    %455 = vmatprep.subr.bf16.mxu0 %v435
    %456 = vmatpush1.bf16.msra.mxu0 %v434
    %457 = vmatprep.subr.bf16.mxu0 %v433
    %458 = vmatpush1.bf16.msra.mxu0 %v432
    %459 = vmatprep.subr.bf16.mxu0 %v431
    %460 = vmatpush1.bf16.msra.mxu0 %v430
    %461 = vmatprep.subr.bf16.mxu0 %v429
    %462 = vmatpush1.bf16.msra.mxu0 %v428
    %463 = vmatprep.subr.bf16.mxu0 0
    %464 = vmatpush2.bf16.msra.mxu0 0
    %465 = vmatprep.subr.bf16.mxu0 0
    %466 = vmatpush2.bf16.msra.mxu0 0
    %467 = vmatprep.subr.bf16.mxu0 0
    %468 = vmatpush2.bf16.msra.mxu0 0
    %469 = vmatprep.subr.bf16.mxu0 0
    %470 = vmatpush2.bf16.msra.mxu0 0
    %471 = vmatprep.subr.bf16.mxu0 0
    %472 = vmatpush2.bf16.msra.mxu0 0
    %473 = vmatprep.subr.bf16.mxu0 0
    %474 = vmatpush2.bf16.msra.mxu0 0
    %475 = vmatprep.subr.bf16.mxu0 0
    %476 = vmatpush2.bf16.msra.mxu0 0
    %477 = vmatprep.subr.bf16.mxu0 0
    %478 = vmatpush2.bf16.msra.mxu0 0
    %479 = vmatprep.mubr.bf16.mxu0 0
    %480 = vmatmul.mubr.bf16.gmra.mxu0 %v445
    %v481 = vpop.f32.mrf.mxu0
    %v482 = vadd.f32 0.0, %v481
    %v483 = vpop.f32.mrf.mxu0
    %v484 = vadd.f32 0.0, %v483
    %v485 = vpop.f32.mrf.mxu0
    %v486 = vpop.f32.mrf.mxu0
    %487 = vdwg.mxu0
    %v488 = vld [vmem:[#allocation2] sm:$0xc]
    %v490 = vrot.slane %v488, 2
    %v492 = vadd.f32 %v482, %v490
    %v493 = vld [vmem:[#allocation2 + $0x18] sm:$0x30]
    %v495 = vrot.slane %v493, 4
    %v497 = vadd.f32 %v484, %v495
    %v498 = vxor.u32 %v492, 2147483648
    %v499 = vmul.f32 %v498, 1.442695
    %v500 = vpow.pop %v499
    %v501 = vadd.f32 %v500, 1.0
    %v502 = vrcp.pop %v501
    %v503 = vmul.f32 1.0, %v502
    %v504 = vtanh.pop %v492
    %v505 = vmul.f32 %v503, %v350
    %507 = vrot.lane.b32.xlu0 %v504, 64
    %v508 = vpop.permute.xlu0 %507
    %v510 = vmul.f32 %v503, %v508
    %512 = vrot.lane.b32.xlu0 %v510, 32
    %v513 = vpop.permute.xlu0 %512
    %v515 = vadd.f32 %v505, %v513
    %v516 = vtanh.pop %v515
    %518 = vrot.lane.b32.xlu0 %v516, 64
    %v519 = vpop.permute.xlu0 %518
    %v521 = vmul.f32 %v503, %v519
    %v522 = vxor.u32 %v497, 2147483648
    %v523 = vmul.f32 %v522, 1.442695
    %v524 = vpow.pop %v523
    %v525 = vadd.f32 %v524, 1.0
    %v526 = vrcp.pop %v525
    %v527 = vmul.f32 1.0, %v526
    %v528 = vtanh.pop %v497
    %v529 = vmul.f32 %v527, %v374
    %531 = vrot.lane.b32.xlu0 %v528, 64
    %v532 = vpop.permute.xlu0 %531
    %v534 = vmul.f32 %v527, %v532
    %536 = vrot.lane.b32.xlu0 %v534, 32
    %v537 = vpop.permute.xlu0 %536
    %v539 = vadd.f32 %v529, %v537
    %v540 = vtanh.pop %v539
    %542 = vrot.lane.b32.xlu0 %v540, 64
    %v543 = vpop.permute.xlu0 %542
    %v545 = vmul.f32 %v527, %v543
    %547 = vrot.lane.b32.xlu0 %v521, 32
    %v548 = vpop.permute.xlu0 %547
    %551 = vrot.lane.b32.xlu0 %v545, 64
    %v552 = vpop.permute.xlu0 %551
    %v554 = vsel %vm389, %v548, %v552
    %555 = vst.msk [vmem:[#allocation3 + $0x2] sm:$0x3] %vm391, %v548
    %556 = vst.msk [vmem:[#allocation3 + $0xc] sm:$0x3] %vm393, %v552
    %v557 = vpack.c.bf16 %v554, %v554
    %v558 = vld [vmem:[%s2] sm:$0xff]
    %v559 = vld [vmem:[%s2 + $0x8] sm:$0xff]
    %v560 = vld [vmem:[%s2 + $0x10] sm:$0xff]
    %v561 = vld [vmem:[%s2 + $0x18] sm:$0xff]
    %v562 = vld [vmem:[%s2 + $0x20] sm:$0xff]
    %v563 = vld [vmem:[%s2 + $0x28] sm:$0xff]
    %v564 = vld [vmem:[%s2 + $0x30] sm:$0xff]
    %v565 = vld [vmem:[%s2 + $0x38] sm:$0xff]
    %v574 = vunpack.c.l.b16 %v558
    %v575 = vunpack.c.h.b16 %v558
    %v576 = vunpack.c.l.b16 %v559
    %v577 = vunpack.c.h.b16 %v559
    %v578 = vunpack.c.l.b16 %v560
    %v579 = vunpack.c.h.b16 %v560
    %v580 = vunpack.c.l.b16 %v561
    %v581 = vunpack.c.h.b16 %v561
    %v582 = vunpack.c.l.b16 %v562
    %v583 = vunpack.c.h.b16 %v562
    %v584 = vunpack.c.l.b16 %v563
    %v585 = vunpack.c.h.b16 %v563
    %v586 = vunpack.c.l.b16 %v564
    %v587 = vunpack.c.h.b16 %v564
    %v588 = vunpack.c.l.b16 %v565
    %v589 = vunpack.c.h.b16 %v565
    %v590 = vpack.c.b16 %v576, %v574
    %v591 = vpack.c.b16 %v577, %v575
    %v592 = vpack.c.b16 %v580, %v578
    %v593 = vpack.c.b16 %v581, %v579
    %v594 = vpack.c.b16 %v584, %v582
    %v595 = vpack.c.b16 %v585, %v583
    %v596 = vpack.c.b16 %v588, %v586
    %v597 = vpack.c.b16 %v589, %v587
    %v607 = vsel %vm281, %v557, 0
    %609 = vmatprep.subr.bf16.mxu0 0
    %610 = vmatpush1.bf16.msra.mxu0 0
    %611 = vmatprep.subr.bf16.mxu0 0
    %612 = vmatpush1.bf16.msra.mxu0 0
    %613 = vmatprep.subr.bf16.mxu0 0
    %614 = vmatpush1.bf16.msra.mxu0 0
    %615 = vmatprep.subr.bf16.mxu0 0
    %616 = vmatpush1.bf16.msra.mxu0 0
    %617 = vmatprep.subr.bf16.mxu0 %v597
    %618 = vmatpush1.bf16.msra.mxu0 %v596
    %619 = vmatprep.subr.bf16.mxu0 %v595
    %620 = vmatpush1.bf16.msra.mxu0 %v594
    %621 = vmatprep.subr.bf16.mxu0 %v593
    %622 = vmatpush1.bf16.msra.mxu0 %v592
    %623 = vmatprep.subr.bf16.mxu0 %v591
    %624 = vmatpush1.bf16.msra.mxu0 %v590
    %625 = vmatprep.subr.bf16.mxu0 0
    %626 = vmatpush2.bf16.msra.mxu0 0
    %627 = vmatprep.subr.bf16.mxu0 0
    %628 = vmatpush2.bf16.msra.mxu0 0
    %629 = vmatprep.subr.bf16.mxu0 0
    %630 = vmatpush2.bf16.msra.mxu0 0
    %631 = vmatprep.subr.bf16.mxu0 0
    %632 = vmatpush2.bf16.msra.mxu0 0
    %633 = vmatprep.subr.bf16.mxu0 0
    %634 = vmatpush2.bf16.msra.mxu0 0
    %635 = vmatprep.subr.bf16.mxu0 0
    %636 = vmatpush2.bf16.msra.mxu0 0
    %637 = vmatprep.subr.bf16.mxu0 0
    %638 = vmatpush2.bf16.msra.mxu0 0
    %639 = vmatprep.subr.bf16.mxu0 0
    %640 = vmatpush2.bf16.msra.mxu0 0
    %641 = vmatprep.mubr.bf16.mxu0 0
    %642 = vmatmul.mubr.bf16.gmra.mxu0 %v607
    %v643 = vpop.f32.mrf.mxu0
    %v644 = vadd.f32 0.0, %v643
    %v645 = vpop.f32.mrf.mxu0
    %v646 = vadd.f32 0.0, %v645
    %v647 = vpop.f32.mrf.mxu0
    %v648 = vpop.f32.mrf.mxu0
    %649 = vdwg.mxu0
    %v650 = vld [vmem:[#allocation2] sm:$0x30]
    %v652 = vrot.slane %v650, 4
    %v654 = vadd.f32 %v644, %v652
    %v655 = vld [vmem:[#allocation2 + $0x18] sm:$0xc]
    %v657 = vrot.slane %v655, 2
    %v659 = vadd.f32 %v646, %v657
    %v660 = vxor.u32 %v654, 2147483648
    %v661 = vmul.f32 %v660, 1.442695
    %v662 = vpow.pop %v661
    %v663 = vadd.f32 %v662, 1.0
    %v664 = vrcp.pop %v663
    %v665 = vmul.f32 1.0, %v664
    %v666 = vtanh.pop %v654
    %v667 = vmul.f32 %v665, %v515
    %669 = vrot.lane.b32.xlu0 %v666, 64
    %v670 = vpop.permute.xlu0 %669
    %v672 = vmul.f32 %v665, %v670
    %674 = vrot.lane.b32.xlu0 %v672, 32
    %v675 = vpop.permute.xlu0 %674
    %v677 = vadd.f32 %v667, %v675
    %v678 = vtanh.pop %v677
    %680 = vrot.lane.b32.xlu0 %v678, 64
    %v681 = vpop.permute.xlu0 %680
    %v683 = vmul.f32 %v665, %v681
    %v684 = vxor.u32 %v659, 2147483648
    %v685 = vmul.f32 %v684, 1.442695
    %v686 = vpow.pop %v685
    %v687 = vadd.f32 %v686, 1.0
    %v688 = vrcp.pop %v687
    %v689 = vmul.f32 1.0, %v688
    %v690 = vtanh.pop %v659
    %v691 = vmul.f32 %v689, %v539
    %693 = vrot.lane.b32.xlu0 %v690, 64
    %v694 = vpop.permute.xlu0 %693
    %v696 = vmul.f32 %v689, %v694
    %698 = vrot.lane.b32.xlu0 %v696, 32
    %v699 = vpop.permute.xlu0 %698
    %v701 = vadd.f32 %v691, %v699
    %v702 = vtanh.pop %v701
    %704 = vrot.lane.b32.xlu0 %v702, 64
    %v705 = vpop.permute.xlu0 %704
    %v707 = vmul.f32 %v689, %v705
    %709 = vrot.lane.b32.xlu0 %v683, 32
    %v710 = vpop.permute.xlu0 %709
    %713 = vrot.lane.b32.xlu0 %v707, 64
    %v714 = vpop.permute.xlu0 %713
    %v716 = vsel %vm389, %v710, %v714
    %717 = vst.msk [vmem:[#allocation3 + $0x4] sm:$0x3] %vm391, %v710
    %718 = vst.msk [vmem:[#allocation3 + $0xa] sm:$0x3] %vm393, %v714
    %v719 = vpack.c.bf16 %v716, %v716
    %v720 = vld [vmem:[%s2] sm:$0xff]
    %v721 = vld [vmem:[%s2 + $0x8] sm:$0xff]
    %v722 = vld [vmem:[%s2 + $0x10] sm:$0xff]
    %v723 = vld [vmem:[%s2 + $0x18] sm:$0xff]
    %v724 = vld [vmem:[%s2 + $0x20] sm:$0xff]
    %v725 = vld [vmem:[%s2 + $0x28] sm:$0xff]
    %v726 = vld [vmem:[%s2 + $0x30] sm:$0xff]
    %v727 = vld [vmem:[%s2 + $0x38] sm:$0xff]
    %v736 = vunpack.c.l.b16 %v720
    %v737 = vunpack.c.h.b16 %v720
    %v738 = vunpack.c.l.b16 %v721
    %v739 = vunpack.c.h.b16 %v721
    %v740 = vunpack.c.l.b16 %v722
    %v741 = vunpack.c.h.b16 %v722
    %v742 = vunpack.c.l.b16 %v723
    %v743 = vunpack.c.h.b16 %v723
    %v744 = vunpack.c.l.b16 %v724
    %v745 = vunpack.c.h.b16 %v724
    %v746 = vunpack.c.l.b16 %v725
    %v747 = vunpack.c.h.b16 %v725
    %v748 = vunpack.c.l.b16 %v726
    %v749 = vunpack.c.h.b16 %v726
    %v750 = vunpack.c.l.b16 %v727
    %v751 = vunpack.c.h.b16 %v727
    %v752 = vpack.c.b16 %v738, %v736
    %v753 = vpack.c.b16 %v739, %v737
    %v754 = vpack.c.b16 %v742, %v740
    %v755 = vpack.c.b16 %v743, %v741
    %v756 = vpack.c.b16 %v746, %v744
    %v757 = vpack.c.b16 %v747, %v745
    %v758 = vpack.c.b16 %v750, %v748
    %v759 = vpack.c.b16 %v751, %v749
    %v769 = vsel %vm281, %v719, 0
    %771 = vmatprep.subr.bf16.mxu0 0
    %772 = vmatpush1.bf16.msra.mxu0 0
    %773 = vmatprep.subr.bf16.mxu0 0
    %774 = vmatpush1.bf16.msra.mxu0 0
    %775 = vmatprep.subr.bf16.mxu0 0
    %776 = vmatpush1.bf16.msra.mxu0 0
    %777 = vmatprep.subr.bf16.mxu0 0
    %778 = vmatpush1.bf16.msra.mxu0 0
    %779 = vmatprep.subr.bf16.mxu0 %v759
    %780 = vmatpush1.bf16.msra.mxu0 %v758
    %781 = vmatprep.subr.bf16.mxu0 %v757
    %782 = vmatpush1.bf16.msra.mxu0 %v756
    %783 = vmatprep.subr.bf16.mxu0 %v755
    %784 = vmatpush1.bf16.msra.mxu0 %v754
    %785 = vmatprep.subr.bf16.mxu0 %v753
    %786 = vmatpush1.bf16.msra.mxu0 %v752
    %787 = vmatprep.subr.bf16.mxu0 0
    %788 = vmatpush2.bf16.msra.mxu0 0
    %789 = vmatprep.subr.bf16.mxu0 0
    %790 = vmatpush2.bf16.msra.mxu0 0
    %791 = vmatprep.subr.bf16.mxu0 0
    %792 = vmatpush2.bf16.msra.mxu0 0
    %793 = vmatprep.subr.bf16.mxu0 0
    %794 = vmatpush2.bf16.msra.mxu0 0
    %795 = vmatprep.subr.bf16.mxu0 0
    %796 = vmatpush2.bf16.msra.mxu0 0
    %797 = vmatprep.subr.bf16.mxu0 0
    %798 = vmatpush2.bf16.msra.mxu0 0
    %799 = vmatprep.subr.bf16.mxu0 0
    %800 = vmatpush2.bf16.msra.mxu0 0
    %801 = vmatprep.subr.bf16.mxu0 0
    %802 = vmatpush2.bf16.msra.mxu0 0
    %803 = vmatprep.mubr.bf16.mxu0 0
    %804 = vmatmul.mubr.bf16.gmra.mxu0 %v769
    %v805 = vpop.f32.mrf.mxu0
    %v806 = vadd.f32 0.0, %v805
    %v807 = vpop.f32.mrf.mxu0
    %v808 = vadd.f32 0.0, %v807
    %v809 = vpop.f32.mrf.mxu0
    %v810 = vpop.f32.mrf.mxu0
    %811 = vdwg.mxu0
    %v812 = vld [vmem:[#allocation2] sm:$0xc0]
    %v814 = vrot.slane %v812, 6
    %v816 = vadd.f32 %v806, %v814
    %v817 = vld [vmem:[#allocation2 + $0x18] sm:$0x3]
    %v818 = vadd.f32 %v808, %v817
    %v819 = vxor.u32 %v816, 2147483648
    %v820 = vmul.f32 %v819, 1.442695
    %v821 = vpow.pop %v820
    %v822 = vadd.f32 %v821, 1.0
    %v823 = vrcp.pop %v822
    %v824 = vmul.f32 1.0, %v823
    %v825 = vtanh.pop %v816
    %v826 = vmul.f32 %v824, %v677
    %828 = vrot.lane.b32.xlu0 %v825, 64
    %v829 = vpop.permute.xlu0 %828
    %v831 = vmul.f32 %v824, %v829
    %833 = vrot.lane.b32.xlu0 %v831, 32
    %v834 = vpop.permute.xlu0 %833
    %v836 = vadd.f32 %v826, %v834
    %v837 = vtanh.pop %v836
    %839 = vrot.lane.b32.xlu0 %v837, 64
    %v840 = vpop.permute.xlu0 %839
    %v842 = vmul.f32 %v824, %v840
    %v843 = vxor.u32 %v818, 2147483648
    %v844 = vmul.f32 %v843, 1.442695
    %v845 = vpow.pop %v844
    %v846 = vadd.f32 %v845, 1.0
    %v847 = vrcp.pop %v846
    %v848 = vmul.f32 1.0, %v847
    %v849 = vtanh.pop %v818
    %v850 = vmul.f32 %v848, %v701
    %852 = vrot.lane.b32.xlu0 %v849, 64
    %v853 = vpop.permute.xlu0 %852
    %v855 = vmul.f32 %v848, %v853
    %857 = vrot.lane.b32.xlu0 %v855, 32
    %v858 = vpop.permute.xlu0 %857
    %v860 = vadd.f32 %v850, %v858
    %v861 = vtanh.pop %v860
    %863 = vrot.lane.b32.xlu0 %v861, 64
    %v864 = vpop.permute.xlu0 %863
    %v866 = vmul.f32 %v848, %v864
    %868 = vrot.lane.b32.xlu0 %v842, 32
    %v869 = vpop.permute.xlu0 %868
    %872 = vrot.lane.b32.xlu0 %v866, 64
    %v873 = vpop.permute.xlu0 %872
    %v875 = vsel %vm389, %v869, %v873
    %876 = vst.msk [vmem:[#allocation3 + $0x6] sm:$0x3] %vm391, %v869
    %877 = vst.msk [vmem:[#allocation3 + $0x8] sm:$0x3] %vm393, %v873
    %v878 = vpack.c.bf16 %v875, %v875
    %v879 = vld [vmem:[%s2] sm:$0xff]
    %v880 = vld [vmem:[%s2 + $0x8] sm:$0xff]
    %v881 = vld [vmem:[%s2 + $0x10] sm:$0xff]
    %v882 = vld [vmem:[%s2 + $0x18] sm:$0xff]
    %v883 = vld [vmem:[%s2 + $0x20] sm:$0xff]
    %v884 = vld [vmem:[%s2 + $0x28] sm:$0xff]
    %v885 = vld [vmem:[%s2 + $0x30] sm:$0xff]
    %v886 = vld [vmem:[%s2 + $0x38] sm:$0xff]
    %v895 = vunpack.c.l.b16 %v879
    %v896 = vunpack.c.h.b16 %v879
    %v897 = vunpack.c.l.b16 %v880
    %v898 = vunpack.c.h.b16 %v880
    %v899 = vunpack.c.l.b16 %v881
    %v900 = vunpack.c.h.b16 %v881
    %v901 = vunpack.c.l.b16 %v882
    %v902 = vunpack.c.h.b16 %v882
    %v903 = vunpack.c.l.b16 %v883
    %v904 = vunpack.c.h.b16 %v883
    %v905 = vunpack.c.l.b16 %v884
    %v906 = vunpack.c.h.b16 %v884
    %v907 = vunpack.c.l.b16 %v885
    %v908 = vunpack.c.h.b16 %v885
    %v909 = vunpack.c.l.b16 %v886
    %v910 = vunpack.c.h.b16 %v886
    %v911 = vpack.c.b16 %v897, %v895
    %v912 = vpack.c.b16 %v898, %v896
    %v913 = vpack.c.b16 %v901, %v899
    %v914 = vpack.c.b16 %v902, %v900
    %v915 = vpack.c.b16 %v905, %v903
    %v916 = vpack.c.b16 %v906, %v904
    %v917 = vpack.c.b16 %v909, %v907
    %v918 = vpack.c.b16 %v910, %v908
    %v928 = vsel %vm281, %v878, 0
    %930 = vmatprep.subr.bf16.mxu0 0
    %931 = vmatpush1.bf16.msra.mxu0 0
    %932 = vmatprep.subr.bf16.mxu0 0
    %933 = vmatpush1.bf16.msra.mxu0 0
    %934 = vmatprep.subr.bf16.mxu0 0
    %935 = vmatpush1.bf16.msra.mxu0 0
    %936 = vmatprep.subr.bf16.mxu0 0
    %937 = vmatpush1.bf16.msra.mxu0 0
    %938 = vmatprep.subr.bf16.mxu0 %v918
    %939 = vmatpush1.bf16.msra.mxu0 %v917
    %940 = vmatprep.subr.bf16.mxu0 %v916
    %941 = vmatpush1.bf16.msra.mxu0 %v915
    %942 = vmatprep.subr.bf16.mxu0 %v914
    %943 = vmatpush1.bf16.msra.mxu0 %v913
    %944 = vmatprep.subr.bf16.mxu0 %v912
    %945 = vmatpush1.bf16.msra.mxu0 %v911
    %946 = vmatprep.subr.bf16.mxu0 0
    %947 = vmatpush2.bf16.msra.mxu0 0
    %948 = vmatprep.subr.bf16.mxu0 0
    %949 = vmatpush2.bf16.msra.mxu0 0
    %950 = vmatprep.subr.bf16.mxu0 0
    %951 = vmatpush2.bf16.msra.mxu0 0
    %952 = vmatprep.subr.bf16.mxu0 0
    %953 = vmatpush2.bf16.msra.mxu0 0
    %954 = vmatprep.subr.bf16.mxu0 0
    %955 = vmatpush2.bf16.msra.mxu0 0
    %956 = vmatprep.subr.bf16.mxu0 0
    %957 = vmatpush2.bf16.msra.mxu0 0
    %958 = vmatprep.subr.bf16.mxu0 0
    %959 = vmatpush2.bf16.msra.mxu0 0
    %960 = vmatprep.subr.bf16.mxu0 0
    %961 = vmatpush2.bf16.msra.mxu0 0
    %962 = vmatprep.mubr.bf16.mxu0 0
    %963 = vmatmul.mubr.bf16.gmra.mxu0 %v928
    %v964 = vpop.f32.mrf.mxu0
    %v965 = vadd.f32 0.0, %v964
    %v966 = vpop.f32.mrf.mxu0
    %v967 = vadd.f32 0.0, %v966
    %v968 = vpop.f32.mrf.mxu0
    %v969 = vpop.f32.mrf.mxu0
    %970 = vdwg.mxu0
    %v971 = vld [vmem:[#allocation2 + $0x10] sm:$0x3]
    %v972 = vadd.f32 %v965, %v971
    %v973 = vld [vmem:[#allocation2 + $0x8] sm:$0xc0]
    %v975 = vrot.slane %v973, 6
    %v977 = vadd.f32 %v967, %v975
    %v978 = vxor.u32 %v972, 2147483648
    %v979 = vmul.f32 %v978, 1.442695
    %v980 = vpow.pop %v979
    %v981 = vadd.f32 %v980, 1.0
    %v982 = vrcp.pop %v981
    %v983 = vmul.f32 1.0, %v982
    %v984 = vtanh.pop %v972
    %v985 = vmul.f32 %v983, %v836
    %987 = vrot.lane.b32.xlu0 %v984, 64
    %v988 = vpop.permute.xlu0 %987
    %v990 = vmul.f32 %v983, %v988
    %992 = vrot.lane.b32.xlu0 %v990, 32
    %v993 = vpop.permute.xlu0 %992
    %v995 = vadd.f32 %v985, %v993
    %v996 = vtanh.pop %v995
    %998 = vrot.lane.b32.xlu0 %v996, 64
    %v999 = vpop.permute.xlu0 %998
    %v1001 = vmul.f32 %v983, %v999
    %v1002 = vxor.u32 %v977, 2147483648
    %v1003 = vmul.f32 %v1002, 1.442695
    %v1004 = vpow.pop %v1003
    %v1005 = vadd.f32 %v1004, 1.0
    %v1006 = vrcp.pop %v1005
    %v1007 = vmul.f32 1.0, %v1006
    %v1008 = vtanh.pop %v977
    %v1009 = vmul.f32 %v1007, %v860
    %1011 = vrot.lane.b32.xlu0 %v1008, 64
    %v1012 = vpop.permute.xlu0 %1011
    %v1014 = vmul.f32 %v1007, %v1012
    %1016 = vrot.lane.b32.xlu0 %v1014, 32
    %v1017 = vpop.permute.xlu0 %1016
    %v1019 = vadd.f32 %v1009, %v1017
    %v1020 = vtanh.pop %v1019
    %1022 = vrot.lane.b32.xlu0 %v1020, 64
    %v1023 = vpop.permute.xlu0 %1022
    %v1025 = vmul.f32 %v1007, %v1023
    %1027 = vrot.lane.b32.xlu0 %v1001, 32
    %v1028 = vpop.permute.xlu0 %1027
    %1031 = vrot.lane.b32.xlu0 %v1025, 64
    %v1032 = vpop.permute.xlu0 %1031
    %v1034 = vsel %vm389, %v1028, %v1032
    %1035 = vst.msk [vmem:[#allocation3 + $0x8] sm:$0x3] %vm391, %v1028
    %1036 = vst.msk [vmem:[#allocation3 + $0x6] sm:$0x3] %vm393, %v1032
    %v1037 = vpack.c.bf16 %v1034, %v1034
    %v1038 = vld [vmem:[%s2] sm:$0xff]
    %v1039 = vld [vmem:[%s2 + $0x8] sm:$0xff]
    %v1040 = vld [vmem:[%s2 + $0x10] sm:$0xff]
    %v1041 = vld [vmem:[%s2 + $0x18] sm:$0xff]
    %v1042 = vld [vmem:[%s2 + $0x20] sm:$0xff]
    %v1043 = vld [vmem:[%s2 + $0x28] sm:$0xff]
    %v1044 = vld [vmem:[%s2 + $0x30] sm:$0xff]
    %v1045 = vld [vmem:[%s2 + $0x38] sm:$0xff]
    %v1054 = vunpack.c.l.b16 %v1038
    %v1055 = vunpack.c.h.b16 %v1038
    %v1056 = vunpack.c.l.b16 %v1039
    %v1057 = vunpack.c.h.b16 %v1039
    %v1058 = vunpack.c.l.b16 %v1040
    %v1059 = vunpack.c.h.b16 %v1040
    %v1060 = vunpack.c.l.b16 %v1041
    %v1061 = vunpack.c.h.b16 %v1041
    %v1062 = vunpack.c.l.b16 %v1042
    %v1063 = vunpack.c.h.b16 %v1042
    %v1064 = vunpack.c.l.b16 %v1043
    %v1065 = vunpack.c.h.b16 %v1043
    %v1066 = vunpack.c.l.b16 %v1044
    %v1067 = vunpack.c.h.b16 %v1044
    %v1068 = vunpack.c.l.b16 %v1045
    %v1069 = vunpack.c.h.b16 %v1045
    %v1070 = vpack.c.b16 %v1056, %v1054
    %v1071 = vpack.c.b16 %v1057, %v1055
    %v1072 = vpack.c.b16 %v1060, %v1058
    %v1073 = vpack.c.b16 %v1061, %v1059
    %v1074 = vpack.c.b16 %v1064, %v1062
    %v1075 = vpack.c.b16 %v1065, %v1063
    %v1076 = vpack.c.b16 %v1068, %v1066
    %v1077 = vpack.c.b16 %v1069, %v1067
    %v1087 = vsel %vm281, %v1037, 0
    %1089 = vmatprep.subr.bf16.mxu0 0
    %1090 = vmatpush1.bf16.msra.mxu0 0
    %1091 = vmatprep.subr.bf16.mxu0 0
    %1092 = vmatpush1.bf16.msra.mxu0 0
    %1093 = vmatprep.subr.bf16.mxu0 0
    %1094 = vmatpush1.bf16.msra.mxu0 0
    %1095 = vmatprep.subr.bf16.mxu0 0
    %1096 = vmatpush1.bf16.msra.mxu0 0
    %1097 = vmatprep.subr.bf16.mxu0 %v1077
    %1098 = vmatpush1.bf16.msra.mxu0 %v1076
    %1099 = vmatprep.subr.bf16.mxu0 %v1075
    %1100 = vmatpush1.bf16.msra.mxu0 %v1074
    %1101 = vmatprep.subr.bf16.mxu0 %v1073
    %1102 = vmatpush1.bf16.msra.mxu0 %v1072
    %1103 = vmatprep.subr.bf16.mxu0 %v1071
    %1104 = vmatpush1.bf16.msra.mxu0 %v1070
    %1105 = vmatprep.subr.bf16.mxu0 0
    %1106 = vmatpush2.bf16.msra.mxu0 0
    %1107 = vmatprep.subr.bf16.mxu0 0
    %1108 = vmatpush2.bf16.msra.mxu0 0
    %1109 = vmatprep.subr.bf16.mxu0 0
    %1110 = vmatpush2.bf16.msra.mxu0 0
    %1111 = vmatprep.subr.bf16.mxu0 0
    %1112 = vmatpush2.bf16.msra.mxu0 0
    %1113 = vmatprep.subr.bf16.mxu0 0
    %1114 = vmatpush2.bf16.msra.mxu0 0
    %1115 = vmatprep.subr.bf16.mxu0 0
    %1116 = vmatpush2.bf16.msra.mxu0 0
    %1117 = vmatprep.subr.bf16.mxu0 0
    %1118 = vmatpush2.bf16.msra.mxu0 0
    %1119 = vmatprep.subr.bf16.mxu0 0
    %1120 = vmatpush2.bf16.msra.mxu0 0
    %1121 = vmatprep.mubr.bf16.mxu0 0
    %1122 = vmatmul.mubr.bf16.gmra.mxu0 %v1087
    %v1123 = vpop.f32.mrf.mxu0
    %v1124 = vadd.f32 0.0, %v1123
    %v1125 = vpop.f32.mrf.mxu0
    %v1126 = vadd.f32 0.0, %v1125
    %v1127 = vpop.f32.mrf.mxu0
    %v1128 = vpop.f32.mrf.mxu0
    %1129 = vdwg.mxu0
    %v1130 = vld [vmem:[#allocation2 + $0x10] sm:$0xc]
    %v1132 = vrot.slane %v1130, 2
    %v1134 = vadd.f32 %v1124, %v1132
    %v1135 = vld [vmem:[#allocation2 + $0x8] sm:$0x30]
    %v1137 = vrot.slane %v1135, 4
    %v1139 = vadd.f32 %v1126, %v1137
    %v1140 = vxor.u32 %v1134, 2147483648
    %v1141 = vmul.f32 %v1140, 1.442695
    %v1142 = vpow.pop %v1141
    %v1143 = vadd.f32 %v1142, 1.0
    %v1144 = vrcp.pop %v1143
    %v1145 = vmul.f32 1.0, %v1144
    %v1146 = vtanh.pop %v1134
    %v1147 = vmul.f32 %v1145, %v995
    %1149 = vrot.lane.b32.xlu0 %v1146, 64
    %v1150 = vpop.permute.xlu0 %1149
    %v1152 = vmul.f32 %v1145, %v1150
    %1154 = vrot.lane.b32.xlu0 %v1152, 32
    %v1155 = vpop.permute.xlu0 %1154
    %v1157 = vadd.f32 %v1147, %v1155
    %v1158 = vtanh.pop %v1157
    %1160 = vrot.lane.b32.xlu0 %v1158, 64
    %v1161 = vpop.permute.xlu0 %1160
    %v1163 = vmul.f32 %v1145, %v1161
    %v1164 = vxor.u32 %v1139, 2147483648
    %v1165 = vmul.f32 %v1164, 1.442695
    %v1166 = vpow.pop %v1165
    %v1167 = vadd.f32 %v1166, 1.0
    %v1168 = vrcp.pop %v1167
    %v1169 = vmul.f32 1.0, %v1168
    %v1170 = vtanh.pop %v1139
    %v1171 = vmul.f32 %v1169, %v1019
    %1173 = vrot.lane.b32.xlu0 %v1170, 64
    %v1174 = vpop.permute.xlu0 %1173
    %v1176 = vmul.f32 %v1169, %v1174
    %1178 = vrot.lane.b32.xlu0 %v1176, 32
    %v1179 = vpop.permute.xlu0 %1178
    %v1181 = vadd.f32 %v1171, %v1179
    %v1182 = vtanh.pop %v1181
    %1184 = vrot.lane.b32.xlu0 %v1182, 64
    %v1185 = vpop.permute.xlu0 %1184
    %v1187 = vmul.f32 %v1169, %v1185
    %1189 = vrot.lane.b32.xlu0 %v1163, 32
    %v1190 = vpop.permute.xlu0 %1189
    %1193 = vrot.lane.b32.xlu0 %v1187, 64
    %v1194 = vpop.permute.xlu0 %1193
    %v1196 = vsel %vm389, %v1190, %v1194
    %1197 = vst.msk [vmem:[#allocation3 + $0xa] sm:$0x3] %vm391, %v1190
    %1198 = vst.msk [vmem:[#allocation3 + $0x4] sm:$0x3] %vm393, %v1194
    %v1199 = vpack.c.bf16 %v1196, %v1196
    %v1200 = vld [vmem:[%s2] sm:$0xff]
    %v1201 = vld [vmem:[%s2 + $0x8] sm:$0xff]
    %v1202 = vld [vmem:[%s2 + $0x10] sm:$0xff]
    %v1203 = vld [vmem:[%s2 + $0x18] sm:$0xff]
    %v1204 = vld [vmem:[%s2 + $0x20] sm:$0xff]
    %v1205 = vld [vmem:[%s2 + $0x28] sm:$0xff]
    %v1206 = vld [vmem:[%s2 + $0x30] sm:$0xff]
    %v1207 = vld [vmem:[%s2 + $0x38] sm:$0xff]
    %v1216 = vunpack.c.l.b16 %v1200
    %v1217 = vunpack.c.h.b16 %v1200
    %v1218 = vunpack.c.l.b16 %v1201
    %v1219 = vunpack.c.h.b16 %v1201
    %v1220 = vunpack.c.l.b16 %v1202
    %v1221 = vunpack.c.h.b16 %v1202
    %v1222 = vunpack.c.l.b16 %v1203
    %v1223 = vunpack.c.h.b16 %v1203
    %v1224 = vunpack.c.l.b16 %v1204
    %v1225 = vunpack.c.h.b16 %v1204
    %v1226 = vunpack.c.l.b16 %v1205
    %v1227 = vunpack.c.h.b16 %v1205
    %v1228 = vunpack.c.l.b16 %v1206
    %v1229 = vunpack.c.h.b16 %v1206
    %v1230 = vunpack.c.l.b16 %v1207
    %v1231 = vunpack.c.h.b16 %v1207
    %v1232 = vpack.c.b16 %v1218, %v1216
    %v1233 = vpack.c.b16 %v1219, %v1217
    %v1234 = vpack.c.b16 %v1222, %v1220
    %v1235 = vpack.c.b16 %v1223, %v1221
    %v1236 = vpack.c.b16 %v1226, %v1224
    %v1237 = vpack.c.b16 %v1227, %v1225
    %v1238 = vpack.c.b16 %v1230, %v1228
    %v1239 = vpack.c.b16 %v1231, %v1229
    %v1249 = vsel %vm281, %v1199, 0
    %1251 = vmatprep.subr.bf16.mxu0 0
    %1252 = vmatpush1.bf16.msra.mxu0 0
    %1253 = vmatprep.subr.bf16.mxu0 0
    %1254 = vmatpush1.bf16.msra.mxu0 0
    %1255 = vmatprep.subr.bf16.mxu0 0
    %1256 = vmatpush1.bf16.msra.mxu0 0
    %1257 = vmatprep.subr.bf16.mxu0 0
    %1258 = vmatpush1.bf16.msra.mxu0 0
    %1259 = vmatprep.subr.bf16.mxu0 %v1239
    %1260 = vmatpush1.bf16.msra.mxu0 %v1238
    %1261 = vmatprep.subr.bf16.mxu0 %v1237
    %1262 = vmatpush1.bf16.msra.mxu0 %v1236
    %1263 = vmatprep.subr.bf16.mxu0 %v1235
    %1264 = vmatpush1.bf16.msra.mxu0 %v1234
    %1265 = vmatprep.subr.bf16.mxu0 %v1233
    %1266 = vmatpush1.bf16.msra.mxu0 %v1232
    %1267 = vmatprep.subr.bf16.mxu0 0
    %1268 = vmatpush2.bf16.msra.mxu0 0
    %1269 = vmatprep.subr.bf16.mxu0 0
    %1270 = vmatpush2.bf16.msra.mxu0 0
    %1271 = vmatprep.subr.bf16.mxu0 0
    %1272 = vmatpush2.bf16.msra.mxu0 0
    %1273 = vmatprep.subr.bf16.mxu0 0
    %1274 = vmatpush2.bf16.msra.mxu0 0
    %1275 = vmatprep.subr.bf16.mxu0 0
    %1276 = vmatpush2.bf16.msra.mxu0 0
    %1277 = vmatprep.subr.bf16.mxu0 0
    %1278 = vmatpush2.bf16.msra.mxu0 0
    %1279 = vmatprep.subr.bf16.mxu0 0
    %1280 = vmatpush2.bf16.msra.mxu0 0
    %1281 = vmatprep.subr.bf16.mxu0 0
    %1282 = vmatpush2.bf16.msra.mxu0 0
    %1283 = vmatprep.mubr.bf16.mxu0 0
    %1284 = vmatmul.mubr.bf16.gmra.mxu0 %v1249
    %v1285 = vpop.f32.mrf.mxu0
    %v1286 = vadd.f32 0.0, %v1285
    %v1287 = vpop.f32.mrf.mxu0
    %v1288 = vadd.f32 0.0, %v1287
    %v1289 = vpop.f32.mrf.mxu0
    %v1290 = vpop.f32.mrf.mxu0
    %1291 = vdwg.mxu0
    %v1292 = vld [vmem:[#allocation2 + $0x10] sm:$0x30]
    %v1294 = vrot.slane %v1292, 4
    %v1296 = vadd.f32 %v1286, %v1294
    %v1297 = vld [vmem:[#allocation2 + $0x8] sm:$0xc]
    %v1299 = vrot.slane %v1297, 2
    %v1301 = vadd.f32 %v1288, %v1299
    %v1302 = vxor.u32 %v1296, 2147483648
    %v1303 = vmul.f32 %v1302, 1.442695
    %v1304 = vpow.pop %v1303
    %v1305 = vadd.f32 %v1304, 1.0
    %v1306 = vrcp.pop %v1305
    %v1307 = vmul.f32 1.0, %v1306
    %v1308 = vtanh.pop %v1296
    %v1309 = vmul.f32 %v1307, %v1157
    %1311 = vrot.lane.b32.xlu0 %v1308, 64
    %v1312 = vpop.permute.xlu0 %1311
    %v1314 = vmul.f32 %v1307, %v1312
    %1316 = vrot.lane.b32.xlu0 %v1314, 32
    %v1317 = vpop.permute.xlu0 %1316
    %v1319 = vadd.f32 %v1309, %v1317
    %v1320 = vtanh.pop %v1319
    %1322 = vrot.lane.b32.xlu0 %v1320, 64
    %v1323 = vpop.permute.xlu0 %1322
    %v1325 = vmul.f32 %v1307, %v1323
    %v1326 = vxor.u32 %v1301, 2147483648
    %v1327 = vmul.f32 %v1326, 1.442695
    %v1328 = vpow.pop %v1327
    %v1329 = vadd.f32 %v1328, 1.0
    %v1330 = vrcp.pop %v1329
    %v1331 = vmul.f32 1.0, %v1330
    %v1332 = vtanh.pop %v1301
    %v1333 = vmul.f32 %v1331, %v1181
    %1335 = vrot.lane.b32.xlu0 %v1332, 64
    %v1336 = vpop.permute.xlu0 %1335
    %v1338 = vmul.f32 %v1331, %v1336
    %1340 = vrot.lane.b32.xlu0 %v1338, 32
    %v1341 = vpop.permute.xlu0 %1340
    %v1343 = vadd.f32 %v1333, %v1341
    %v1344 = vtanh.pop %v1343
    %1346 = vrot.lane.b32.xlu0 %v1344, 64
    %v1347 = vpop.permute.xlu0 %1346
    %v1349 = vmul.f32 %v1331, %v1347
    %1351 = vrot.lane.b32.xlu0 %v1325, 32
    %v1352 = vpop.permute.xlu0 %1351
    %1355 = vrot.lane.b32.xlu0 %v1349, 64
    %v1356 = vpop.permute.xlu0 %1355
    %v1358 = vsel %vm389, %v1352, %v1356
    %1359 = vst.msk [vmem:[#allocation3 + $0xc] sm:$0x3] %vm391, %v1352
    %1360 = vst.msk [vmem:[#allocation3 + $0x2] sm:$0x3] %vm393, %v1356
    %v1361 = vpack.c.bf16 %v1358, %v1358
    %v1362 = vld [vmem:[%s2] sm:$0xff]
    %v1363 = vld [vmem:[%s2 + $0x8] sm:$0xff]
    %v1364 = vld [vmem:[%s2 + $0x10] sm:$0xff]
    %v1365 = vld [vmem:[%s2 + $0x18] sm:$0xff]
    %v1366 = vld [vmem:[%s2 + $0x20] sm:$0xff]
    %v1367 = vld [vmem:[%s2 + $0x28] sm:$0xff]
    %v1368 = vld [vmem:[%s2 + $0x30] sm:$0xff]
    %v1369 = vld [vmem:[%s2 + $0x38] sm:$0xff]
    %v1378 = vunpack.c.l.b16 %v1362
    %v1379 = vunpack.c.h.b16 %v1362
    %v1380 = vunpack.c.l.b16 %v1363
    %v1381 = vunpack.c.h.b16 %v1363
    %v1382 = vunpack.c.l.b16 %v1364
    %v1383 = vunpack.c.h.b16 %v1364
    %v1384 = vunpack.c.l.b16 %v1365
    %v1385 = vunpack.c.h.b16 %v1365
    %v1386 = vunpack.c.l.b16 %v1366
    %v1387 = vunpack.c.h.b16 %v1366
    %v1388 = vunpack.c.l.b16 %v1367
    %v1389 = vunpack.c.h.b16 %v1367
    %v1390 = vunpack.c.l.b16 %v1368
    %v1391 = vunpack.c.h.b16 %v1368
    %v1392 = vunpack.c.l.b16 %v1369
    %v1393 = vunpack.c.h.b16 %v1369
    %v1394 = vpack.c.b16 %v1380, %v1378
    %v1395 = vpack.c.b16 %v1381, %v1379
    %v1396 = vpack.c.b16 %v1384, %v1382
    %v1397 = vpack.c.b16 %v1385, %v1383
    %v1398 = vpack.c.b16 %v1388, %v1386
    %v1399 = vpack.c.b16 %v1389, %v1387
    %v1400 = vpack.c.b16 %v1392, %v1390
    %v1401 = vpack.c.b16 %v1393, %v1391
    %v1411 = vsel %vm281, %v1361, 0
    %1413 = vmatprep.subr.bf16.mxu0 0
    %1414 = vmatpush1.bf16.msra.mxu0 0
    %1415 = vmatprep.subr.bf16.mxu0 0
    %1416 = vmatpush1.bf16.msra.mxu0 0
    %1417 = vmatprep.subr.bf16.mxu0 0
    %1418 = vmatpush1.bf16.msra.mxu0 0
    %1419 = vmatprep.subr.bf16.mxu0 0
    %1420 = vmatpush1.bf16.msra.mxu0 0
    %1421 = vmatprep.subr.bf16.mxu0 %v1401
    %1422 = vmatpush1.bf16.msra.mxu0 %v1400
    %1423 = vmatprep.subr.bf16.mxu0 %v1399
    %1424 = vmatpush1.bf16.msra.mxu0 %v1398
    %1425 = vmatprep.subr.bf16.mxu0 %v1397
    %1426 = vmatpush1.bf16.msra.mxu0 %v1396
    %1427 = vmatprep.subr.bf16.mxu0 %v1395
    %1428 = vmatpush1.bf16.msra.mxu0 %v1394
    %1429 = vmatprep.subr.bf16.mxu0 0
    %1430 = vmatpush2.bf16.msra.mxu0 0
    %1431 = vmatprep.subr.bf16.mxu0 0
    %1432 = vmatpush2.bf16.msra.mxu0 0
    %1433 = vmatprep.subr.bf16.mxu0 0
    %1434 = vmatpush2.bf16.msra.mxu0 0
    %1435 = vmatprep.subr.bf16.mxu0 0
    %1436 = vmatpush2.bf16.msra.mxu0 0
    %1437 = vmatprep.subr.bf16.mxu0 0
    %1438 = vmatpush2.bf16.msra.mxu0 0
    %1439 = vmatprep.subr.bf16.mxu0 0
    %1440 = vmatpush2.bf16.msra.mxu0 0
    %1441 = vmatprep.subr.bf16.mxu0 0
    %1442 = vmatpush2.bf16.msra.mxu0 0
    %1443 = vmatprep.subr.bf16.mxu0 0
    %1444 = vmatpush2.bf16.msra.mxu0 0
    %1445 = vmatprep.mubr.bf16.mxu0 0
    %1446 = vmatmul.mubr.bf16.gmra.mxu0 %v1411
    %v1447 = vpop.f32.mrf.mxu0
    %v1448 = vadd.f32 0.0, %v1447
    %v1449 = vpop.f32.mrf.mxu0
    %v1450 = vadd.f32 0.0, %v1449
    %v1451 = vpop.f32.mrf.mxu0
    %v1452 = vpop.f32.mrf.mxu0
    %1453 = vdwg.mxu0
    %v1454 = vld [vmem:[#allocation2 + $0x10] sm:$0xc0]
    %v1456 = vrot.slane %v1454, 6
    %v1458 = vadd.f32 %v1448, %v1456
    %v1459 = vld [vmem:[#allocation2 + $0x8] sm:$0x3]
    %v1460 = vadd.f32 %v1450, %v1459
    %v1461 = vxor.u32 %v1458, 2147483648
    %v1462 = vmul.f32 %v1461, 1.442695
    %v1463 = vpow.pop %v1462
    %v1464 = vadd.f32 %v1463, 1.0
    %v1465 = vrcp.pop %v1464
    %v1466 = vmul.f32 1.0, %v1465
    %v1467 = vtanh.pop %v1458
    %v1468 = vmul.f32 %v1466, %v1319
    %1470 = vrot.lane.b32.xlu0 %v1467, 64
    %v1471 = vpop.permute.xlu0 %1470
    %v1473 = vmul.f32 %v1466, %v1471
    %1475 = vrot.lane.b32.xlu0 %v1473, 32
    %v1476 = vpop.permute.xlu0 %1475
    %v1478 = vadd.f32 %v1468, %v1476
    %v1479 = vtanh.pop %v1478
    %1481 = vrot.lane.b32.xlu0 %v1479, 64
    %v1482 = vpop.permute.xlu0 %1481
    %v1484 = vmul.f32 %v1466, %v1482
    %v1485 = vxor.u32 %v1460, 2147483648
    %v1486 = vmul.f32 %v1485, 1.442695
    %v1487 = vpow.pop %v1486
    %v1488 = vadd.f32 %v1487, 1.0
    %v1489 = vrcp.pop %v1488
    %v1490 = vmul.f32 1.0, %v1489
    %v1491 = vtanh.pop %v1460
    %v1492 = vmul.f32 %v1490, %v1343
    %1494 = vrot.lane.b32.xlu0 %v1491, 64
    %v1495 = vpop.permute.xlu0 %1494
    %v1497 = vmul.f32 %v1490, %v1495
    %1499 = vrot.lane.b32.xlu0 %v1497, 32
    %v1500 = vpop.permute.xlu0 %1499
    %v1502 = vadd.f32 %v1492, %v1500
    %v1503 = vtanh.pop %v1502
    %1505 = vrot.lane.b32.xlu0 %v1503, 64
    %v1506 = vpop.permute.xlu0 %1505
    %v1508 = vmul.f32 %v1490, %v1506
    %1510 = vrot.lane.b32.xlu0 %v1484, 32
    %v1511 = vpop.permute.xlu0 %1510
    %1513 = vst.msk [vmem:[#allocation3 + $0xe] sm:$0x3] %vm391, %v1511
    %1515 = vrot.lane.b32.xlu0 %v1508, 64
    %v1516 = vpop.permute.xlu0 %1515
    %1518 = vst.msk [vmem:[#allocation3] sm:$0x3] %vm393, %v1516
    %v1519 = vld [vmem:[#allocation3] sm:$0xff]
    %v1520 = vld [vmem:[#allocation3 + $0x8] sm:$0xff]
    %v1521 = vpack.c.bf16 %v1520, %v1519
    %v1522 = vld [vmem:[#allocation7] sm:$0xff]
    %v1523 = vld [vmem:[#allocation7 + $0x8] sm:$0xff]
    %v1524 = vld [vmem:[#allocation7 + $0x10] sm:$0xff]
    %v1525 = vld [vmem:[#allocation7 + $0x18] sm:$0xff]
    %v1526 = vld [vmem:[#allocation7 + $0x20] sm:$0xff]
    %v1527 = vld [vmem:[#allocation7 + $0x28] sm:$0xff]
    %v1528 = vld [vmem:[#allocation7 + $0x30] sm:$0xff]
    %v1529 = vld [vmem:[#allocation7 + $0x38] sm:$0xff]
    %v1530 = vld [vmem:[%s6] sm:$0x3]
    %v1532 = vlaneseq
    %v1533 = vshrl.u32 %v1532, 7
    %v1534 = vsub.s32 0, %v1533
    %v1535 = vrot.slane %v1530, %v1534
    %v1536 = vlaneseq
    %v1537 = vshrl.u32 %v1536, 7
    %v1538 = vsub.s32 1, %v1537
    %v1539 = vrot.slane %v1530, %v1538
    %v1550 = vunpack.c.l.b16 %v1522
    %v1551 = vunpack.c.h.b16 %v1522
    %v1552 = vunpack.c.l.b16 %v1523
    %v1553 = vunpack.c.h.b16 %v1523
    %v1554 = vunpack.c.l.b16 %v1524
    %v1555 = vunpack.c.h.b16 %v1524
    %v1556 = vunpack.c.l.b16 %v1525
    %v1557 = vunpack.c.h.b16 %v1525
    %v1558 = vunpack.c.l.b16 %v1526
    %v1559 = vunpack.c.h.b16 %v1526
    %v1560 = vunpack.c.l.b16 %v1527
    %v1561 = vunpack.c.h.b16 %v1527
    %v1562 = vunpack.c.l.b16 %v1528
    %v1563 = vunpack.c.h.b16 %v1528
    %v1564 = vunpack.c.l.b16 %v1529
    %v1565 = vunpack.c.h.b16 %v1529
    %v1566 = vpack.c.b16 %v1552, %v1550
    %v1567 = vpack.c.b16 %v1553, %v1551
    %v1568 = vpack.c.b16 %v1556, %v1554
    %v1569 = vpack.c.b16 %v1557, %v1555
    %v1570 = vpack.c.b16 %v1560, %v1558
    %v1571 = vpack.c.b16 %v1561, %v1559
    %v1572 = vpack.c.b16 %v1564, %v1562
    %v1573 = vpack.c.b16 %v1565, %v1563
    %v1583 = vsel %vm281, %v1521, 0
    %1585 = vmatprep.subr.bf16.mxu0 0
    %1586 = vmatpush1.bf16.msra.mxu0 0
    %1587 = vmatprep.subr.bf16.mxu0 0
    %1588 = vmatpush1.bf16.msra.mxu0 0
    %1589 = vmatprep.subr.bf16.mxu0 0
    %1590 = vmatpush1.bf16.msra.mxu0 0
    %1591 = vmatprep.subr.bf16.mxu0 0
    %1592 = vmatpush1.bf16.msra.mxu0 0
    %1593 = vmatprep.subr.bf16.mxu0 %v1573
    %1594 = vmatpush1.bf16.msra.mxu0 %v1572
    %1595 = vmatprep.subr.bf16.mxu0 %v1571
    %1596 = vmatpush1.bf16.msra.mxu0 %v1570
    %1597 = vmatprep.subr.bf16.mxu0 %v1569
    %1598 = vmatpush1.bf16.msra.mxu0 %v1568
    %1599 = vmatprep.subr.bf16.mxu0 %v1567
    %1600 = vmatpush1.bf16.msra.mxu0 %v1566
    %1601 = vmatprep.subr.bf16.mxu0 0
    %1602 = vmatpush2.bf16.msra.mxu0 0
    %1603 = vmatprep.subr.bf16.mxu0 0
    %1604 = vmatpush2.bf16.msra.mxu0 0
    %1605 = vmatprep.subr.bf16.mxu0 0
    %1606 = vmatpush2.bf16.msra.mxu0 0
    %1607 = vmatprep.subr.bf16.mxu0 0
    %1608 = vmatpush2.bf16.msra.mxu0 0
    %1609 = vmatprep.subr.bf16.mxu0 0
    %1610 = vmatpush2.bf16.msra.mxu0 0
    %1611 = vmatprep.subr.bf16.mxu0 0
    %1612 = vmatpush2.bf16.msra.mxu0 0
    %1613 = vmatprep.subr.bf16.mxu0 0
    %1614 = vmatpush2.bf16.msra.mxu0 0
    %1615 = vmatprep.subr.bf16.mxu0 0
    %1616 = vmatpush2.bf16.msra.mxu0 0
    %1617 = vmatprep.mubr.bf16.mxu0 0
    %1618 = vmatmul.mubr.bf16.gmra.mxu0 %v1583
    %v1619 = vpop.f32.mrf.mxu0
    %v1620 = vadd.f32 %v1535, %v1619
    %v1621 = vpop.f32.mrf.mxu0
    %v1622 = vadd.f32 %v1539, %v1621
    %v1623 = vpop.f32.mrf.mxu0
    %v1624 = vadd.f32 %v1535, %v1623
    %v1625 = vpop.f32.mrf.mxu0
    %v1626 = vadd.f32 %v1539, %v1625
    %1627 = vdwg.mxu0
    %1628 = vst [vmem:[#allocation2] sm:$0xff] %v1620
    %1629 = vst [vmem:[#allocation2 + $0x8] sm:$0xff] %v1622
    %1630 = vst [vmem:[#allocation2 + $0x10] sm:$0xff] %v1624
    %1631 = vst [vmem:[#allocation2 + $0x18] sm:$0xff] %v1626
    %v1632 = vld [vmem:[#allocation9] sm:$0xff]
    %v1633 = vld [vmem:[#allocation9 + $0x8] sm:$0xff]
    %v1634 = vld [vmem:[#allocation9 + $0x10] sm:$0xff]
    %v1635 = vld [vmem:[#allocation9 + $0x18] sm:$0xff]
    %v1636 = vld [vmem:[#allocation9 + $0x20] sm:$0xff]
    %v1637 = vld [vmem:[#allocation9 + $0x28] sm:$0xff]
    %v1638 = vld [vmem:[#allocation9 + $0x30] sm:$0xff]
    %v1639 = vld [vmem:[#allocation9 + $0x38] sm:$0xff]
    %v1648 = vunpack.c.l.b16 %v1632
    %v1649 = vunpack.c.h.b16 %v1632
    %v1650 = vunpack.c.l.b16 %v1633
    %v1651 = vunpack.c.h.b16 %v1633
    %v1652 = vunpack.c.l.b16 %v1634
    %v1653 = vunpack.c.h.b16 %v1634
    %v1654 = vunpack.c.l.b16 %v1635
    %v1655 = vunpack.c.h.b16 %v1635
    %v1656 = vunpack.c.l.b16 %v1636
    %v1657 = vunpack.c.h.b16 %v1636
    %v1658 = vunpack.c.l.b16 %v1637
    %v1659 = vunpack.c.h.b16 %v1637
    %v1660 = vunpack.c.l.b16 %v1638
    %v1661 = vunpack.c.h.b16 %v1638
    %v1662 = vunpack.c.l.b16 %v1639
    %v1663 = vunpack.c.h.b16 %v1639
    %v1664 = vpack.c.b16 %v1650, %v1648
    %v1665 = vpack.c.b16 %v1651, %v1649
    %v1666 = vpack.c.b16 %v1654, %v1652
    %v1667 = vpack.c.b16 %v1655, %v1653
    %v1668 = vpack.c.b16 %v1658, %v1656
    %v1669 = vpack.c.b16 %v1659, %v1657
    %v1670 = vpack.c.b16 %v1662, %v1660
    %v1671 = vpack.c.b16 %v1663, %v1661
    %1680 = vmatprep.subr.bf16.mxu0 0
    %1681 = vmatpush1.bf16.msra.mxu0 0
    %1682 = vmatprep.subr.bf16.mxu0 0
    %1683 = vmatpush1.bf16.msra.mxu0 0
    %1684 = vmatprep.subr.bf16.mxu0 0
    %1685 = vmatpush1.bf16.msra.mxu0 0
    %1686 = vmatprep.subr.bf16.mxu0 0
    %1687 = vmatpush1.bf16.msra.mxu0 0
    %1688 = vmatprep.subr.bf16.mxu0 %v1671
    %1689 = vmatpush1.bf16.msra.mxu0 %v1670
    %1690 = vmatprep.subr.bf16.mxu0 %v1669
    %1691 = vmatpush1.bf16.msra.mxu0 %v1668
    %1692 = vmatprep.subr.bf16.mxu0 %v1667
    %1693 = vmatpush1.bf16.msra.mxu0 %v1666
    %1694 = vmatprep.subr.bf16.mxu0 %v1665
    %1695 = vmatpush1.bf16.msra.mxu0 %v1664
    %1696 = vmatprep.subr.bf16.mxu0 0
    %1697 = vmatpush2.bf16.msra.mxu0 0
    %1698 = vmatprep.subr.bf16.mxu0 0
    %1699 = vmatpush2.bf16.msra.mxu0 0
    %1700 = vmatprep.subr.bf16.mxu0 0
    %1701 = vmatpush2.bf16.msra.mxu0 0
    %1702 = vmatprep.subr.bf16.mxu0 0
    %1703 = vmatpush2.bf16.msra.mxu0 0
    %1704 = vmatprep.subr.bf16.mxu0 0
    %1705 = vmatpush2.bf16.msra.mxu0 0
    %1706 = vmatprep.subr.bf16.mxu0 0
    %1707 = vmatpush2.bf16.msra.mxu0 0
    %1708 = vmatprep.subr.bf16.mxu0 0
    %1709 = vmatpush2.bf16.msra.mxu0 0
    %1710 = vmatprep.subr.bf16.mxu0 0
    %1711 = vmatpush2.bf16.msra.mxu0 0
    %1712 = vmatprep.mubr.bf16.mxu0 0
    %1713 = vmatmul.mubr.bf16.gmra.mxu0 %v283
    %v1714 = vpop.f32.mrf.mxu0
    %v1715 = vadd.f32 0.0, %v1714
    %v1716 = vpop.f32.mrf.mxu0
    %v1717 = vadd.f32 0.0, %v1716
    %v1718 = vpop.f32.mrf.mxu0
    %v1719 = vpop.f32.mrf.mxu0
    %1720 = vdwg.mxu0
    %v1721 = vld [vmem:[#allocation2] sm:$0x3]
    %v1722 = vadd.f32 %v1715, %v1721
    %v1723 = vld [vmem:[#allocation2 + $0x18] sm:$0xc0]
    %v1725 = vrot.slane %v1723, 6
    %v1727 = vadd.f32 %v1717, %v1725
    %v1728 = vxor.u32 %v1722, 2147483648
    %v1729 = vmul.f32 %v1728, 1.442695
    %v1730 = vpow.pop %v1729
    %v1731 = vadd.f32 %v1730, 1.0
    %v1732 = vrcp.pop %v1731
    %v1733 = vmul.f32 1.0, %v1732
    %v1734 = vtanh.pop %v1722
    %v1735 = vmul.f32 %v1733, 0.0
    %1737 = vrot.lane.b32.xlu0 %v1734, 64
    %v1738 = vpop.permute.xlu0 %1737
    %v1740 = vmul.f32 %v1733, %v1738
    %1742 = vrot.lane.b32.xlu0 %v1740, 32
    %v1743 = vpop.permute.xlu0 %1742
    %v1745 = vadd.f32 %v1735, %v1743
    %v1746 = vtanh.pop %v1745
    %1748 = vrot.lane.b32.xlu0 %v1746, 64
    %v1749 = vpop.permute.xlu0 %1748
    %v1751 = vmul.f32 %v1733, %v1749
    %v1752 = vxor.u32 %v1727, 2147483648
    %v1753 = vmul.f32 %v1752, 1.442695
    %v1754 = vpow.pop %v1753
    %v1755 = vadd.f32 %v1754, 1.0
    %v1756 = vrcp.pop %v1755
    %v1757 = vmul.f32 1.0, %v1756
    %v1758 = vtanh.pop %v1727
    %v1759 = vmul.f32 %v1757, 0.0
    %1761 = vrot.lane.b32.xlu0 %v1758, 64
    %v1762 = vpop.permute.xlu0 %1761
    %v1764 = vmul.f32 %v1757, %v1762
    %1766 = vrot.lane.b32.xlu0 %v1764, 32
    %v1767 = vpop.permute.xlu0 %1766
    %v1769 = vadd.f32 %v1759, %v1767
    %v1770 = vtanh.pop %v1769
    %1772 = vrot.lane.b32.xlu0 %v1770, 64
    %v1773 = vpop.permute.xlu0 %1772
    %v1775 = vmul.f32 %v1757, %v1773
    %1777 = vrot.lane.b32.xlu0 %v1751, 32
    %v1778 = vpop.permute.xlu0 %1777
    %1781 = vrot.lane.b32.xlu0 %v1775, 64
    %v1782 = vpop.permute.xlu0 %1781
    %v1784 = vsel %vm389, %v1778, %v1782
    %v1785 = vpack.c.bf16 %v1784, %v1784
    %v1787 = vsel %vm281, %v1785, 0
    %1789 = vmatprep.subr.bf16.mxu0 0
    %1790 = vmatpush1.bf16.msra.mxu0 0
    %1791 = vmatprep.subr.bf16.mxu0 0
    %1792 = vmatpush1.bf16.msra.mxu0 0
    %1793 = vmatprep.subr.bf16.mxu0 0
    %1794 = vmatpush1.bf16.msra.mxu0 0
    %1795 = vmatprep.subr.bf16.mxu0 0
    %1796 = vmatpush1.bf16.msra.mxu0 0
    %1797 = vmatprep.subr.bf16.mxu0 %v1671
    %1798 = vmatpush1.bf16.msra.mxu0 %v1670
    %1799 = vmatprep.subr.bf16.mxu0 %v1669
    %1800 = vmatpush1.bf16.msra.mxu0 %v1668
    %1801 = vmatprep.subr.bf16.mxu0 %v1667
    %1802 = vmatpush1.bf16.msra.mxu0 %v1666
    %1803 = vmatprep.subr.bf16.mxu0 %v1665
    %1804 = vmatpush1.bf16.msra.mxu0 %v1664
    %1805 = vmatprep.subr.bf16.mxu0 0
    %1806 = vmatpush2.bf16.msra.mxu0 0
    %1807 = vmatprep.subr.bf16.mxu0 0
    %1808 = vmatpush2.bf16.msra.mxu0 0
    %1809 = vmatprep.subr.bf16.mxu0 0
    %1810 = vmatpush2.bf16.msra.mxu0 0
    %1811 = vmatprep.subr.bf16.mxu0 0
    %1812 = vmatpush2.bf16.msra.mxu0 0
    %1813 = vmatprep.subr.bf16.mxu0 0
    %1814 = vmatpush2.bf16.msra.mxu0 0
    %1815 = vmatprep.subr.bf16.mxu0 0
    %1816 = vmatpush2.bf16.msra.mxu0 0
    %1817 = vmatprep.subr.bf16.mxu0 0
    %1818 = vmatpush2.bf16.msra.mxu0 0
    %1819 = vmatprep.subr.bf16.mxu0 0
    %1820 = vmatpush2.bf16.msra.mxu0 0
    %1821 = vmatprep.mubr.bf16.mxu0 0
    %1822 = vmatmul.mubr.bf16.gmra.mxu0 %v1787
    %v1823 = vpop.f32.mrf.mxu0
    %v1824 = vadd.f32 0.0, %v1823
    %v1825 = vpop.f32.mrf.mxu0
    %v1826 = vadd.f32 0.0, %v1825
    %v1827 = vpop.f32.mrf.mxu0
    %v1828 = vpop.f32.mrf.mxu0
    %1829 = vdwg.mxu0
    %v1830 = vld [vmem:[#allocation2] sm:$0xc]
    %v1832 = vrot.slane %v1830, 2
    %v1834 = vadd.f32 %v1824, %v1832
    %v1835 = vld [vmem:[#allocation2 + $0x18] sm:$0x30]
    %v1837 = vrot.slane %v1835, 4
    %v1839 = vadd.f32 %v1826, %v1837
    %v1840 = vxor.u32 %v1834, 2147483648
    %v1841 = vmul.f32 %v1840, 1.442695
    %v1842 = vpow.pop %v1841
    %v1843 = vadd.f32 %v1842, 1.0
    %v1844 = vrcp.pop %v1843
    %v1845 = vmul.f32 1.0, %v1844
    %v1846 = vtanh.pop %v1834
    %v1847 = vmul.f32 %v1845, %v1745
    %1849 = vrot.lane.b32.xlu0 %v1846, 64
    %v1850 = vpop.permute.xlu0 %1849
    %v1852 = vmul.f32 %v1845, %v1850
    %1854 = vrot.lane.b32.xlu0 %v1852, 32
    %v1855 = vpop.permute.xlu0 %1854
    %v1857 = vadd.f32 %v1847, %v1855
    %v1858 = vtanh.pop %v1857
    %1860 = vrot.lane.b32.xlu0 %v1858, 64
    %v1861 = vpop.permute.xlu0 %1860
    %v1863 = vmul.f32 %v1845, %v1861
    %v1864 = vxor.u32 %v1839, 2147483648
    %v1865 = vmul.f32 %v1864, 1.442695
    %v1866 = vpow.pop %v1865
    %v1867 = vadd.f32 %v1866, 1.0
    %v1868 = vrcp.pop %v1867
    %v1869 = vmul.f32 1.0, %v1868
    %v1870 = vtanh.pop %v1839
    %v1871 = vmul.f32 %v1869, %v1769
    %1873 = vrot.lane.b32.xlu0 %v1870, 64
    %v1874 = vpop.permute.xlu0 %1873
    %v1876 = vmul.f32 %v1869, %v1874
    %1878 = vrot.lane.b32.xlu0 %v1876, 32
    %v1879 = vpop.permute.xlu0 %1878
    %v1881 = vadd.f32 %v1871, %v1879
    %v1882 = vtanh.pop %v1881
    %1884 = vrot.lane.b32.xlu0 %v1882, 64
    %v1885 = vpop.permute.xlu0 %1884
    %v1887 = vmul.f32 %v1869, %v1885
    %1889 = vrot.lane.b32.xlu0 %v1863, 32
    %v1890 = vpop.permute.xlu0 %1889
    %1893 = vrot.lane.b32.xlu0 %v1887, 64
    %v1894 = vpop.permute.xlu0 %1893
    %v1896 = vsel %vm389, %v1890, %v1894
    %v1897 = vpack.c.bf16 %v1896, %v1896
    %v1899 = vsel %vm281, %v1897, 0
    %1901 = vmatprep.subr.bf16.mxu0 0
    %1902 = vmatpush1.bf16.msra.mxu0 0
    %1903 = vmatprep.subr.bf16.mxu0 0
    %1904 = vmatpush1.bf16.msra.mxu0 0
    %1905 = vmatprep.subr.bf16.mxu0 0
    %1906 = vmatpush1.bf16.msra.mxu0 0
    %1907 = vmatprep.subr.bf16.mxu0 0
    %1908 = vmatpush1.bf16.msra.mxu0 0
    %1909 = vmatprep.subr.bf16.mxu0 %v1671
    %1910 = vmatpush1.bf16.msra.mxu0 %v1670
    %1911 = vmatprep.subr.bf16.mxu0 %v1669
    %1912 = vmatpush1.bf16.msra.mxu0 %v1668
    %1913 = vmatprep.subr.bf16.mxu0 %v1667
    %1914 = vmatpush1.bf16.msra.mxu0 %v1666
    %1915 = vmatprep.subr.bf16.mxu0 %v1665
    %1916 = vmatpush1.bf16.msra.mxu0 %v1664
    %1917 = vmatprep.subr.bf16.mxu0 0
    %1918 = vmatpush2.bf16.msra.mxu0 0
    %1919 = vmatprep.subr.bf16.mxu0 0
    %1920 = vmatpush2.bf16.msra.mxu0 0
    %1921 = vmatprep.subr.bf16.mxu0 0
    %1922 = vmatpush2.bf16.msra.mxu0 0
    %1923 = vmatprep.subr.bf16.mxu0 0
    %1924 = vmatpush2.bf16.msra.mxu0 0
    %1925 = vmatprep.subr.bf16.mxu0 0
    %1926 = vmatpush2.bf16.msra.mxu0 0
    %1927 = vmatprep.subr.bf16.mxu0 0
    %1928 = vmatpush2.bf16.msra.mxu0 0
    %1929 = vmatprep.subr.bf16.mxu0 0
    %1930 = vmatpush2.bf16.msra.mxu0 0
    %1931 = vmatprep.subr.bf16.mxu0 0
    %1932 = vmatpush2.bf16.msra.mxu0 0
    %1933 = vmatprep.mubr.bf16.mxu0 0
    %1934 = vmatmul.mubr.bf16.gmra.mxu0 %v1899
    %v1935 = vpop.f32.mrf.mxu0
    %v1936 = vadd.f32 0.0, %v1935
    %v1937 = vpop.f32.mrf.mxu0
    %v1938 = vadd.f32 0.0, %v1937
    %v1939 = vpop.f32.mrf.mxu0
    %v1940 = vpop.f32.mrf.mxu0
    %1941 = vdwg.mxu0
    %v1942 = vld [vmem:[#allocation2] sm:$0x30]
    %v1944 = vrot.slane %v1942, 4
    %v1946 = vadd.f32 %v1936, %v1944
    %v1947 = vld [vmem:[#allocation2 + $0x18] sm:$0xc]
    %v1949 = vrot.slane %v1947, 2
    %v1951 = vadd.f32 %v1938, %v1949
    %v1952 = vxor.u32 %v1946, 2147483648
    %v1953 = vmul.f32 %v1952, 1.442695
    %v1954 = vpow.pop %v1953
    %v1955 = vadd.f32 %v1954, 1.0
    %v1956 = vrcp.pop %v1955
    %v1957 = vmul.f32 1.0, %v1956
    %v1958 = vtanh.pop %v1946
    %v1959 = vmul.f32 %v1957, %v1857
    %1961 = vrot.lane.b32.xlu0 %v1958, 64
    %v1962 = vpop.permute.xlu0 %1961
    %v1964 = vmul.f32 %v1957, %v1962
    %1966 = vrot.lane.b32.xlu0 %v1964, 32
    %v1967 = vpop.permute.xlu0 %1966
    %v1969 = vadd.f32 %v1959, %v1967
    %v1970 = vtanh.pop %v1969
    %1972 = vrot.lane.b32.xlu0 %v1970, 64
    %v1973 = vpop.permute.xlu0 %1972
    %v1975 = vmul.f32 %v1957, %v1973
    %v1976 = vxor.u32 %v1951, 2147483648
    %v1977 = vmul.f32 %v1976, 1.442695
    %v1978 = vpow.pop %v1977
    %v1979 = vadd.f32 %v1978, 1.0
    %v1980 = vrcp.pop %v1979
    %v1981 = vmul.f32 1.0, %v1980
    %v1982 = vtanh.pop %v1951
    %v1983 = vmul.f32 %v1981, %v1881
    %1985 = vrot.lane.b32.xlu0 %v1982, 64
    %v1986 = vpop.permute.xlu0 %1985
    %v1988 = vmul.f32 %v1981, %v1986
    %1990 = vrot.lane.b32.xlu0 %v1988, 32
    %v1991 = vpop.permute.xlu0 %1990
    %v1993 = vadd.f32 %v1983, %v1991
    %v1994 = vtanh.pop %v1993
    %1996 = vrot.lane.b32.xlu0 %v1994, 64
    %v1997 = vpop.permute.xlu0 %1996
    %v1999 = vmul.f32 %v1981, %v1997
    %2001 = vrot.lane.b32.xlu0 %v1975, 32
    %v2002 = vpop.permute.xlu0 %2001
    %2005 = vrot.lane.b32.xlu0 %v1999, 64
    %v2006 = vpop.permute.xlu0 %2005
    %v2008 = vsel %vm389, %v2002, %v2006
    %v2009 = vpack.c.bf16 %v2008, %v2008
    %v2011 = vsel %vm281, %v2009, 0
    %2013 = vmatprep.subr.bf16.mxu0 0
    %2014 = vmatpush1.bf16.msra.mxu0 0
    %2015 = vmatprep.subr.bf16.mxu0 0
    %2016 = vmatpush1.bf16.msra.mxu0 0
    %2017 = vmatprep.subr.bf16.mxu0 0
    %2018 = vmatpush1.bf16.msra.mxu0 0
    %2019 = vmatprep.subr.bf16.mxu0 0
    %2020 = vmatpush1.bf16.msra.mxu0 0
    %2021 = vmatprep.subr.bf16.mxu0 %v1671
    %2022 = vmatpush1.bf16.msra.mxu0 %v1670
    %2023 = vmatprep.subr.bf16.mxu0 %v1669
    %2024 = vmatpush1.bf16.msra.mxu0 %v1668
    %2025 = vmatprep.subr.bf16.mxu0 %v1667
    %2026 = vmatpush1.bf16.msra.mxu0 %v1666
    %2027 = vmatprep.subr.bf16.mxu0 %v1665
    %2028 = vmatpush1.bf16.msra.mxu0 %v1664
    %2029 = vmatprep.subr.bf16.mxu0 0
    %2030 = vmatpush2.bf16.msra.mxu0 0
    %2031 = vmatprep.subr.bf16.mxu0 0
    %2032 = vmatpush2.bf16.msra.mxu0 0
    %2033 = vmatprep.subr.bf16.mxu0 0
    %2034 = vmatpush2.bf16.msra.mxu0 0
    %2035 = vmatprep.subr.bf16.mxu0 0
    %2036 = vmatpush2.bf16.msra.mxu0 0
    %2037 = vmatprep.subr.bf16.mxu0 0
    %2038 = vmatpush2.bf16.msra.mxu0 0
    %2039 = vmatprep.subr.bf16.mxu0 0
    %2040 = vmatpush2.bf16.msra.mxu0 0
    %2041 = vmatprep.subr.bf16.mxu0 0
    %2042 = vmatpush2.bf16.msra.mxu0 0
    %2043 = vmatprep.subr.bf16.mxu0 0
    %2044 = vmatpush2.bf16.msra.mxu0 0
    %2045 = vmatprep.mubr.bf16.mxu0 0
    %2046 = vmatmul.mubr.bf16.gmra.mxu0 %v2011
    %v2047 = vpop.f32.mrf.mxu0
    %v2048 = vadd.f32 0.0, %v2047
    %v2049 = vpop.f32.mrf.mxu0
    %v2050 = vadd.f32 0.0, %v2049
    %v2051 = vpop.f32.mrf.mxu0
    %v2052 = vpop.f32.mrf.mxu0
    %2053 = vdwg.mxu0
    %v2054 = vld [vmem:[#allocation2] sm:$0xc0]
    %v2056 = vrot.slane %v2054, 6
    %v2058 = vadd.f32 %v2048, %v2056
    %v2059 = vld [vmem:[#allocation2 + $0x18] sm:$0x3]
    %v2060 = vadd.f32 %v2050, %v2059
    %v2061 = vxor.u32 %v2058, 2147483648
    %v2062 = vmul.f32 %v2061, 1.442695
    %v2063 = vpow.pop %v2062
    %v2064 = vadd.f32 %v2063, 1.0
    %v2065 = vrcp.pop %v2064
    %v2066 = vmul.f32 1.0, %v2065
    %v2067 = vtanh.pop %v2058
    %v2068 = vmul.f32 %v2066, %v1969
    %2070 = vrot.lane.b32.xlu0 %v2067, 64
    %v2071 = vpop.permute.xlu0 %2070
    %v2073 = vmul.f32 %v2066, %v2071
    %2075 = vrot.lane.b32.xlu0 %v2073, 32
    %v2076 = vpop.permute.xlu0 %2075
    %v2078 = vadd.f32 %v2068, %v2076
    %v2079 = vtanh.pop %v2078
    %2081 = vrot.lane.b32.xlu0 %v2079, 64
    %v2082 = vpop.permute.xlu0 %2081
    %v2084 = vmul.f32 %v2066, %v2082
    %v2085 = vxor.u32 %v2060, 2147483648
    %v2086 = vmul.f32 %v2085, 1.442695
    %v2087 = vpow.pop %v2086
    %v2088 = vadd.f32 %v2087, 1.0
    %v2089 = vrcp.pop %v2088
    %v2090 = vmul.f32 1.0, %v2089
    %v2091 = vtanh.pop %v2060
    %v2092 = vmul.f32 %v2090, %v1993
    %2094 = vrot.lane.b32.xlu0 %v2091, 64
    %v2095 = vpop.permute.xlu0 %2094
    %v2097 = vmul.f32 %v2090, %v2095
    %2099 = vrot.lane.b32.xlu0 %v2097, 32
    %v2100 = vpop.permute.xlu0 %2099
    %v2102 = vadd.f32 %v2092, %v2100
    %v2103 = vtanh.pop %v2102
    %2105 = vrot.lane.b32.xlu0 %v2103, 64
    %v2106 = vpop.permute.xlu0 %2105
    %v2108 = vmul.f32 %v2090, %v2106
    %2110 = vrot.lane.b32.xlu0 %v2084, 32
    %v2111 = vpop.permute.xlu0 %2110
    %2114 = vrot.lane.b32.xlu0 %v2108, 64
    %v2115 = vpop.permute.xlu0 %2114
    %v2117 = vsel %vm389, %v2111, %v2115
    %v2118 = vpack.c.bf16 %v2117, %v2117
    %v2120 = vsel %vm281, %v2118, 0
    %2122 = vmatprep.subr.bf16.mxu0 0
    %2123 = vmatpush1.bf16.msra.mxu0 0
    %2124 = vmatprep.subr.bf16.mxu0 0
    %2125 = vmatpush1.bf16.msra.mxu0 0
    %2126 = vmatprep.subr.bf16.mxu0 0
    %2127 = vmatpush1.bf16.msra.mxu0 0
    %2128 = vmatprep.subr.bf16.mxu0 0
    %2129 = vmatpush1.bf16.msra.mxu0 0
    %2130 = vmatprep.subr.bf16.mxu0 %v1671
    %2131 = vmatpush1.bf16.msra.mxu0 %v1670
    %2132 = vmatprep.subr.bf16.mxu0 %v1669
    %2133 = vmatpush1.bf16.msra.mxu0 %v1668
    %2134 = vmatprep.subr.bf16.mxu0 %v1667
    %2135 = vmatpush1.bf16.msra.mxu0 %v1666
    %2136 = vmatprep.subr.bf16.mxu0 %v1665
    %2137 = vmatpush1.bf16.msra.mxu0 %v1664
    %2138 = vmatprep.subr.bf16.mxu0 0
    %2139 = vmatpush2.bf16.msra.mxu0 0
    %2140 = vmatprep.subr.bf16.mxu0 0
    %2141 = vmatpush2.bf16.msra.mxu0 0
    %2142 = vmatprep.subr.bf16.mxu0 0
    %2143 = vmatpush2.bf16.msra.mxu0 0
    %2144 = vmatprep.subr.bf16.mxu0 0
    %2145 = vmatpush2.bf16.msra.mxu0 0
    %2146 = vmatprep.subr.bf16.mxu0 0
    %2147 = vmatpush2.bf16.msra.mxu0 0
    %2148 = vmatprep.subr.bf16.mxu0 0
    %2149 = vmatpush2.bf16.msra.mxu0 0
    %2150 = vmatprep.subr.bf16.mxu0 0
    %2151 = vmatpush2.bf16.msra.mxu0 0
    %2152 = vmatprep.subr.bf16.mxu0 0
    %2153 = vmatpush2.bf16.msra.mxu0 0
    %2154 = vmatprep.mubr.bf16.mxu0 0
    %2155 = vmatmul.mubr.bf16.gmra.mxu0 %v2120
    %v2156 = vpop.f32.mrf.mxu0
    %v2157 = vadd.f32 0.0, %v2156
    %v2158 = vpop.f32.mrf.mxu0
    %v2159 = vadd.f32 0.0, %v2158
    %v2160 = vpop.f32.mrf.mxu0
    %v2161 = vpop.f32.mrf.mxu0
    %2162 = vdwg.mxu0
    %v2163 = vld [vmem:[#allocation2 + $0x10] sm:$0x3]
    %v2164 = vadd.f32 %v2157, %v2163
    %v2165 = vld [vmem:[#allocation2 + $0x8] sm:$0xc0]
    %v2167 = vrot.slane %v2165, 6
    %v2169 = vadd.f32 %v2159, %v2167
    %v2170 = vxor.u32 %v2164, 2147483648
    %v2171 = vmul.f32 %v2170, 1.442695
    %v2172 = vpow.pop %v2171
    %v2173 = vadd.f32 %v2172, 1.0
    %v2174 = vrcp.pop %v2173
    %v2175 = vmul.f32 1.0, %v2174
    %v2176 = vtanh.pop %v2164
    %v2177 = vmul.f32 %v2175, %v2078
    %2179 = vrot.lane.b32.xlu0 %v2176, 64
    %v2180 = vpop.permute.xlu0 %2179
    %v2182 = vmul.f32 %v2175, %v2180
    %2184 = vrot.lane.b32.xlu0 %v2182, 32
    %v2185 = vpop.permute.xlu0 %2184
    %v2187 = vadd.f32 %v2177, %v2185
    %v2188 = vtanh.pop %v2187
    %2190 = vrot.lane.b32.xlu0 %v2188, 64
    %v2191 = vpop.permute.xlu0 %2190
    %v2193 = vmul.f32 %v2175, %v2191
    %v2194 = vxor.u32 %v2169, 2147483648
    %v2195 = vmul.f32 %v2194, 1.442695
    %v2196 = vpow.pop %v2195
    %v2197 = vadd.f32 %v2196, 1.0
    %v2198 = vrcp.pop %v2197
    %v2199 = vmul.f32 1.0, %v2198
    %v2200 = vtanh.pop %v2169
    %v2201 = vmul.f32 %v2199, %v2102
    %2203 = vrot.lane.b32.xlu0 %v2200, 64
    %v2204 = vpop.permute.xlu0 %2203
    %v2206 = vmul.f32 %v2199, %v2204
    %2208 = vrot.lane.b32.xlu0 %v2206, 32
    %v2209 = vpop.permute.xlu0 %2208
    %v2211 = vadd.f32 %v2201, %v2209
    %v2212 = vtanh.pop %v2211
    %2214 = vrot.lane.b32.xlu0 %v2212, 64
    %v2215 = vpop.permute.xlu0 %2214
    %v2217 = vmul.f32 %v2199, %v2215
    %2219 = vrot.lane.b32.xlu0 %v2193, 32
    %v2220 = vpop.permute.xlu0 %2219
    %2223 = vrot.lane.b32.xlu0 %v2217, 64
    %v2224 = vpop.permute.xlu0 %2223
    %v2226 = vsel %vm389, %v2220, %v2224
    %v2227 = vpack.c.bf16 %v2226, %v2226
    %v2229 = vsel %vm281, %v2227, 0
    %2231 = vmatprep.subr.bf16.mxu0 0
    %2232 = vmatpush1.bf16.msra.mxu0 0
    %2233 = vmatprep.subr.bf16.mxu0 0
    %2234 = vmatpush1.bf16.msra.mxu0 0
    %2235 = vmatprep.subr.bf16.mxu0 0
    %2236 = vmatpush1.bf16.msra.mxu0 0
    %2237 = vmatprep.subr.bf16.mxu0 0
    %2238 = vmatpush1.bf16.msra.mxu0 0
    %2239 = vmatprep.subr.bf16.mxu0 %v1671
    %2240 = vmatpush1.bf16.msra.mxu0 %v1670
    %2241 = vmatprep.subr.bf16.mxu0 %v1669
    %2242 = vmatpush1.bf16.msra.mxu0 %v1668
    %2243 = vmatprep.subr.bf16.mxu0 %v1667
    %2244 = vmatpush1.bf16.msra.mxu0 %v1666
    %2245 = vmatprep.subr.bf16.mxu0 %v1665
    %2246 = vmatpush1.bf16.msra.mxu0 %v1664
    %2247 = vmatprep.subr.bf16.mxu0 0
    %2248 = vmatpush2.bf16.msra.mxu0 0
    %2249 = vmatprep.subr.bf16.mxu0 0
    %2250 = vmatpush2.bf16.msra.mxu0 0
    %2251 = vmatprep.subr.bf16.mxu0 0
    %2252 = vmatpush2.bf16.msra.mxu0 0
    %2253 = vmatprep.subr.bf16.mxu0 0
    %2254 = vmatpush2.bf16.msra.mxu0 0
    %2255 = vmatprep.subr.bf16.mxu0 0
    %2256 = vmatpush2.bf16.msra.mxu0 0
    %2257 = vmatprep.subr.bf16.mxu0 0
    %2258 = vmatpush2.bf16.msra.mxu0 0
    %2259 = vmatprep.subr.bf16.mxu0 0
    %2260 = vmatpush2.bf16.msra.mxu0 0
    %2261 = vmatprep.subr.bf16.mxu0 0
    %2262 = vmatpush2.bf16.msra.mxu0 0
    %2263 = vmatprep.mubr.bf16.mxu0 0
    %2264 = vmatmul.mubr.bf16.gmra.mxu0 %v2229
    %v2265 = vpop.f32.mrf.mxu0
    %v2266 = vadd.f32 0.0, %v2265
    %v2267 = vpop.f32.mrf.mxu0
    %v2268 = vadd.f32 0.0, %v2267
    %v2269 = vpop.f32.mrf.mxu0
    %v2270 = vpop.f32.mrf.mxu0
    %2271 = vdwg.mxu0
    %v2272 = vld [vmem:[#allocation2 + $0x10] sm:$0xc]
    %v2274 = vrot.slane %v2272, 2
    %v2276 = vadd.f32 %v2266, %v2274
    %v2277 = vld [vmem:[#allocation2 + $0x8] sm:$0x30]
    %v2279 = vrot.slane %v2277, 4
    %v2281 = vadd.f32 %v2268, %v2279
    %v2282 = vxor.u32 %v2276, 2147483648
    %v2283 = vmul.f32 %v2282, 1.442695
    %v2284 = vpow.pop %v2283
    %v2285 = vadd.f32 %v2284, 1.0
    %v2286 = vrcp.pop %v2285
    %v2287 = vmul.f32 1.0, %v2286
    %v2288 = vtanh.pop %v2276
    %v2289 = vmul.f32 %v2287, %v2187
    %2291 = vrot.lane.b32.xlu0 %v2288, 64
    %v2292 = vpop.permute.xlu0 %2291
    %v2294 = vmul.f32 %v2287, %v2292
    %2296 = vrot.lane.b32.xlu0 %v2294, 32
    %v2297 = vpop.permute.xlu0 %2296
    %v2299 = vadd.f32 %v2289, %v2297
    %v2300 = vtanh.pop %v2299
    %2302 = vrot.lane.b32.xlu0 %v2300, 64
    %v2303 = vpop.permute.xlu0 %2302
    %v2305 = vmul.f32 %v2287, %v2303
    %v2306 = vxor.u32 %v2281, 2147483648
    %v2307 = vmul.f32 %v2306, 1.442695
    %v2308 = vpow.pop %v2307
    %v2309 = vadd.f32 %v2308, 1.0
    %v2310 = vrcp.pop %v2309
    %v2311 = vmul.f32 1.0, %v2310
    %v2312 = vtanh.pop %v2281
    %v2313 = vmul.f32 %v2311, %v2211
    %2315 = vrot.lane.b32.xlu0 %v2312, 64
    %v2316 = vpop.permute.xlu0 %2315
    %v2318 = vmul.f32 %v2311, %v2316
    %2320 = vrot.lane.b32.xlu0 %v2318, 32
    %v2321 = vpop.permute.xlu0 %2320
    %v2323 = vadd.f32 %v2313, %v2321
    %v2324 = vtanh.pop %v2323
    %2326 = vrot.lane.b32.xlu0 %v2324, 64
    %v2327 = vpop.permute.xlu0 %2326
    %v2329 = vmul.f32 %v2311, %v2327
    %2331 = vrot.lane.b32.xlu0 %v2305, 32
    %v2332 = vpop.permute.xlu0 %2331
    %2335 = vrot.lane.b32.xlu0 %v2329, 64
    %v2336 = vpop.permute.xlu0 %2335
    %v2338 = vsel %vm389, %v2332, %v2336
    %v2339 = vpack.c.bf16 %v2338, %v2338
    %v2341 = vsel %vm281, %v2339, 0
    %2343 = vmatprep.subr.bf16.mxu0 0
    %2344 = vmatpush1.bf16.msra.mxu0 0
    %2345 = vmatprep.subr.bf16.mxu0 0
    %2346 = vmatpush1.bf16.msra.mxu0 0
    %2347 = vmatprep.subr.bf16.mxu0 0
    %2348 = vmatpush1.bf16.msra.mxu0 0
    %2349 = vmatprep.subr.bf16.mxu0 0
    %2350 = vmatpush1.bf16.msra.mxu0 0
    %2351 = vmatprep.subr.bf16.mxu0 %v1671
    %2352 = vmatpush1.bf16.msra.mxu0 %v1670
    %2353 = vmatprep.subr.bf16.mxu0 %v1669
    %2354 = vmatpush1.bf16.msra.mxu0 %v1668
    %2355 = vmatprep.subr.bf16.mxu0 %v1667
    %2356 = vmatpush1.bf16.msra.mxu0 %v1666
    %2357 = vmatprep.subr.bf16.mxu0 %v1665
    %2358 = vmatpush1.bf16.msra.mxu0 %v1664
    %2359 = vmatprep.subr.bf16.mxu0 0
    %2360 = vmatpush2.bf16.msra.mxu0 0
    %2361 = vmatprep.subr.bf16.mxu0 0
    %2362 = vmatpush2.bf16.msra.mxu0 0
    %2363 = vmatprep.subr.bf16.mxu0 0
    %2364 = vmatpush2.bf16.msra.mxu0 0
    %2365 = vmatprep.subr.bf16.mxu0 0
    %2366 = vmatpush2.bf16.msra.mxu0 0
    %2367 = vmatprep.subr.bf16.mxu0 0
    %2368 = vmatpush2.bf16.msra.mxu0 0
    %2369 = vmatprep.subr.bf16.mxu0 0
    %2370 = vmatpush2.bf16.msra.mxu0 0
    %2371 = vmatprep.subr.bf16.mxu0 0
    %2372 = vmatpush2.bf16.msra.mxu0 0
    %2373 = vmatprep.subr.bf16.mxu0 0
    %2374 = vmatpush2.bf16.msra.mxu0 0
    %2375 = vmatprep.mubr.bf16.mxu0 0
    %2376 = vmatmul.mubr.bf16.gmra.mxu0 %v2341
    %v2377 = vpop.f32.mrf.mxu0
    %v2378 = vadd.f32 0.0, %v2377
    %v2379 = vpop.f32.mrf.mxu0
    %v2380 = vadd.f32 0.0, %v2379
    %v2381 = vpop.f32.mrf.mxu0
    %v2382 = vpop.f32.mrf.mxu0
    %2383 = vdwg.mxu0
    %v2384 = vld [vmem:[#allocation2 + $0x10] sm:$0x30]
    %v2386 = vrot.slane %v2384, 4
    %v2388 = vadd.f32 %v2378, %v2386
    %v2389 = vld [vmem:[#allocation2 + $0x8] sm:$0xc]
    %v2391 = vrot.slane %v2389, 2
    %v2393 = vadd.f32 %v2380, %v2391
    %v2394 = vxor.u32 %v2388, 2147483648
    %v2395 = vmul.f32 %v2394, 1.442695
    %v2396 = vpow.pop %v2395
    %v2397 = vadd.f32 %v2396, 1.0
    %v2398 = vrcp.pop %v2397
    %v2399 = vmul.f32 1.0, %v2398
    %v2400 = vtanh.pop %v2388
    %v2401 = vmul.f32 %v2399, %v2299
    %2403 = vrot.lane.b32.xlu0 %v2400, 64
    %v2404 = vpop.permute.xlu0 %2403
    %v2406 = vmul.f32 %v2399, %v2404
    %2408 = vrot.lane.b32.xlu0 %v2406, 32
    %v2409 = vpop.permute.xlu0 %2408
    %v2411 = vadd.f32 %v2401, %v2409
    %v2412 = vtanh.pop %v2411
    %2414 = vrot.lane.b32.xlu0 %v2412, 64
    %v2415 = vpop.permute.xlu0 %2414
    %v2417 = vmul.f32 %v2399, %v2415
    %v2418 = vxor.u32 %v2393, 2147483648
    %v2419 = vmul.f32 %v2418, 1.442695
    %v2420 = vpow.pop %v2419
    %v2421 = vadd.f32 %v2420, 1.0
    %v2422 = vrcp.pop %v2421
    %v2423 = vmul.f32 1.0, %v2422
    %v2424 = vtanh.pop %v2393
    %v2425 = vmul.f32 %v2423, %v2323
    %2427 = vrot.lane.b32.xlu0 %v2424, 64
    %v2428 = vpop.permute.xlu0 %2427
    %v2430 = vmul.f32 %v2423, %v2428
    %2432 = vrot.lane.b32.xlu0 %v2430, 32
    %v2433 = vpop.permute.xlu0 %2432
    %v2435 = vadd.f32 %v2425, %v2433
    %v2436 = vtanh.pop %v2435
    %2438 = vrot.lane.b32.xlu0 %v2436, 64
    %v2439 = vpop.permute.xlu0 %2438
    %v2441 = vmul.f32 %v2423, %v2439
    %2443 = vrot.lane.b32.xlu0 %v2417, 32
    %v2444 = vpop.permute.xlu0 %2443
    %2447 = vrot.lane.b32.xlu0 %v2441, 64
    %v2448 = vpop.permute.xlu0 %2447
    %v2450 = vsel %vm389, %v2444, %v2448
    %v2451 = vpack.c.bf16 %v2450, %v2450
    %v2453 = vsel %vm281, %v2451, 0
    %2455 = vmatprep.subr.bf16.mxu0 0
    %2456 = vmatpush1.bf16.msra.mxu0 0
    %2457 = vmatprep.subr.bf16.mxu0 0
    %2458 = vmatpush1.bf16.msra.mxu0 0
    %2459 = vmatprep.subr.bf16.mxu0 0
    %2460 = vmatpush1.bf16.msra.mxu0 0
    %2461 = vmatprep.subr.bf16.mxu0 0
    %2462 = vmatpush1.bf16.msra.mxu0 0
    %2463 = vmatprep.subr.bf16.mxu0 %v1671
    %2464 = vmatpush1.bf16.msra.mxu0 %v1670
    %2465 = vmatprep.subr.bf16.mxu0 %v1669
    %2466 = vmatpush1.bf16.msra.mxu0 %v1668
    %2467 = vmatprep.subr.bf16.mxu0 %v1667
    %2468 = vmatpush1.bf16.msra.mxu0 %v1666
    %2469 = vmatprep.subr.bf16.mxu0 %v1665
    %2470 = vmatpush1.bf16.msra.mxu0 %v1664
    %2471 = vmatprep.subr.bf16.mxu0 0
    %2472 = vmatpush2.bf16.msra.mxu0 0
    %2473 = vmatprep.subr.bf16.mxu0 0
    %2474 = vmatpush2.bf16.msra.mxu0 0
    %2475 = vmatprep.subr.bf16.mxu0 0
    %2476 = vmatpush2.bf16.msra.mxu0 0
    %2477 = vmatprep.subr.bf16.mxu0 0
    %2478 = vmatpush2.bf16.msra.mxu0 0
    %2479 = vmatprep.subr.bf16.mxu0 0
    %2480 = vmatpush2.bf16.msra.mxu0 0
    %2481 = vmatprep.subr.bf16.mxu0 0
    %2482 = vmatpush2.bf16.msra.mxu0 0
    %2483 = vmatprep.subr.bf16.mxu0 0
    %2484 = vmatpush2.bf16.msra.mxu0 0
    %2485 = vmatprep.subr.bf16.mxu0 0
    %2486 = vmatpush2.bf16.msra.mxu0 0
    %2487 = vmatprep.mubr.bf16.mxu0 0
    %2488 = vmatmul.mubr.bf16.gmra.mxu0 %v2453
    %v2489 = vpop.f32.mrf.mxu0
    %v2490 = vadd.f32 0.0, %v2489
    %v2491 = vpop.f32.mrf.mxu0
    %v2492 = vadd.f32 0.0, %v2491
    %v2493 = vpop.f32.mrf.mxu0
    %v2494 = vpop.f32.mrf.mxu0
    %2495 = vdwg.mxu0
    %v2496 = vld [vmem:[#allocation2 + $0x10] sm:$0xc0]
    %v2498 = vrot.slane %v2496, 6
    %v2500 = vadd.f32 %v2490, %v2498
    %v2501 = vld [vmem:[#allocation2 + $0x8] sm:$0x3]
    %v2502 = vadd.f32 %v2492, %v2501
    %v2503 = vxor.u32 %v2500, 2147483648
    %v2504 = vmul.f32 %v2503, 1.442695
    %v2505 = vpow.pop %v2504
    %v2506 = vadd.f32 %v2505, 1.0
    %v2507 = vrcp.pop %v2506
    %v2508 = vmul.f32 1.0, %v2507
    %v2509 = vtanh.pop %v2500
    %v2510 = vmul.f32 %v2508, %v2411
    %2512 = vrot.lane.b32.xlu0 %v2509, 64
    %v2513 = vpop.permute.xlu0 %2512
    %v2515 = vmul.f32 %v2508, %v2513
    %2517 = vrot.lane.b32.xlu0 %v2515, 32
    %v2518 = vpop.permute.xlu0 %2517
    %v2520 = vadd.f32 %v2510, %v2518
    %v2521 = vtanh.pop %v2520
    %2523 = vrot.lane.b32.xlu0 %v2521, 64
    %v2524 = vpop.permute.xlu0 %2523
    %v2526 = vmul.f32 %v2508, %v2524
    %v2527 = vxor.u32 %v2502, 2147483648
    %v2528 = vmul.f32 %v2527, 1.442695
    %v2529 = vpow.pop %v2528
    %v2530 = vadd.f32 %v2529, 1.0
    %v2531 = vrcp.pop %v2530
    %v2532 = vmul.f32 1.0, %v2531
    %v2533 = vtanh.pop %v2502
    %v2534 = vmul.f32 %v2532, %v2435
    %2536 = vrot.lane.b32.xlu0 %v2533, 64
    %v2537 = vpop.permute.xlu0 %2536
    %v2539 = vmul.f32 %v2532, %v2537
    %2541 = vrot.lane.b32.xlu0 %v2539, 32
    %v2542 = vpop.permute.xlu0 %2541
    %v2544 = vadd.f32 %v2534, %v2542
    %v2545 = vtanh.pop %v2544
    %2547 = vrot.lane.b32.xlu0 %v2545, 64
    %v2548 = vpop.permute.xlu0 %2547
    %v2550 = vmul.f32 %v2532, %v2548
    %2552 = vrot.lane.b32.xlu0 %v2526, 32
    %v2553 = vpop.permute.xlu0 %2552
    %2556 = vrot.lane.b32.xlu0 %v2550, 64
    %v2557 = vpop.permute.xlu0 %2556
    %v2559 = vsel %vm389, %v2553, %v2557
    %v2560 = vld [vmem:[%s7] sm:$0xff]
    %v2561 = vld [vmem:[%s7 + $0x8] sm:$0xff]
    %v2562 = vld [vmem:[%s7 + $0x10] sm:$0xff]
    %v2563 = vld [vmem:[%s7 + $0x18] sm:$0xff]
    %v2564 = vld [vmem:[%s7 + $0x20] sm:$0xff]
    %v2565 = vld [vmem:[%s7 + $0x28] sm:$0xff]
    %v2566 = vld [vmem:[%s7 + $0x30] sm:$0xff]
    %v2567 = vld [vmem:[%s7 + $0x38] sm:$0xff]
    %v2568 = vld [vmem:[%s8] sm:$0x1]
    %v2570 = vlaneseq
    %v2571 = vshrl.u32 %v2570, 7
    %v2572 = vsub.s32 0, %v2571
    %v2573 = vrot.slane %v2568, %v2572
    %v2576 = vsel %vm281, %v2559, 0
    %2578 = vmatprep.subr.mxu0 0.0
    %2579 = vmatpush1.msra.mxu0 0.0
    %2580 = vmatprep.subr.mxu0 0.0
    %2581 = vmatpush1.msra.mxu0 0.0
    %2582 = vmatprep.subr.mxu0 0.0
    %2583 = vmatpush1.msra.mxu0 0.0
    %2584 = vmatprep.subr.mxu0 0.0
    %2585 = vmatpush1.msra.mxu0 0.0
    %2586 = vmatprep.subr.mxu0 0.0
    %2587 = vmatpush1.msra.mxu0 0.0
    %2588 = vmatprep.subr.mxu0 0.0
    %2589 = vmatpush1.msra.mxu0 0.0
    %2590 = vmatprep.subr.mxu0 0.0
    %2591 = vmatpush1.msra.mxu0 0.0
    %2592 = vmatprep.subr.mxu0 0.0
    %2593 = vmatpush1.msra.mxu0 0.0
    %2594 = vmatprep.subr.mxu0 0.0
    %2595 = vmatpush1.msra.mxu0 %v2567
    %2596 = vmatprep.subr.mxu0 0.0
    %2597 = vmatpush1.msra.mxu0 %v2566
    %2598 = vmatprep.subr.mxu0 0.0
    %2599 = vmatpush1.msra.mxu0 %v2565
    %2600 = vmatprep.subr.mxu0 0.0
    %2601 = vmatpush1.msra.mxu0 %v2564
    %2602 = vmatprep.subr.mxu0 0.0
    %2603 = vmatpush1.msra.mxu0 %v2563
    %2604 = vmatprep.subr.mxu0 0.0
    %2605 = vmatpush1.msra.mxu0 %v2562
    %2606 = vmatprep.subr.mxu0 0.0
    %2607 = vmatpush1.msra.mxu0 %v2561
    %2608 = vmatprep.subr.mxu0 0.0
    %2609 = vmatpush1.msra.mxu0 %v2560
    %2610 = vmatprep.subr.mxu0 0.0
    %2611 = vmatpush2.msra.mxu0 0.0
    %2612 = vmatprep.subr.mxu0 0.0
    %2613 = vmatpush2.msra.mxu0 0.0
    %2614 = vmatprep.subr.mxu0 0.0
    %2615 = vmatpush2.msra.mxu0 0.0
    %2616 = vmatprep.subr.mxu0 0.0
    %2617 = vmatpush2.msra.mxu0 0.0
    %2618 = vmatprep.subr.mxu0 0.0
    %2619 = vmatpush2.msra.mxu0 0.0
    %2620 = vmatprep.subr.mxu0 0.0
    %2621 = vmatpush2.msra.mxu0 0.0
    %2622 = vmatprep.subr.mxu0 0.0
    %2623 = vmatpush2.msra.mxu0 0.0
    %2624 = vmatprep.subr.mxu0 0.0
    %2625 = vmatpush2.msra.mxu0 0.0
    %2626 = vmatprep.subr.mxu0 0.0
    %2627 = vmatpush2.msra.mxu0 0.0
    %2628 = vmatprep.subr.mxu0 0.0
    %2629 = vmatpush2.msra.mxu0 0.0
    %2630 = vmatprep.subr.mxu0 0.0
    %2631 = vmatpush2.msra.mxu0 0.0
    %2632 = vmatprep.subr.mxu0 0.0
    %2633 = vmatpush2.msra.mxu0 0.0
    %2634 = vmatprep.subr.mxu0 0.0
    %2635 = vmatpush2.msra.mxu0 0.0
    %2636 = vmatprep.subr.mxu0 0.0
    %2637 = vmatpush2.msra.mxu0 0.0
    %2638 = vmatprep.subr.mxu0 0.0
    %2639 = vmatpush2.msra.mxu0 0.0
    %2640 = vmatprep.subr.mxu0 0.0
    %2641 = vmatpush2.msra.mxu0 0.0
    %2642 = vmatprep.mubr.f32.mxu0 0.0
    %2643 = vmatmul.mubr.f32.gmra.mxu0 %v2576
    %v2644 = vpop.f32.mrf.mxu0
    %v2645 = vadd.f32 %v2573, %v2644
    %v2646 = vpop.f32.mrf.mxu0
    %2647 = vdwg.mxu0
    %vm2648 = vcmask 33792
    %2649 = vst.msk [vmem:[#allocation10] sm:$0x3] %vm2648, %v2645
    // Predicated region
    $region50: #{plain_lstm_forward.1} parent=1 // pred_check
      _
    $region51: #{plain_lstm_forward.1} parent=1 // pred_check_branch
      %2651 = sbr.rel (0) target = $region53
    $region52: #{plain_lstm_forward.1} parent=1 // pred_region
      %s2653 = ssub.s32 32, 32
      %2654 = vsyncadd [#allocation6], %s2653
      %s2656 = sshll.u32 [#allocation10], 4
      %s2657 = int_to_ptr.vmem [resolvable:$true] %s2656
      %2659 = dma.vmem_to_hbm [thread:$0]  %s2657, 32, %s9, [#allocation6]
    $region53: #{plain_lstm_forward.1} parent=1 // pred_fallthru
      _
    // Predicated region
    $region54: #{plain_lstm_forward.1} parent=1 // pred_check
      _
    $region55: #{plain_lstm_forward.1} parent=1 // pred_check_branch
      %2661 = sbr.rel (0) target = $region57
    $region56: #{plain_lstm_forward.1} parent=1 // pred_region
      %2662 = dma.done [#allocation6], 32
    $region57: #{plain_lstm_forward.1} parent=1 // pred_fallthru
      _
    %2663 = vsyncpa [#allocation5], 1
    %2664 = vsyncpa [#allocation8], 1
    %2665 = vsyncpa [#allocation6], 1

</llo_original>
